<compile_context>
chip_gen: v7x
topology: tpu7x:2x2x1
jax: 0.10.0
libtpu: 0.0.40
codegen_flags: <defaults>
</compile_context>

<pallas_src>
import functools

import jax
import jax.numpy as jnp
import numpy as np
from jax.experimental import pallas as pl
from jax.experimental.pallas import tpu as pltpu

LANE = 128
SUBLANE = 8


def _swish(x):
    return x * jax.nn.sigmoid(x)


def _round_up(x, m):
    return (x + m - 1) // m * m


def _row_tile(m, cap=512):
    """Largest multiple-of-8 divisor of m that is <= cap (fallback: m)."""
    best = None
    for t in range(8, min(cap, m) + 1, 8):
        if m % t == 0:
            best = t
    return best if best is not None else m


def _h_tile(ho, cap=8):
    """Largest divisor of ho that is <= cap (output-row tile for depthwise)."""
    for t in range(min(cap, ho), 0, -1):
        if ho % t == 0:
            return t
    return ho


# --------------------------------------------------------------------------
# Kernel 1: fused expand 1x1 conv (+BN0+swish) -> depthwise kxk (+BN1+swish),
# with the SE global-average pool fused as a per-image channel-sum output.
# The expanded activation lives only in a per-tile bf16 VMEM slab.
# --------------------------------------------------------------------------
def _expdw_kernel(*refs, k, stride, pad, wl, t2, n_tiles, bot_pad, do_expand):
    if do_expand:
        x_ref, we_ref, b0_ref, wdw_ref, b1_ref, o_ref, psum_ref, xp_ref = refs
    else:
        x_ref, wdw_ref, b1_ref, o_ref, psum_ref, xp_ref = refs
        we_ref = b0_ref = None

    c = pl.program_id(0)            # megacore row-split index
    t = pl.program_id(2)            # row tile within this split
    tile = c * t2 + t               # global output-row-tile index

    _, _, W, _ = x_ref.shape
    LH, WP, C = xp_ref.shape        # slab rows, padded width, expanded channels
    _, TH, Wo, _ = o_ref.shape

    @pl.when(t == 0)
    def _():
        psum_ref[...] = jnp.zeros_like(psum_ref)
        # Zero only the W-pad strips of the slab; the interior is fully
        # overwritten every tile so the strips stay zero afterwards.
        xp_ref[:, pl.ds(0, wl), :] = jnp.zeros((LH, wl, C), xp_ref.dtype)
        if WP - wl - W > 0:
            xp_ref[:, pl.ds(wl + W, WP - wl - W), :] = jnp.zeros(
                (LH, WP - wl - W, C), xp_ref.dtype)

    # Slab covers padded rows [h0, h0 + LH); the input block is H-padded so
    # this read is always in range.
    h0 = tile * (TH * stride)
    xin = x_ref[0, pl.ds(h0, LH), :, :]             # (LH, W, Cin) bf16

    if do_expand:
        cin = xin.shape[-1]
        e = jnp.dot(xin.reshape(LH * W, cin), we_ref[...],
                    preferred_element_type=jnp.float32)
        e = _swish(e + b0_ref[...]).reshape(LH, W, C)
        xp_ref[:, pl.ds(wl, W), :] = e.astype(xp_ref.dtype)

        # The H-pad rows of the input are zero, but expand+BN0+swish maps them
        # to swish(b0) != 0; re-zero them so the depthwise sees true zeros.
        @pl.when(tile == 0)
        def _():
            xp_ref[pl.ds(0, pad), pl.ds(wl, W), :] = jnp.zeros(
                (pad, W, C), xp_ref.dtype)

        if bot_pad > 0:
            @pl.when(tile == n_tiles - 1)
            def _():
                xp_ref[pl.ds(LH - bot_pad, bot_pad), pl.ds(wl, W), :] = (
                    jnp.zeros((bot_pad, W, C), xp_ref.dtype))
    else:
        # expand_ratio == 1: depthwise runs directly on the (already zero
        # H-padded) input rows.
        xp_ref[:, pl.ds(wl, W), :] = xin.astype(xp_ref.dtype)

    # ---- depthwise kxk conv on the padded slab ----
    acc = jnp.zeros((TH, Wo, C), jnp.float32)
    for kw in range(k):
        col0 = wl - pad + kw
        if stride == 1:
            sub = xp_ref[:, pl.ds(col0, Wo), :]
        else:
            # TODO(synk): replace per-tap strided sublane reads with a one-off
            # even/odd W deinterleave (XLU pressure on v6e/v7x).
            sub = xp_ref[:, pl.ds(col0, Wo, stride=stride), :]
        subf = sub.astype(jnp.float32)              # (LH, Wo, C)
        for kh in range(k):
            patch = jax.lax.slice(
                subf, (kh, 0, 0), (kh + (TH - 1) * stride + 1, Wo, C),
                (stride, 1, 1))                     # (TH, Wo, C), leading-axis
            acc = acc + patch * wdw_ref[kh * k + kw]

    y = _swish(acc + b1_ref[...])                   # folded BN1 bias + swish
    o_ref[0] = y.astype(o_ref.dtype)

    # Fused SE pooling: partial per-channel spatial sums for this image
    # (partial per row-split; summed over the split axis by the caller).
    psum_ref[...] += jnp.sum(y, axis=(0, 1)).reshape(psum_ref.shape)


def expand_dw_conv(x_pad, w_exp, b0, w_dw, b1, *, k, stride, pad, Ho, Wo, th,
                   csplit, cexp_p, do_expand):
    N, hp_in, W, cin_p = x_pad.shape
    lh = (th - 1) * stride + k
    wl = SUBLANE                                    # sublane-aligned left pad
    wr = max(0, (Wo - 1) * stride + k - pad - W)    # right pad actually read
    wp_alloc = _round_up(wl + W + wr, SUBLANE)
    n_tiles = Ho // th
    t2 = n_tiles // csplit
    bot_pad = max(0, (Ho - 1) * stride + k - pad - (hp_in - 2 * pad))

    kern = functools.partial(_expdw_kernel, k=k, stride=stride, pad=pad, wl=wl,
                             t2=t2, n_tiles=n_tiles, bot_pad=bot_pad,
                             do_expand=do_expand)

    x_spec = pl.BlockSpec((1, hp_in, W, cin_p), lambda c, n, t: (n, 0, 0, 0))
    wdw_spec = pl.BlockSpec((k * k, 1, cexp_p), lambda c, n, t: (0, 0, 0))
    b_spec = pl.BlockSpec((1, cexp_p), lambda c, n, t: (0, 0))
    if do_expand:
        in_specs = [x_spec,
                    pl.BlockSpec((cin_p, cexp_p), lambda c, n, t: (0, 0)),
                    b_spec, wdw_spec, b_spec]
        args = (x_pad, w_exp, b0, w_dw, b1)
    else:
        in_specs = [x_spec, wdw_spec, b_spec]
        args = (x_pad, w_dw, b1)

    # Explicit scoped-VMEM budget: double-buffered input block + bf16 slab +
    # double-buffered output tile + weights, with slack for compiler scratch.
    est = (2 * hp_in * W * cin_p * 2
           + lh * wp_alloc * cexp_p * 2
           + 2 * th * Wo * cexp_p * 2
           + 2 * cin_p * cexp_p * 2
           + 2 * k * k * cexp_p * 4
           + 8 * cexp_p * 4)
    vmem_limit = min(int(est * 1.25) + (4 << 20), 100 << 20)

    return pl.pallas_call(
        kern,
        out_shape=(jax.ShapeDtypeStruct((N, Ho, Wo, cexp_p), jnp.bfloat16),
                   jax.ShapeDtypeStruct((N, csplit, 1, cexp_p), jnp.float32)),
        grid=(csplit, N, t2),
        in_specs=in_specs,
        out_specs=[
            pl.BlockSpec((1, th, Wo, cexp_p),
                         lambda c, n, t: (n, c * t2 + t, 0, 0)),
            pl.BlockSpec((1, 1, 1, cexp_p), lambda c, n, t: (n, c, 0, 0)),
        ],
        scratch_shapes=[pltpu.VMEM((lh, wp_alloc, cexp_p), jnp.bfloat16)],
        compiler_params=pltpu.CompilerParams(
            dimension_semantics=("parallel", "parallel", "arbitrary"),
            vmem_limit_bytes=vmem_limit),
    )(*args)


# --------------------------------------------------------------------------
# Kernel 2: SE gate — tiny (N, C) MLP on the pooled sums (bf16 gate output).
# Padded channels get gate=sigmoid(0)=0.5, harmless because the matching
# activations and w_proj rows are zero (invariant kept by prepare_params).
# --------------------------------------------------------------------------
def _se_gate_kernel(ps_ref, wr_ref, br_ref, we_ref, be_ref, g_ref, *, inv_hw):
    pooled = ps_ref[...] * inv_hw                   # == adaptive_avg_pool2d
    z = _swish(jnp.dot(pooled, wr_ref[...],
                       preferred_element_type=jnp.float32) + br_ref[...])
    s = jnp.dot(z, we_ref[...],
                preferred_element_type=jnp.float32) + be_ref[...]
    g_ref[...] = jax.nn.sigmoid(s).astype(g_ref.dtype)


def se_gate(psum, w_r, b_r, w_e, b_e, *, inv_hw):
    N, C = psum.shape
    kern = functools.partial(_se_gate_kernel, inv_hw=inv_hw)
    return pl.pallas_call(
        kern, out_shape=jax.ShapeDtypeStruct((N, C), jnp.bfloat16),
    )(psum, w_r, b_r, w_e, b_e)


# --------------------------------------------------------------------------
# Kernel 3: SE gating fused with project 1x1 conv (BN2 folded) (+ residual).
# bf16 gate multiply (no f32 round trip) and bf16 output store.
# --------------------------------------------------------------------------
def _project_kernel(x_ref, g_ref, w_ref, b_ref, o_ref):
    xg = x_ref[0] * g_ref[0]                        # bf16 gate fused here
    y = jnp.dot(xg, w_ref[...], preferred_element_type=jnp.float32)
    o_ref[0] = (y + b_ref[...]).astype(o_ref.dtype)


def _project_res_kernel(x_ref, g_ref, w_ref, b_ref, r_ref, o_ref):
    xg = x_ref[0] * g_ref[0]
    y = jnp.dot(xg, w_ref[...], preferred_element_type=jnp.float32)
    o_ref[0] = (y + b_ref[...] + r_ref[0].astype(jnp.float32)).astype(o_ref.dtype)


def project_conv(x3, g3, w, b, res3, *, tm):
    N, HW, C = x3.shape
    cout = w.shape[1]
    in_specs = [
        pl.BlockSpec((1, tm, C), lambda n, m: (n, m, 0)),
        pl.BlockSpec((1, 1, C), lambda n, m: (n, 0, 0)),
        pl.BlockSpec((C, cout), lambda n, m: (0, 0)),
        pl.BlockSpec((1, cout), lambda n, m: (0, 0)),
    ]
    args = [x3, g3, w, b]
    kern = _project_kernel
    if res3 is not None:
        in_specs.append(pl.BlockSpec((1, tm, cout), lambda n, m: (n, m, 0)))
        args.append(res3)
        kern = _project_res_kernel
    est = (2 * tm * C * 2 + 2 * tm * cout * 2 + 2 * C * cout * 2
           + (2 * tm * cout * 2 if res3 is not None else 0))
    vmem_limit = min(int(est * 1.25) + (4 << 20), 100 << 20)
    return pl.pallas_call(
        kern,
        out_shape=jax.ShapeDtypeStruct((N, HW, cout), jnp.bfloat16),
        grid=(N, HW // tm),
        in_specs=in_specs,
        out_specs=pl.BlockSpec((1, tm, cout), lambda n, m: (n, m, 0)),
        compiler_params=pltpu.CompilerParams(
            dimension_semantics=("parallel", "parallel"),
            vmem_limit_bytes=vmem_limit),
    )(*args)


# --------------------------------------------------------------------------
# Parameter preparation (BN folding + lane padding) — run ONCE, outside step.
# --------------------------------------------------------------------------
def _fold_bn(bn, eps):
    gamma, beta, mean, var = bn
    scale = gamma * jax.lax.rsqrt(var + eps)
    bias = beta - mean * scale
    return scale, bias


def _pad2(a, r, c):
    return jnp.pad(a, ((0, r - a.shape[0]), (0, c - a.shape[1])))


def _pad_row(v, n):
    v = v.reshape(-1)
    return jnp.pad(v, (0, n - v.shape[0])).reshape(1, n).astype(jnp.float32)


def prepare_params(p, *, ksize, expand_ratio, input_filters, output_filters,
                   eps=0.01):
    inp = input_filters
    oup = inp * expand_ratio
    csq = max(1, int(inp * 0.25))
    cin_p = _round_up(inp, LANE)
    cexp_p = _round_up(oup, LANE)
    cout_p = _round_up(output_filters, LANE)
    csq_p = _round_up(csq, LANE)

    q = {}
    if expand_ratio != 1:
        s0, b0 = _fold_bn(p["bn0"], eps)
        q["w_expand"] = _pad2(p["w_expand"] * s0[None, :], cin_p,
                              cexp_p).astype(jnp.bfloat16)
        q["b0"] = _pad_row(b0, cexp_p)
    s1, b1 = _fold_bn(p["bn1"], eps)
    w_dw = jnp.pad(p["w_dw"] * s1[None, None, :],
                   ((0, 0), (0, 0), (0, cexp_p - oup)))
    q["w_dw"] = w_dw.reshape(ksize * ksize, 1, cexp_p).astype(jnp.float32)
    q["b1"] = _pad_row(b1, cexp_p)
    q["w_se_r"] = _pad2(p["w_se_r"], cexp_p, csq_p).astype(jnp.float32)
    q["b_se_r"] = _pad_row(p["b_se_r"], csq_p)
    q["w_se_e"] = _pad2(p["w_se_e"], csq_p, cexp_p).astype(jnp.float32)
    q["b_se_e"] = _pad_row(p["b_se_e"], cexp_p)
    s2, b2 = _fold_bn(p["bn2"], eps)
    q["w_proj"] = _pad2(p["w_proj"] * s2[None, :], cexp_p,
                        cout_p).astype(jnp.bfloat16)
    q["b2"] = _pad_row(b2, cout_p)
    return q


# --------------------------------------------------------------------------
# Forward pass.
# --------------------------------------------------------------------------
def mbconv_forward_padded(x_pad, x_res, q, *, ksize, stride, expand_ratio,
                          input_filters, output_filters, row_cap=512):
    """Core forward on lane-padded NHWC bf16 input.

    x_pad: (N, H+2, W, cin_p) bf16 — H zero-padded (pad=1) and channel padded.
    x_res: (N, H*W, cin_p) bf16 residual rows (used only if skip is active).
    Returns (N, Ho, Wo, cout_p) bf16 (lane-padded NHWC for chaining blocks).
    """
    pad = 1                                   # module hard-codes padding=1
    N, hp_in, W, _ = x_pad.shape
    H = hp_in - 2 * pad
    oup = input_filters * expand_ratio
    cexp_p = _round_up(oup, LANE)
    cout_p = _round_up(output_filters, LANE)
    do_expand = expand_ratio != 1

    Ho = (H + 2 * pad - ksize) // stride + 1
    Wo = (W + 2 * pad - ksize) // stride + 1
    th = _h_tile(Ho)
    n_tiles = Ho // th
    csplit = 2 if n_tiles % 2 == 0 else 1     # megacore row split (v7x)

    # Fused expand + depthwise + swish (+ SE pooling).
    x_dw, psum = expand_dw_conv(
        x_pad, q.get("w_expand"), q.get("b0"), q["w_dw"], q["b1"],
        k=ksize, stride=stride, pad=pad, Ho=Ho, Wo=Wo, th=th, csplit=csplit,
        cexp_p=cexp_p, do_expand=do_expand)

    # SE gate from the fused partial sums (tiny tensors).
    g = se_gate(jnp.sum(psum, axis=(1, 2)),
                q["w_se_r"], q["b_se_r"], q["w_se_e"], q["b_se_e"],
                inv_hw=1.0 / float(Ho * Wo))

    res3 = x_res if (stride == 1 and input_filters == output_filters) else None
    # TODO(synk): drop_connect (training-only, rate defaults to 0.0) omitted.
    tm = _row_tile(Ho * Wo, row_cap)
    y3 = project_conv(x_dw.reshape(N, Ho * Wo, cexp_p),
                      g.reshape(N, 1, cexp_p), q["w_proj"], q["b2"], res3,
                      tm=tm)
    return y3.reshape(N, Ho, Wo, cout_p)


def mbconv_forward(x_nchw, q, *, ksize, stride, expand_ratio, input_filters,
                   output_filters, row_cap=512):
    """PyTorch-compatible NCHW wrapper around the NHWC lane-padded core."""
    N, cin, H, W = x_nchw.shape
    pad = 1
    cin_p = _round_up(cin, LANE)
    # NCHW -> NHWC, channel pad to full lanes, bf16 (single boundary pass) ...
    x_c = jnp.pad(jnp.transpose(x_nchw, (0, 2, 3, 1)),
                  ((0, 0), (0, 0), (0, 0), (0, cin_p - cin))).astype(jnp.bfloat16)
    # ... plus H zero-padding of the (small, pre-expansion) input.
    x_pad = jnp.pad(x_c, ((0, 0), (pad, pad), (0, 0), (0, 0)))
    x_res = x_c.reshape(N, H * W, cin_p)
    y = mbconv_forward_padded(
        x_pad, x_res, q, ksize=ksize, stride=stride, expand_ratio=expand_ratio,
        input_filters=input_filters, output_filters=output_filters,
        row_cap=row_cap)
    y = y[..., :output_filters].astype(jnp.float32)
    return jnp.transpose(y, (0, 3, 1, 2))     # NHWC -> NCHW


# --------------------------------------------------------------------------
# Pure-JAX reference (f32) for correctness checking.
# --------------------------------------------------------------------------
def mbconv_reference(x_nchw, p, *, ksize, stride, expand_ratio, input_filters,
                     output_filters, eps=0.01):
    x = jnp.transpose(x_nchw, (0, 2, 3, 1)).astype(jnp.float32)
    inputs = x
    oup = input_filters * expand_ratio

    def bn(y, prm):
        gamma, beta, mean, var = prm
        return (y - mean) * jax.lax.rsqrt(var + eps) * gamma + beta

    if expand_ratio != 1:
        x = _swish(bn(jnp.einsum("nhwc,co->nhwo", x, p["w_expand"]), p["bn0"]))
    w_dw = p["w_dw"].reshape(ksize, ksize, 1, oup)
    y = jax.lax.conv_general_dilated(
        x, w_dw, window_strides=(stride, stride), padding=((1, 1), (1, 1)),
        dimension_numbers=("NHWC", "HWIO", "NHWC"), feature_group_count=oup)
    x = _swish(bn(y, p["bn1"]))
    pooled = jnp.mean(x, axis=(1, 2))
    z = _swish(pooled @ p["w_se_r"] + p["b_se_r"].reshape(-1))
    g = jax.nn.sigmoid(z @ p["w_se_e"] + p["b_se_e"].reshape(-1))
    x = x * g[:, None, None, :]
    y = bn(jnp.einsum("nhwc,co->nhwo", x, p["w_proj"]), p["bn2"])
    if stride == 1 and input_filters == output_filters:
        y = y + inputs
    return jnp.transpose(y, (0, 3, 1, 2))


def init_params(key, *, ksize, input_filters, output_filters, expand_ratio):
    inp = input_filters
    oup = inp * expand_ratio
    csq = max(1, int(inp * 0.25))
    ks = jax.random.split(key, 20)

    def bn(i0, i1, i2, i3, c):
        gamma = 1.0 + 0.1 * jax.random.normal(ks[i0], (c,), jnp.float32)
        beta = 0.1 * jax.random.normal(ks[i1], (c,), jnp.float32)
        mean = 0.1 * jax.random.normal(ks[i2], (c,), jnp.float32)
        var = jax.random.uniform(ks[i3], (c,), jnp.float32, minval=0.5, maxval=1.5)
        return (gamma, beta, mean, var)

    p = {}
    if expand_ratio != 1:
        p["w_expand"] = 0.1 * jax.random.normal(ks[0], (inp, oup), jnp.float32)
        p["bn0"] = bn(1, 2, 3, 4, oup)
    p["w_dw"] = 0.1 * jax.random.normal(ks[5], (ksize, ksize, oup), jnp.float32)
    p["bn1"] = bn(6, 7, 8, 9, oup)
    p["w_se_r"] = 0.1 * jax.random.normal(ks[10], (oup, csq), jnp.float32)
    p["b_se_r"] = 0.1 * jax.random.normal(ks[11], (1, csq), jnp.float32)
    p["w_se_e"] = 0.1 * jax.random.normal(ks[12], (csq, oup), jnp.float32)
    p["b_se_e"] = 0.1 * jax.random.normal(ks[13], (1, oup), jnp.float32)
    p["w_proj"] = 0.1 * jax.random.normal(ks[14], (oup, output_filters), jnp.float32)
    p["bn2"] = bn(15, 16, 17, 18, output_filters)
    return p


if __name__ == "__main__":
    # Small config: ksize=3, in=4, out=4, expand_ratio=4, stride=1 -> skip active.
    ksize, input_filters, output_filters, expand_ratio, stride = 3, 4, 4, 4, 1
    N, H, W = 2, 16, 16

    key = jax.random.PRNGKey(0)
    kp, kx = jax.random.split(key)
    params = init_params(kp, ksize=ksize, input_filters=input_filters,
                         output_filters=output_filters,
                         expand_ratio=expand_ratio)
    x = jax.random.normal(kx, (N, input_filters, H, W), jnp.float32)  # NCHW

    # BN folding + lane padding done once, outside the per-step jit.
    prep = prepare_params(params, ksize=ksize, expand_ratio=expand_ratio,
                          input_filters=input_filters,
                          output_filters=output_filters, eps=0.01)

    fwd = jax.jit(functools.partial(
        mbconv_forward, ksize=ksize, stride=stride, expand_ratio=expand_ratio,
        input_filters=input_filters, output_filters=output_filters))
    out = fwd(x, prep)
    jax.block_until_ready(out)
    assert out.shape == (N, output_filters, H, W), out.shape
    assert out.dtype == jnp.float32

    # Correctness vs a pure-JAX f32 reference (Pallas path uses bf16 matmuls /
    # bf16 intermediates, hence the loose-ish tolerance).
    ref = jax.jit(functools.partial(
        mbconv_reference, ksize=ksize, stride=stride,
        expand_ratio=expand_ratio, input_filters=input_filters,
        output_filters=output_filters, eps=0.01))(x, params)
    np.testing.assert_allclose(np.asarray(out), np.asarray(ref),
                               rtol=5e-2, atol=1e-1)
    print("KERNEL_OK")
</pallas_src>

<mosaic_0001>
module attributes {stable_mosaic.version = 11 : i64} {
  func.func @_se_gate_kernel(%arg0: memref<2x128xf32, #tpu.memory_space<vmem>>, %arg1: memref<128x128xf32, #tpu.memory_space<vmem>>, %arg2: memref<1x128xf32, #tpu.memory_space<vmem>>, %arg3: memref<128x128xf32, #tpu.memory_space<vmem>>, %arg4: memref<1x128xf32, #tpu.memory_space<vmem>>, %arg5: memref<2x128xbf16, #tpu.memory_space<vmem>>) attributes {dimension_semantics = [], scalar_prefetch = 0 : i64, scratch_operands = 0 : i64, tpu.core_type = #tpu.core_type<tc>} {
    %c0 = arith.constant 0 : index
    %c0_0 = arith.constant 0 : index
    %0 = vector.load %arg0[%c0, %c0_0] : memref<2x128xf32, #tpu.memory_space<vmem>>, vector<2x128xf32>
    %cst = arith.constant 3.906250e-03 : f32
    %1 = vector.broadcast %cst : f32 to vector<2x128xf32>
    %2 = arith.mulf %0, %1 : vector<2x128xf32>
    %c0_1 = arith.constant 0 : index
    %c0_2 = arith.constant 0 : index
    %3 = vector.load %arg1[%c0_1, %c0_2] : memref<128x128xf32, #tpu.memory_space<vmem>>, vector<128x128xf32>
    %cst_3 = arith.constant dense<0.000000e+00> : vector<2x128xf32>
    %4 = tpu.matmul %2, %3, %cst_3 {dimension_numbers = #tpu.dot_dimension_numbers<[1], [0], [0], [1], [0, 0, 1, 1], [], []>} : vector<2x128xf32>, vector<128x128xf32>, vector<2x128xf32> -> vector<2x128xf32>
    %c0_4 = arith.constant 0 : index
    %c0_5 = arith.constant 0 : index
    %5 = vector.load %arg2[%c0_4, %c0_5] : memref<1x128xf32, #tpu.memory_space<vmem>>, vector<1x128xf32>
    %6 = vector.broadcast %5 : vector<1x128xf32> to vector<2x128xf32>
    %7 = arith.addf %4, %6 : vector<2x128xf32>
    %8 = arith.negf %7 : vector<2x128xf32>
    %9 = math.exp %8 : vector<2x128xf32>
    %cst_6 = arith.constant 1.000000e+00 : f32
    %10 = vector.broadcast %cst_6 : f32 to vector<2x128xf32>
    %11 = arith.addf %10, %9 : vector<2x128xf32>
    %12 = arith.divf %10, %11 : vector<2x128xf32>
    %13 = arith.mulf %7, %12 : vector<2x128xf32>
    %c0_7 = arith.constant 0 : index
    %c0_8 = arith.constant 0 : index
    %14 = vector.load %arg3[%c0_7, %c0_8] : memref<128x128xf32, #tpu.memory_space<vmem>>, vector<128x128xf32>
    %cst_9 = arith.constant dense<0.000000e+00> : vector<2x128xf32>
    %15 = tpu.matmul %13, %14, %cst_9 {dimension_numbers = #tpu.dot_dimension_numbers<[1], [0], [0], [1], [0, 0, 1, 1], [], []>} : vector<2x128xf32>, vector<128x128xf32>, vector<2x128xf32> -> vector<2x128xf32>
    %c0_10 = arith.constant 0 : index
    %c0_11 = arith.constant 0 : index
    %16 = vector.load %arg4[%c0_10, %c0_11] : memref<1x128xf32, #tpu.memory_space<vmem>>, vector<1x128xf32>
    %17 = vector.broadcast %16 : vector<1x128xf32> to vector<2x128xf32>
    %18 = arith.addf %15, %17 : vector<2x128xf32>
    %19 = arith.negf %18 : vector<2x128xf32>
    %20 = math.exp %19 : vector<2x128xf32>
    %cst_12 = arith.constant 1.000000e+00 : f32
    %21 = vector.broadcast %cst_12 : f32 to vector<2x128xf32>
    %22 = arith.addf %21, %20 : vector<2x128xf32>
    %23 = arith.divf %21, %22 : vector<2x128xf32>
    %24 = arith.truncf %23 : vector<2x128xf32> to vector<2x128xbf16>
    %c0_13 = arith.constant 0 : index
    %c0_14 = arith.constant 0 : index
    %25 = vector.load %arg5[%c0_13, %c0_14] : memref<2x128xbf16, #tpu.memory_space<vmem>>, vector<2x128xbf16>
    tpu.vector_store %arg5[%c0_13, %c0_14], %24 {strides = array<i32>} : memref<2x128xbf16, #tpu.memory_space<vmem>>, vector<2x128xbf16>,
    return
  }
}

module attributes {stable_mosaic.version = 11 : i64} {
  func.func @_project_res_kernel(%arg0: i32, %arg1: i32, %arg2: memref<1x256x128xbf16, #tpu.memory_space<vmem>>, %arg3: memref<1x1x128xbf16, #tpu.memory_space<vmem>>, %arg4: memref<128x128xbf16, #tpu.memory_space<vmem>>, %arg5: memref<1x128xf32, #tpu.memory_space<vmem>>, %arg6: memref<1x256x128xbf16, #tpu.memory_space<vmem>>, %arg7: memref<1x256x128xbf16, #tpu.memory_space<vmem>>) attributes {dimension_semantics = [#tpu.dimension_semantics<parallel>, #tpu.dimension_semantics<parallel>], iteration_bounds = array<i64: 2, 1>, scalar_prefetch = 0 : i64, scratch_operands = 0 : i64, tpu.core_type = #tpu.core_type<tc>, window_params = [{transform_indices = @transform_0, window_bounds = array<i64: 1, 256, 128>}, {transform_indices = @transform_1, window_bounds = array<i64: 1, 1, 128>}, {pipeline_mode = #tpu.pipeline_mode<synchronous>, transform_indices = @transform_2, window_bounds = array<i64: 128, 128>}, {pipeline_mode = #tpu.pipeline_mode<synchronous>, transform_indices = @transform_3, window_bounds = array<i64: 1, 128>}, {transform_indices = @transform_4, window_bounds = array<i64: 1, 256, 128>}, {transform_indices = @transform_5, window_bounds = array<i64: 1, 256, 128>}]} {
    %c0 = arith.constant 0 : index
    %c0_0 = arith.constant 0 : index
    %c0_1 = arith.constant 0 : index
    %0 = vector.load %arg2[%c0, %c0_0, %c0_1] : memref<1x256x128xbf16, #tpu.memory_space<vmem>>, vector<1x256x128xbf16>
    %1 = vector.shape_cast %0 : vector<1x256x128xbf16> to vector<256x128xbf16>
    %c0_2 = arith.constant 0 : index
    %c0_3 = arith.constant 0 : index
    %c0_4 = arith.constant 0 : index
    %2 = vector.load %arg3[%c0_2, %c0_3, %c0_4] : memref<1x1x128xbf16, #tpu.memory_space<vmem>>, vector<1x1x128xbf16>
    %3 = vector.shape_cast %2 : vector<1x1x128xbf16> to vector<1x128xbf16>
    %4 = vector.broadcast %3 : vector<1x128xbf16> to vector<256x128xbf16>
    %5 = arith.mulf %1, %4 : vector<256x128xbf16>
    %c0_5 = arith.constant 0 : index
    %c0_6 = arith.constant 0 : index
    %6 = vector.load %arg4[%c0_5, %c0_6] : memref<128x128xbf16, #tpu.memory_space<vmem>>, vector<128x128xbf16>
    %cst = arith.constant dense<0.000000e+00> : vector<256x128xf32>
    %7 = tpu.matmul %5, %6, %cst {dimension_numbers = #tpu.dot_dimension_numbers<[1], [0], [0], [1], [0, 0, 1, 1], [], []>} : vector<256x128xbf16>, vector<128x128xbf16>, vector<256x128xf32> -> vector<256x128xf32>
    %c0_7 = arith.constant 0 : index
    %c0_8 = arith.constant 0 : index
    %8 = vector.load %arg5[%c0_7, %c0_8] : memref<1x128xf32, #tpu.memory_space<vmem>>, vector<1x128xf32>
    %9 = vector.broadcast %8 : vector<1x128xf32> to vector<256x128xf32>
    %10 = arith.addf %7, %9 : vector<256x128xf32>
    %c0_9 = arith.constant 0 : index
    %c0_10 = arith.constant 0 : index
    %c0_11 = arith.constant 0 : index
    %11 = vector.load %arg6[%c0_9, %c0_10, %c0_11] : memref<1x256x128xbf16, #tpu.memory_space<vmem>>, vector<1x256x128xbf16>
    %12 = vector.shape_cast %11 : vector<1x256x128xbf16> to vector<256x128xbf16>
    %13 = arith.extf %12 : vector<256x128xbf16> to vector<256x128xf32>
    %14 = arith.addf %10, %13 : vector<256x128xf32>
    %15 = arith.truncf %14 : vector<256x128xf32> to vector<256x128xbf16>
    %c0_12 = arith.constant 0 : index
    %c0_13 = arith.constant 0 : index
    %c0_14 = arith.constant 0 : index
    %16 = vector.load %arg7[%c0_12, %c0_13, %c0_14] : memref<1x256x128xbf16, #tpu.memory_space<vmem>>, vector<1x256x128xbf16>
    %17 = vector.shape_cast %16 : vector<1x256x128xbf16> to vector<256x128xbf16>
    %18 = vector.shape_cast %15 : vector<256x128xbf16> to vector<1x256x128xbf16>
    tpu.vector_store %arg7[%c0_12, %c0_13, %c0_14], %18 {strides = array<i32>} : memref<1x256x128xbf16, #tpu.memory_space<vmem>>, vector<1x256x128xbf16>,
    return
  }
  func.func @transform_0(%arg0: i32, %arg1: i32) -> (i32, i32, i32) {
    %c0_i32 = arith.constant 0 : i32
    %c0_i32_0 = arith.constant 0 : i32
    return %arg0, %arg1, %c0_i32 : i32, i32, i32
  }
  func.func @transform_1(%arg0: i32, %arg1: i32) -> (i32, i32, i32) {
    %c0_i32 = arith.constant 0 : i32
    %c0_i32_0 = arith.constant 0 : i32
    %c0_i32_1 = arith.constant 0 : i32
    return %arg0, %c0_i32, %c0_i32_0 : i32, i32, i32
  }
  func.func @transform_2(%arg0: i32, %arg1: i32) -> (i32, i32) {
    %c0_i32 = arith.constant 0 : i32
    %c0_i32_0 = arith.constant 0 : i32
    %c0_i32_1 = arith.constant 0 : i32
    return %c0_i32, %c0_i32_0 : i32, i32
  }
  func.func @transform_3(%arg0: i32, %arg1: i32) -> (i32, i32) {
    %c0_i32 = arith.constant 0 : i32
    %c0_i32_0 = arith.constant 0 : i32
    %c0_i32_1 = arith.constant 0 : i32
    return %c0_i32, %c0_i32_0 : i32, i32
  }
  func.func @transform_4(%arg0: i32, %arg1: i32) -> (i32, i32, i32) {
    %c0_i32 = arith.constant 0 : i32
    %c0_i32_0 = arith.constant 0 : i32
    return %arg0, %arg1, %c0_i32 : i32, i32, i32
  }
  func.func @transform_5(%arg0: i32, %arg1: i32) -> (i32, i32, i32) {
    %c0_i32 = arith.constant 0 : i32
    %c0_i32_0 = arith.constant 0 : i32
    return %arg0, %arg1, %c0_i32 : i32, i32, i32
  }
}

module attributes {stable_mosaic.version = 11 : i64} {
  func.func @_expdw_kernel(%arg0: i32, %arg1: i32, %arg2: i32, %arg3: memref<1x18x16x128xbf16, #tpu.memory_space<vmem>>, %arg4: memref<128x128xbf16, #tpu.memory_space<vmem>>, %arg5: memref<1x128xf32, #tpu.memory_space<vmem>>, %arg6: memref<9x1x128xf32, #tpu.memory_space<vmem>>, %arg7: memref<1x128xf32, #tpu.memory_space<vmem>>, %arg8: memref<1x8x16x128xbf16, #tpu.memory_space<vmem>>, %arg9: memref<1x1x1x128xf32, #tpu.memory_space<vmem>>, %arg10: memref<10x32x128xbf16, #tpu.memory_space<vmem>>) attributes {dimension_semantics = [#tpu.dimension_semantics<parallel>, #tpu.dimension_semantics<parallel>, #tpu.dimension_semantics<arbitrary>], iteration_bounds = array<i64: 2, 2, 1>, scalar_prefetch = 0 : i64, scratch_operands = 1 : i64, tpu.core_type = #tpu.core_type<tc>, window_params = [{transform_indices = @transform_0, window_bounds = array<i64: 1, 18, 16, 128>}, {pipeline_mode = #tpu.pipeline_mode<synchronous>, transform_indices = @transform_1, window_bounds = array<i64: 128, 128>}, {pipeline_mode = #tpu.pipeline_mode<synchronous>, transform_indices = @transform_2, window_bounds = array<i64: 1, 128>}, {pipeline_mode = #tpu.pipeline_mode<synchronous>, transform_indices = @transform_3, window_bounds = array<i64: 9, 1, 128>}, {pipeline_mode = #tpu.pipeline_mode<synchronous>, transform_indices = @transform_4, window_bounds = array<i64: 1, 128>}, {transform_indices = @transform_5, window_bounds = array<i64: 1, 8, 16, 128>}, {transform_indices = @transform_6, window_bounds = array<i64: 1, 1, 1, 128>}]} {
    %c1_i32 = arith.constant 1 : i32
    %0 = arith.muli %arg0, %c1_i32 : i32
    %1 = arith.addi %0, %arg2 : i32
    %c0_i32 = arith.constant 0 : i32
    %2 = arith.cmpi eq, %arg2, %c0_i32 : i32
    %3 = arith.extui %2 : i1 to i32
    %c0_i32_0 = arith.constant 0 : i32
    %4 = arith.cmpi ne, %3, %c0_i32_0 : i32
    scf.if %4 {
      %cst_59 = arith.constant 0.000000e+00 : f32
      %119 = vector.broadcast %cst_59 : f32 to vector<1x1x1x128xf32>
      %c0_60 = arith.constant 0 : index
      %c0_61 = arith.constant 0 : index
      %c0_62 = arith.constant 0 : index
      %c0_63 = arith.constant 0 : index
      %120 = vector.load %arg9[%c0_60, %c0_61, %c0_62, %c0_63] : memref<1x1x1x128xf32, #tpu.memory_space<vmem>>, vector<1x1x1x128xf32>
      tpu.vector_store %arg9[%c0_60, %c0_61, %c0_62, %c0_63], %119 {strides = array<i32>} : memref<1x1x1x128xf32, #tpu.memory_space<vmem>>, vector<1x1x1x128xf32>,
      %cst_64 = arith.constant 0.000000e+00 : bf16
      %121 = vector.broadcast %cst_64 : bf16 to vector<10x8x128xbf16>
      %c0_65 = arith.constant 0 : index
      %c0_66 = arith.constant 0 : index
      %c0_67 = arith.constant 0 : index
      %122 = vector.load %arg10[%c0_65, %c0_66, %c0_67] : memref<10x32x128xbf16, #tpu.memory_space<vmem>>, vector<10x8x128xbf16>
      tpu.vector_store %arg10[%c0_65, %c0_66, %c0_67], %121 {strides = array<i32>} : memref<10x32x128xbf16, #tpu.memory_space<vmem>>, vector<10x8x128xbf16>,
      %cst_68 = arith.constant 0.000000e+00 : bf16
      %123 = vector.broadcast %cst_68 : bf16 to vector<10x8x128xbf16>
      %c0_69 = arith.constant 0 : index
      %c24 = arith.constant 24 : index
      %c0_70 = arith.constant 0 : index
      %124 = vector.load %arg10[%c0_69, %c24, %c0_70] : memref<10x32x128xbf16, #tpu.memory_space<vmem>>, vector<10x8x128xbf16>
      tpu.vector_store %arg10[%c0_69, %c24, %c0_70], %123 {strides = array<i32>} : memref<10x32x128xbf16, #tpu.memory_space<vmem>>, vector<10x8x128xbf16>,
    } else {
    }
    %c8_i32 = arith.constant 8 : i32
    %5 = arith.muli %1, %c8_i32 : i32
    %c0 = arith.constant 0 : index
    %6 = arith.index_cast %5 : i32 to index
    %c0_1 = arith.constant 0 : index
    %c0_2 = arith.constant 0 : index
    %7 = vector.load %arg3[%c0, %6, %c0_1, %c0_2] : memref<1x18x16x128xbf16, #tpu.memory_space<vmem>>, vector<1x10x16x128xbf16>
    %8 = vector.shape_cast %7 : vector<1x10x16x128xbf16> to vector<10x16x128xbf16>
    %9 = vector.shape_cast %8 : vector<10x16x128xbf16> to vector<160x128xbf16>
    %c0_3 = arith.constant 0 : index
    %c0_4 = arith.constant 0 : index
    %10 = vector.load %arg4[%c0_3, %c0_4] : memref<128x128xbf16, #tpu.memory_space<vmem>>, vector<128x128xbf16>
    %cst = arith.constant dense<0.000000e+00> : vector<160x128xf32>
    %11 = tpu.matmul %9, %10, %cst {dimension_numbers = #tpu.dot_dimension_numbers<[1], [0], [0], [1], [0, 0, 1, 1], [], []>} : vector<160x128xbf16>, vector<128x128xbf16>, vector<160x128xf32> -> vector<160x128xf32>
    %c0_5 = arith.constant 0 : index
    %c0_6 = arith.constant 0 : index
    %12 = vector.load %arg5[%c0_5, %c0_6] : memref<1x128xf32, #tpu.memory_space<vmem>>, vector<1x128xf32>
    %13 = vector.broadcast %12 : vector<1x128xf32> to vector<160x128xf32>
    %14 = arith.addf %11, %13 : vector<160x128xf32>
    %15 = arith.negf %14 : vector<160x128xf32>
    %16 = math.exp %15 : vector<160x128xf32>
    %cst_7 = arith.constant 1.000000e+00 : f32
    %17 = vector.broadcast %cst_7 : f32 to vector<160x128xf32>
    %18 = arith.addf %17, %16 : vector<160x128xf32>
    %19 = arith.divf %17, %18 : vector<160x128xf32>
    %20 = arith.mulf %14, %19 : vector<160x128xf32>
    %21 = vector.shape_cast %20 : vector<160x128xf32> to vector<10x16x128xf32>
    %22 = arith.truncf %21 : vector<10x16x128xf32> to vector<10x16x128xbf16>
    %c0_8 = arith.constant 0 : index
    %c8 = arith.constant 8 : index
    %c0_9 = arith.constant 0 : index
    %23 = vector.load %arg10[%c0_8, %c8, %c0_9] : memref<10x32x128xbf16, #tpu.memory_space<vmem>>, vector<10x16x128xbf16>
    tpu.vector_store %arg10[%c0_8, %c8, %c0_9], %22 {strides = array<i32>} : memref<10x32x128xbf16, #tpu.memory_space<vmem>>, vector<10x16x128xbf16>,
    %c0_i32_10 = arith.constant 0 : i32
    %24 = arith.cmpi eq, %1, %c0_i32_10 : i32
    %25 = arith.extui %24 : i1 to i32
    %c0_i32_11 = arith.constant 0 : i32
    %26 = arith.cmpi ne, %25, %c0_i32_11 : i32
    scf.if %26 {
      %cst_59 = arith.constant 0.000000e+00 : bf16
      %119 = vector.broadcast %cst_59 : bf16 to vector<1x16x128xbf16>
      %c0_60 = arith.constant 0 : index
      %c8_61 = arith.constant 8 : index
      %c0_62 = arith.constant 0 : index
      %120 = vector.load %arg10[%c0_60, %c8_61, %c0_62] : memref<10x32x128xbf16, #tpu.memory_space<vmem>>, vector<1x16x128xbf16>
      tpu.vector_store %arg10[%c0_60, %c8_61, %c0_62], %119 {strides = array<i32>} : memref<10x32x128xbf16, #tpu.memory_space<vmem>>, vector<1x16x128xbf16>,
    } else {
    }
    %c1_i32_12 = arith.constant 1 : i32
    %27 = arith.cmpi eq, %1, %c1_i32_12 : i32
    %28 = arith.extui %27 : i1 to i32
    %c0_i32_13 = arith.constant 0 : i32
    %29 = arith.cmpi ne, %28, %c0_i32_13 : i32
    scf.if %29 {
      %cst_59 = arith.constant 0.000000e+00 : bf16
      %119 = vector.broadcast %cst_59 : bf16 to vector<1x16x128xbf16>
      %c9_60 = arith.constant 9 : index
      %c8_61 = arith.constant 8 : index
      %c0_62 = arith.constant 0 : index
      %120 = vector.load %arg10[%c9_60, %c8_61, %c0_62] : memref<10x32x128xbf16, #tpu.memory_space<vmem>>, vector<1x16x128xbf16>
      tpu.vector_store %arg10[%c9_60, %c8_61, %c0_62], %119 {strides = array<i32>} : memref<10x32x128xbf16, #tpu.memory_space<vmem>>, vector<1x16x128xbf16>,
    } else {
    }
    %cst_14 = arith.constant 0.000000e+00 : f32
    %30 = vector.broadcast %cst_14 : f32 to vector<8x16x128xf32>
    %c0_15 = arith.constant 0 : index
    %c7 = arith.constant 7 : index
    %c0_16 = arith.constant 0 : index
    %31 = vector.load %arg10[%c0_15, %c7, %c0_16] : memref<10x32x128xbf16, #tpu.memory_space<vmem>>, vector<10x16x128xbf16>
    %32 = arith.extf %31 : vector<10x16x128xbf16> to vector<10x16x128xf32>
    %33 = vector.extract_strided_slice %32 {offsets = [0, 0, 0], sizes = [8, 16, 128], strides = [1, 1, 1]} : vector<10x16x128xf32> to vector<8x16x128xf32>
    %c0_17 = arith.constant 0 : index
    %c0_18 = arith.constant 0 : index
    %c0_19 = arith.constant 0 : index
    %34 = vector.load %arg6[%c0_17, %c0_18, %c0_19] : memref<9x1x128xf32, #tpu.memory_space<vmem>>, vector<1x1x128xf32>
    %35 = vector.shape_cast %34 : vector<1x1x128xf32> to vector<1x128xf32>
    %36 = vector.shape_cast %35 : vector<1x128xf32> to vector<1x1x128xf32>
    %37 = vector.broadcast %36 : vector<1x1x128xf32> to vector<8x16x128xf32>
    %38 = arith.mulf %33, %37 : vector<8x16x128xf32>
    %39 = arith.addf %30, %38 : vector<8x16x128xf32>
    %40 = vector.extract_strided_slice %32 {offsets = [1, 0, 0], sizes = [8, 16, 128], strides = [1, 1, 1]} : vector<10x16x128xf32> to vector<8x16x128xf32>
    %c3 = arith.constant 3 : index
    %c0_20 = arith.constant 0 : index
    %c0_21 = arith.constant 0 : index
    %41 = vector.load %arg6[%c3, %c0_20, %c0_21] : memref<9x1x128xf32, #tpu.memory_space<vmem>>, vector<1x1x128xf32>
    %42 = vector.shape_cast %41 : vector<1x1x128xf32> to vector<1x128xf32>
    %43 = vector.shape_cast %42 : vector<1x128xf32> to vector<1x1x128xf32>
    %44 = vector.broadcast %43 : vector<1x1x128xf32> to vector<8x16x128xf32>
    %45 = arith.mulf %40, %44 : vector<8x16x128xf32>
    %46 = arith.addf %39, %45 : vector<8x16x128xf32>
    %47 = vector.extract_strided_slice %32 {offsets = [2, 0, 0], sizes = [8, 16, 128], strides = [1, 1, 1]} : vector<10x16x128xf32> to vector<8x16x128xf32>
    %c6 = arith.constant 6 : index
    %c0_22 = arith.constant 0 : index
    %c0_23 = arith.constant 0 : index
    %48 = vector.load %arg6[%c6, %c0_22, %c0_23] : memref<9x1x128xf32, #tpu.memory_space<vmem>>, vector<1x1x128xf32>
    %49 = vector.shape_cast %48 : vector<1x1x128xf32> to vector<1x128xf32>
    %50 = vector.shape_cast %49 : vector<1x128xf32> to vector<1x1x128xf32>
    %51 = vector.broadcast %50 : vector<1x1x128xf32> to vector<8x16x128xf32>
    %52 = arith.mulf %47, %51 : vector<8x16x128xf32>
    %53 = arith.addf %46, %52 : vector<8x16x128xf32>
    %c0_24 = arith.constant 0 : index
    %c8_25 = arith.constant 8 : index
    %c0_26 = arith.constant 0 : index
    %54 = vector.load %arg10[%c0_24, %c8_25, %c0_26] : memref<10x32x128xbf16, #tpu.memory_space<vmem>>, vector<10x16x128xbf16>
    %55 = arith.extf %54 : vector<10x16x128xbf16> to vector<10x16x128xf32>
    %56 = vector.extract_strided_slice %55 {offsets = [0, 0, 0], sizes = [8, 16, 128], strides = [1, 1, 1]} : vector<10x16x128xf32> to vector<8x16x128xf32>
    %c1 = arith.constant 1 : index
    %c0_27 = arith.constant 0 : index
    %c0_28 = arith.constant 0 : index
    %57 = vector.load %arg6[%c1, %c0_27, %c0_28] : memref<9x1x128xf32, #tpu.memory_space<vmem>>, vector<1x1x128xf32>
    %58 = vector.shape_cast %57 : vector<1x1x128xf32> to vector<1x128xf32>
    %59 = vector.shape_cast %58 : vector<1x128xf32> to vector<1x1x128xf32>
    %60 = vector.broadcast %59 : vector<1x1x128xf32> to vector<8x16x128xf32>
    %61 = arith.mulf %56, %60 : vector<8x16x128xf32>
    %62 = arith.addf %53, %61 : vector<8x16x128xf32>
    %63 = vector.extract_strided_slice %55 {offsets = [1, 0, 0], sizes = [8, 16, 128], strides = [1, 1, 1]} : vector<10x16x128xf32> to vector<8x16x128xf32>
    %c4 = arith.constant 4 : index
    %c0_29 = arith.constant 0 : index
    %c0_30 = arith.constant 0 : index
    %64 = vector.load %arg6[%c4, %c0_29, %c0_30] : memref<9x1x128xf32, #tpu.memory_space<vmem>>, vector<1x1x128xf32>
    %65 = vector.shape_cast %64 : vector<1x1x128xf32> to vector<1x128xf32>
    %66 = vector.shape_cast %65 : vector<1x128xf32> to vector<1x1x128xf32>
    %67 = vector.broadcast %66 : vector<1x1x128xf32> to vector<8x16x128xf32>
    %68 = arith.mulf %63, %67 : vector<8x16x128xf32>
    %69 = arith.addf %62, %68 : vector<8x16x128xf32>
    %70 = vector.extract_strided_slice %55 {offsets = [2, 0, 0], sizes = [8, 16, 128], strides = [1, 1, 1]} : vector<10x16x128xf32> to vector<8x16x128xf32>
    %c7_31 = arith.constant 7 : index
    %c0_32 = arith.constant 0 : index
    %c0_33 = arith.constant 0 : index
    %71 = vector.load %arg6[%c7_31, %c0_32, %c0_33] : memref<9x1x128xf32, #tpu.memory_space<vmem>>, vector<1x1x128xf32>
    %72 = vector.shape_cast %71 : vector<1x1x128xf32> to vector<1x128xf32>
    %73 = vector.shape_cast %72 : vector<1x128xf32> to vector<1x1x128xf32>
    %74 = vector.broadcast %73 : vector<1x1x128xf32> to vector<8x16x128xf32>
    %75 = arith.mulf %70, %74 : vector<8x16x128xf32>
    %76 = arith.addf %69, %75 : vector<8x16x128xf32>
    %c0_34 = arith.constant 0 : index
    %c9 = arith.constant 9 : index
    %c0_35 = arith.constant 0 : index
    %77 = vector.load %arg10[%c0_34, %c9, %c0_35] : memref<10x32x128xbf16, #tpu.memory_space<vmem>>, vector<10x16x128xbf16>
    %78 = arith.extf %77 : vector<10x16x128xbf16> to vector<10x16x128xf32>
    %79 = vector.extract_strided_slice %78 {offsets = [0, 0, 0], sizes = [8, 16, 128], strides = [1, 1, 1]} : vector<10x16x128xf32> to vector<8x16x128xf32>
    %c2 = arith.constant 2 : index
    %c0_36 = arith.constant 0 : index
    %c0_37 = arith.constant 0 : index
    %80 = vector.load %arg6[%c2, %c0_36, %c0_37] : memref<9x1x128xf32, #tpu.memory_space<vmem>>, vector<1x1x128xf32>
    %81 = vector.shape_cast %80 : vector<1x1x128xf32> to vector<1x128xf32>
    %82 = vector.shape_cast %81 : vector<1x128xf32> to vector<1x1x128xf32>
    %83 = vector.broadcast %82 : vector<1x1x128xf32> to vector<8x16x128xf32>
    %84 = arith.mulf %79, %83 : vector<8x16x128xf32>
    %85 = arith.addf %76, %84 : vector<8x16x128xf32>
    %86 = vector.extract_strided_slice %78 {offsets = [1, 0, 0], sizes = [8, 16, 128], strides = [1, 1, 1]} : vector<10x16x128xf32> to vector<8x16x128xf32>
    %c5 = arith.constant 5 : index
    %c0_38 = arith.constant 0 : index
    %c0_39 = arith.constant 0 : index
    %87 = vector.load %arg6[%c5, %c0_38, %c0_39] : memref<9x1x128xf32, #tpu.memory_space<vmem>>, vector<1x1x128xf32>
    %88 = vector.shape_cast %87 : vector<1x1x128xf32> to vector<1x128xf32>
    %89 = vector.shape_cast %88 : vector<1x128xf32> to vector<1x1x128xf32>
    %90 = vector.broadcast %89 : vector<1x1x128xf32> to vector<8x16x128xf32>
    %91 = arith.mulf %86, %90 : vector<8x16x128xf32>
    %92 = arith.addf %85, %91 : vector<8x16x128xf32>
    %93 = vector.extract_strided_slice %78 {offsets = [2, 0, 0], sizes = [8, 16, 128], strides = [1, 1, 1]} : vector<10x16x128xf32> to vector<8x16x128xf32>
    %c8_40 = arith.constant 8 : index
    %c0_41 = arith.constant 0 : index
    %c0_42 = arith.constant 0 : index
    %94 = vector.load %arg6[%c8_40, %c0_41, %c0_42] : memref<9x1x128xf32, #tpu.memory_space<vmem>>, vector<1x1x128xf32>
    %95 = vector.shape_cast %94 : vector<1x1x128xf32> to vector<1x128xf32>
    %96 = vector.shape_cast %95 : vector<1x128xf32> to vector<1x1x128xf32>
    %97 = vector.broadcast %96 : vector<1x1x128xf32> to vector<8x16x128xf32>
    %98 = arith.mulf %93, %97 : vector<8x16x128xf32>
    %99 = arith.addf %92, %98 : vector<8x16x128xf32>
    %c0_43 = arith.constant 0 : index
    %c0_44 = arith.constant 0 : index
    %100 = vector.load %arg7[%c0_43, %c0_44] : memref<1x128xf32, #tpu.memory_space<vmem>>, vector<1x128xf32>
    %101 = vector.shape_cast %100 : vector<1x128xf32> to vector<1x1x128xf32>
    %102 = vector.broadcast %101 : vector<1x1x128xf32> to vector<8x16x128xf32>
    %103 = arith.addf %99, %102 : vector<8x16x128xf32>
    %104 = arith.negf %103 : vector<8x16x128xf32>
    %105 = math.exp %104 : vector<8x16x128xf32>
    %cst_45 = arith.constant 1.000000e+00 : f32
    %106 = vector.broadcast %cst_45 : f32 to vector<8x16x128xf32>
    %107 = arith.addf %106, %105 : vector<8x16x128xf32>
    %108 = arith.divf %106, %107 : vector<8x16x128xf32>
    %109 = arith.mulf %103, %108 : vector<8x16x128xf32>
    %110 = arith.truncf %109 : vector<8x16x128xf32> to vector<8x16x128xbf16>
    %c0_46 = arith.constant 0 : index
    %c0_47 = arith.constant 0 : index
    %c0_48 = arith.constant 0 : index
    %c0_49 = arith.constant 0 : index
    %111 = vector.load %arg8[%c0_46, %c0_47, %c0_48, %c0_49] : memref<1x8x16x128xbf16, #tpu.memory_space<vmem>>, vector<1x8x16x128xbf16>
    %112 = vector.shape_cast %111 : vector<1x8x16x128xbf16> to vector<8x16x128xbf16>
    %113 = vector.shape_cast %110 : vector<8x16x128xbf16> to vector<1x8x16x128xbf16>
    tpu.vector_store %arg8[%c0_46, %c0_47, %c0_48, %c0_49], %113 {strides = array<i32>} : memref<1x8x16x128xbf16, #tpu.memory_space<vmem>>, vector<1x8x16x128xbf16>,
    %c0_50 = arith.constant 0 : index
    %c0_51 = arith.constant 0 : index
    %c0_52 = arith.constant 0 : index
    %c0_53 = arith.constant 0 : index
    %114 = vector.load %arg9[%c0_50, %c0_51, %c0_52, %c0_53] : memref<1x1x1x128xf32, #tpu.memory_space<vmem>>, vector<1x1x1x128xf32>
    %cst_54 = arith.constant dense<0.000000e+00> : vector<128xf32>
    %115 = vector.multi_reduction <add>, %109, %cst_54 [0, 1] : vector<8x16x128xf32> to vector<128xf32>
    %116 = vector.shape_cast %115 : vector<128xf32> to vector<1x1x1x128xf32>
    %117 = arith.addf %114, %116 : vector<1x1x1x128xf32>
    %c0_55 = arith.constant 0 : index
    %c0_56 = arith.constant 0 : index
    %c0_57 = arith.constant 0 : index
    %c0_58 = arith.constant 0 : index
    %118 = vector.load %arg9[%c0_55, %c0_56, %c0_57, %c0_58] : memref<1x1x1x128xf32, #tpu.memory_space<vmem>>, vector<1x1x1x128xf32>
    tpu.vector_store %arg9[%c0_55, %c0_56, %c0_57, %c0_58], %117 {strides = array<i32>} : memref<1x1x1x128xf32, #tpu.memory_space<vmem>>, vector<1x1x1x128xf32>,
    return
  }
  func.func @transform_0(%arg0: i32, %arg1: i32, %arg2: i32) -> (i32, i32, i32, i32) {
    %c0_i32 = arith.constant 0 : i32
    %c0_i32_0 = arith.constant 0 : i32
    %c0_i32_1 = arith.constant 0 : i32
    %c0_i32_2 = arith.constant 0 : i32
    return %arg1, %c0_i32, %c0_i32_0, %c0_i32_1 : i32, i32, i32, i32
  }
  func.func @transform_1(%arg0: i32, %arg1: i32, %arg2: i32) -> (i32, i32) {
    %c0_i32 = arith.constant 0 : i32
    %c0_i32_0 = arith.constant 0 : i32
    %c0_i32_1 = arith.constant 0 : i32
    return %c0_i32, %c0_i32_0 : i32, i32
  }
  func.func @transform_2(%arg0: i32, %arg1: i32, %arg2: i32) -> (i32, i32) {
    %c0_i32 = arith.constant 0 : i32
    %c0_i32_0 = arith.constant 0 : i32
    %c0_i32_1 = arith.constant 0 : i32
    return %c0_i32, %c0_i32_0 : i32, i32
  }
  func.func @transform_3(%arg0: i32, %arg1: i32, %arg2: i32) -> (i32, i32, i32) {
    %c0_i32 = arith.constant 0 : i32
    %c0_i32_0 = arith.constant 0 : i32
    %c0_i32_1 = arith.constant 0 : i32
    %c0_i32_2 = arith.constant 0 : i32
    return %c0_i32, %c0_i32_0, %c0_i32_1 : i32, i32, i32
  }
  func.func @transform_4(%arg0: i32, %arg1: i32, %arg2: i32) -> (i32, i32) {
    %c0_i32 = arith.constant 0 : i32
    %c0_i32_0 = arith.constant 0 : i32
    %c0_i32_1 = arith.constant 0 : i32
    return %c0_i32, %c0_i32_0 : i32, i32
  }
  func.func @transform_5(%arg0: i32, %arg1: i32, %arg2: i32) -> (i32, i32, i32, i32) {
    %c1_i32 = arith.constant 1 : i32
    %0 = arith.muli %arg0, %c1_i32 : i32
    %1 = arith.addi %0, %arg2 : i32
    %c0_i32 = arith.constant 0 : i32
    %c0_i32_0 = arith.constant 0 : i32
    %c0_i32_1 = arith.constant 0 : i32
    return %arg1, %1, %c0_i32, %c0_i32_0 : i32, i32, i32, i32
  }
  func.func @transform_6(%arg0: i32, %arg1: i32, %arg2: i32) -> (i32, i32, i32, i32) {
    %c0_i32 = arith.constant 0 : i32
    %c0_i32_0 = arith.constant 0 : i32
    %c0_i32_1 = arith.constant 0 : i32
    return %arg1, %arg0, %c0_i32, %c0_i32_0 : i32, i32, i32, i32
  }
}

</mosaic_0001>

<llo_original>
// kernel: mbconv_forward.4
$region0: #{mbconv_forward.4}
  #allocation0 [shape = 'u32[]', space=smem, size = 0x4, offset = 0x4, fixed_abs, tag = 'smem constant byte address 0x4 - core index']
  #allocation1 [shape = 'u32[144,128]{1,0:T(1,128)}', space=vmem, size = 0x12000, scoped, tag = 'internal scratch']
  %s0 = inlined_call_operand.vmem [shape: f32[2,128], index: 0, kind: input, shape index: {}]
  %s1 = inlined_call_operand.vmem [shape: f32[128,128], index: 1, kind: input, shape index: {}]
  %s2 = inlined_call_operand.vmem [shape: f32[1,128], index: 2, kind: input, shape index: {}]
  %s3 = inlined_call_operand.vmem [shape: f32[128,128], index: 3, kind: input, shape index: {}]
  %s4 = inlined_call_operand.vmem [shape: f32[1,128], index: 4, kind: input, shape index: {}]
  %s5 = inlined_call_operand.vmem [shape: bf16[2,128], index: 5, kind: output, shape index: {}]
  %s6 = sld [smem:[#allocation0]]
  $region30: #{mbconv_forward.4} parent=0
    _
  %s8 = ssub.s32 1, %s6
  %s9 = scalar_select 0, %s8, %s6
  // Predicated region
  $region2: #{mbconv_forward.4} parent=0 // pred_check
    _
  $region3: #{mbconv_forward.4} parent=0 // pred_check_branch
    %11 = sbr.rel (0) target = $region5
  $region4: #{mbconv_forward.4} parent=0 // pred_region
    _
  $region5: #{mbconv_forward.4} parent=0 // pred_fallthru
    _
  // Predicated region
  $region6: #{mbconv_forward.4} parent=0 // pred_check
    _
  $region7: #{mbconv_forward.4} parent=0 // pred_check_branch
    %13 = sbr.rel (0) target = $region9
  $region8: #{mbconv_forward.4} parent=0 // pred_region
    _
  $region9: #{mbconv_forward.4} parent=0 // pred_fallthru
    _
  // Predicated region
  $region10: #{mbconv_forward.4} parent=0 // pred_check
    _
  $region11: #{mbconv_forward.4} parent=0 // pred_check_branch
    %15 = sbr.rel (0) target = $region13
  $region12: #{mbconv_forward.4} parent=0 // pred_region
    _
  $region13: #{mbconv_forward.4} parent=0 // pred_fallthru
    _
  // Predicated region
  $region14: #{mbconv_forward.4} parent=0 // pred_check
    _
  $region15: #{mbconv_forward.4} parent=0 // pred_check_branch
    %17 = sbr.rel (0) target = $region17
  $region16: #{mbconv_forward.4} parent=0 // pred_region
    _
  $region17: #{mbconv_forward.4} parent=0 // pred_fallthru
    _
  // Predicated region
  $region18: #{mbconv_forward.4} parent=0 // pred_check
    _
  $region19: #{mbconv_forward.4} parent=0 // pred_check_branch
    %19 = sbr.rel (0) target = $region21
  $region20: #{mbconv_forward.4} parent=0 // pred_region
    _
  $region21: #{mbconv_forward.4} parent=0 // pred_fallthru
    _
  %v20 = vld [vmem:[%s0] sm:$0x3]
  %v21 = vmul.f32 %v20, 0.00390625
  %v22 = vld [vmem:[%s1] sm:$0xff]
  %v23 = vld [vmem:[%s1 + $0x8] sm:$0xff]
  %v24 = vld [vmem:[%s1 + $0x10] sm:$0xff]
  %v25 = vld [vmem:[%s1 + $0x18] sm:$0xff]
  %v26 = vld [vmem:[%s1 + $0x20] sm:$0xff]
  %v27 = vld [vmem:[%s1 + $0x28] sm:$0xff]
  %v28 = vld [vmem:[%s1 + $0x30] sm:$0xff]
  %v29 = vld [vmem:[%s1 + $0x38] sm:$0xff]
  %v30 = vld [vmem:[%s1 + $0x40] sm:$0xff]
  %v31 = vld [vmem:[%s1 + $0x48] sm:$0xff]
  %v32 = vld [vmem:[%s1 + $0x50] sm:$0xff]
  %v33 = vld [vmem:[%s1 + $0x58] sm:$0xff]
  %v34 = vld [vmem:[%s1 + $0x60] sm:$0xff]
  %v35 = vld [vmem:[%s1 + $0x68] sm:$0xff]
  %v36 = vld [vmem:[%s1 + $0x70] sm:$0xff]
  %v37 = vld [vmem:[%s1 + $0x78] sm:$0xff]
  %v38 = vld [vmem:[%s2] sm:$0x1]
  %v40 = vlaneseq
  %v41 = vshrl.u32 %v40, 7
  %v42 = vsub.s32 0, %v41
  %v43 = vrot.slane %v38, %v42
  %45 = vmatprep.subr.mxu0 0.0
  %46 = vmatpush1.msra.mxu0 %v22
  %47 = vmatprep.subr.mxu0 0.0
  %48 = vmatpush1.msra.mxu0 %v23
  %49 = vmatprep.subr.mxu0 0.0
  %50 = vmatpush1.msra.mxu0 %v24
  %51 = vmatprep.subr.mxu0 0.0
  %52 = vmatpush1.msra.mxu0 %v25
  %53 = vmatprep.subr.mxu0 0.0
  %54 = vmatpush1.msra.mxu0 %v26
  %55 = vmatprep.subr.mxu0 0.0
  %56 = vmatpush1.msra.mxu0 %v27
  %57 = vmatprep.subr.mxu0 0.0
  %58 = vmatpush1.msra.mxu0 %v28
  %59 = vmatprep.subr.mxu0 0.0
  %60 = vmatpush1.msra.mxu0 %v29
  %61 = vmatprep.subr.mxu0 0.0
  %62 = vmatpush1.msra.mxu0 %v30
  %63 = vmatprep.subr.mxu0 0.0
  %64 = vmatpush1.msra.mxu0 %v31
  %65 = vmatprep.subr.mxu0 0.0
  %66 = vmatpush1.msra.mxu0 %v32
  %67 = vmatprep.subr.mxu0 0.0
  %68 = vmatpush1.msra.mxu0 %v33
  %69 = vmatprep.subr.mxu0 0.0
  %70 = vmatpush1.msra.mxu0 %v34
  %71 = vmatprep.subr.mxu0 0.0
  %72 = vmatpush1.msra.mxu0 %v35
  %73 = vmatprep.subr.mxu0 0.0
  %74 = vmatpush1.msra.mxu0 %v36
  %75 = vmatprep.subr.mxu0 0.0
  %76 = vmatpush1.msra.mxu0 %v37
  %77 = vmatprep.subr.mxu0 0.0
  %78 = vmatpush1.msra.mxu0 0.0
  %79 = vmatprep.subr.mxu0 0.0
  %80 = vmatpush1.msra.mxu0 0.0
  %81 = vmatprep.subr.mxu0 0.0
  %82 = vmatpush1.msra.mxu0 0.0
  %83 = vmatprep.subr.mxu0 0.0
  %84 = vmatpush1.msra.mxu0 0.0
  %85 = vmatprep.subr.mxu0 0.0
  %86 = vmatpush1.msra.mxu0 0.0
  %87 = vmatprep.subr.mxu0 0.0
  %88 = vmatpush1.msra.mxu0 0.0
  %89 = vmatprep.subr.mxu0 0.0
  %90 = vmatpush1.msra.mxu0 0.0
  %91 = vmatprep.subr.mxu0 0.0
  %92 = vmatpush1.msra.mxu0 0.0
  %93 = vmatprep.subr.mxu0 0.0
  %94 = vmatpush1.msra.mxu0 0.0
  %95 = vmatprep.subr.mxu0 0.0
  %96 = vmatpush1.msra.mxu0 0.0
  %97 = vmatprep.subr.mxu0 0.0
  %98 = vmatpush1.msra.mxu0 0.0
  %99 = vmatprep.subr.mxu0 0.0
  %100 = vmatpush1.msra.mxu0 0.0
  %101 = vmatprep.subr.mxu0 0.0
  %102 = vmatpush1.msra.mxu0 0.0
  %103 = vmatprep.subr.mxu0 0.0
  %104 = vmatpush1.msra.mxu0 0.0
  %105 = vmatprep.subr.mxu0 0.0
  %106 = vmatpush1.msra.mxu0 0.0
  %107 = vmatprep.subr.mxu0 0.0
  %108 = vmatpush1.msra.mxu0 0.0
  %109 = vmatprep.mubr.f32.mxu0 0.0
  %110 = vmatmul.mubr.f32.gmra.mrb[0].mxu0 %v21
  %v111 = vpop.f32.mrb[0].mxu0
  %v112 = vadd.f32 %v43, %v111
  %v113 = vpop.f32.mrb[0].mxu0
  %114 = vdwg.mxu0
  %v115 = vxor.u32 %v112, 2147483648
  %v116 = vmul.f32 %v115, 1.442695
  %v117 = vpow.pop %v116
  %v118 = vadd.f32 %v117, 1.0
  %v119 = vrcp.pop %v118
  %v120 = vmul.f32 1.0, %v119
  %v121 = vmul.f32 %v112, %v120
  %v122 = vld [vmem:[%s3] sm:$0xff]
  %v123 = vld [vmem:[%s3 + $0x8] sm:$0xff]
  %v124 = vld [vmem:[%s3 + $0x10] sm:$0xff]
  %v125 = vld [vmem:[%s3 + $0x18] sm:$0xff]
  %v126 = vld [vmem:[%s3 + $0x20] sm:$0xff]
  %v127 = vld [vmem:[%s3 + $0x28] sm:$0xff]
  %v128 = vld [vmem:[%s3 + $0x30] sm:$0xff]
  %v129 = vld [vmem:[%s3 + $0x38] sm:$0xff]
  %v130 = vld [vmem:[%s3 + $0x40] sm:$0xff]
  %v131 = vld [vmem:[%s3 + $0x48] sm:$0xff]
  %v132 = vld [vmem:[%s3 + $0x50] sm:$0xff]
  %v133 = vld [vmem:[%s3 + $0x58] sm:$0xff]
  %v134 = vld [vmem:[%s3 + $0x60] sm:$0xff]
  %v135 = vld [vmem:[%s3 + $0x68] sm:$0xff]
  %v136 = vld [vmem:[%s3 + $0x70] sm:$0xff]
  %v137 = vld [vmem:[%s3 + $0x78] sm:$0xff]
  %v138 = vld [vmem:[%s4] sm:$0x1]
  %v140 = vlaneseq
  %v141 = vshrl.u32 %v140, 7
  %v142 = vsub.s32 0, %v141
  %v143 = vrot.slane %v138, %v142
  %145 = vmatprep.subr.mxu0 0.0
  %146 = vmatpush1.msra.mxu0 %v122
  %147 = vmatprep.subr.mxu0 0.0
  %148 = vmatpush1.msra.mxu0 %v123
  %149 = vmatprep.subr.mxu0 0.0
  %150 = vmatpush1.msra.mxu0 %v124
  %151 = vmatprep.subr.mxu0 0.0
  %152 = vmatpush1.msra.mxu0 %v125
  %153 = vmatprep.subr.mxu0 0.0
  %154 = vmatpush1.msra.mxu0 %v126
  %155 = vmatprep.subr.mxu0 0.0
  %156 = vmatpush1.msra.mxu0 %v127
  %157 = vmatprep.subr.mxu0 0.0
  %158 = vmatpush1.msra.mxu0 %v128
  %159 = vmatprep.subr.mxu0 0.0
  %160 = vmatpush1.msra.mxu0 %v129
  %161 = vmatprep.subr.mxu0 0.0
  %162 = vmatpush1.msra.mxu0 %v130
  %163 = vmatprep.subr.mxu0 0.0
  %164 = vmatpush1.msra.mxu0 %v131
  %165 = vmatprep.subr.mxu0 0.0
  %166 = vmatpush1.msra.mxu0 %v132
  %167 = vmatprep.subr.mxu0 0.0
  %168 = vmatpush1.msra.mxu0 %v133
  %169 = vmatprep.subr.mxu0 0.0
  %170 = vmatpush1.msra.mxu0 %v134
  %171 = vmatprep.subr.mxu0 0.0
  %172 = vmatpush1.msra.mxu0 %v135
  %173 = vmatprep.subr.mxu0 0.0
  %174 = vmatpush1.msra.mxu0 %v136
  %175 = vmatprep.subr.mxu0 0.0
  %176 = vmatpush1.msra.mxu0 %v137
  %177 = vmatprep.subr.mxu0 0.0
  %178 = vmatpush1.msra.mxu0 0.0
  %179 = vmatprep.subr.mxu0 0.0
  %180 = vmatpush1.msra.mxu0 0.0
  %181 = vmatprep.subr.mxu0 0.0
  %182 = vmatpush1.msra.mxu0 0.0
  %183 = vmatprep.subr.mxu0 0.0
  %184 = vmatpush1.msra.mxu0 0.0
  %185 = vmatprep.subr.mxu0 0.0
  %186 = vmatpush1.msra.mxu0 0.0
  %187 = vmatprep.subr.mxu0 0.0
  %188 = vmatpush1.msra.mxu0 0.0
  %189 = vmatprep.subr.mxu0 0.0
  %190 = vmatpush1.msra.mxu0 0.0
  %191 = vmatprep.subr.mxu0 0.0
  %192 = vmatpush1.msra.mxu0 0.0
  %193 = vmatprep.subr.mxu0 0.0
  %194 = vmatpush1.msra.mxu0 0.0
  %195 = vmatprep.subr.mxu0 0.0
  %196 = vmatpush1.msra.mxu0 0.0
  %197 = vmatprep.subr.mxu0 0.0
  %198 = vmatpush1.msra.mxu0 0.0
  %199 = vmatprep.subr.mxu0 0.0
  %200 = vmatpush1.msra.mxu0 0.0
  %201 = vmatprep.subr.mxu0 0.0
  %202 = vmatpush1.msra.mxu0 0.0
  %203 = vmatprep.subr.mxu0 0.0
  %204 = vmatpush1.msra.mxu0 0.0
  %205 = vmatprep.subr.mxu0 0.0
  %206 = vmatpush1.msra.mxu0 0.0
  %207 = vmatprep.subr.mxu0 0.0
  %208 = vmatpush1.msra.mxu0 0.0
  %209 = vmatprep.mubr.f32.mxu0 0.0
  %210 = vmatmul.mubr.f32.gmra.mrb[0].mxu0 %v121
  %v211 = vpop.f32.mrb[0].mxu0
  %v212 = vadd.f32 %v143, %v211
  %v213 = vpop.f32.mrb[0].mxu0
  %214 = vdwg.mxu0
  %v215 = vxor.u32 %v212, 2147483648
  %v216 = vmul.f32 %v215, 1.442695
  %v217 = vpow.pop %v216
  %v218 = vadd.f32 %v217, 1.0
  %v219 = vrcp.pop %v218
  %v220 = vmul.f32 1.0, %v219
  %v221 = vpack.c.bf16 %v220, %v220
  %222 = vst [vmem:[%s5] sm:$0x1] %v221
  // Predicated region
  $region22: #{mbconv_forward.4} parent=0 // pred_check
    _
  $region23: #{mbconv_forward.4} parent=0 // pred_check_branch
    %224 = sbr.rel (0) target = $region25
  $region24: #{mbconv_forward.4} parent=0 // pred_region
    _
  $region25: #{mbconv_forward.4} parent=0 // pred_fallthru
    _
  // Predicated region
  $region26: #{mbconv_forward.4} parent=0 // pred_check
    _
  $region27: #{mbconv_forward.4} parent=0 // pred_check_branch
    %226 = sbr.rel (0) target = $region29
  $region28: #{mbconv_forward.4} parent=0 // pred_region
    _
  $region29: #{mbconv_forward.4} parent=0 // pred_fallthru
    _

// kernel: mbconv_forward.5
$region0: #{mbconv_forward.5}
  #allocation0 [shape = 'u32[]', space=smem, size = 0x4, offset = 0x4, fixed_abs, tag = 'smem constant byte address 0x4 - core index']
  #allocation1 [shape = 'u32[144,128]{1,0:T(1,128)}', space=vmem, size = 0x12000, scoped, tag = 'internal scratch']
  %s0 = inlined_call_operand.vmem [shape: bf16[2,256,128], index: 0, kind: input, shape index: {}]
  %s1 = inlined_call_operand.vmem [shape: bf16[2,1,128], index: 1, kind: input, shape index: {}]
  %s2 = inlined_call_operand.vmem [shape: bf16[128,128], index: 2, kind: input, shape index: {}]
  %s3 = inlined_call_operand.vmem [shape: f32[1,128], index: 3, kind: input, shape index: {}]
  %s4 = inlined_call_operand.vmem [shape: bf16[2,256,128], index: 4, kind: input, shape index: {}]
  %s5 = inlined_call_operand.vmem [shape: bf16[2,256,128], index: 5, kind: output, shape index: {}]
  %s6 = sld [smem:[#allocation0]]
  $region53: #{mbconv_forward.5} parent=0
    _
  %s8 = ssub.s32 1, %s6
  %s9 = scalar_select 0, %s8, %s6
  loop: start=0, step=1, limit=4
  $region2: #{mbconv_forward.5} parent=0 // loop_pre_header
    _
  $region3: #{mbconv_forward.5} parent=0 // loop_header
    %s11 = sphi 0, %s15
    %p12 = scmp.ge.s32.totalorder %s11, 4
    %s18 = sphi 0, %s30
    %s19 = sphi 0, %s26
    %s20 = sphi 0, %s18
    %s21 = sphi 0, %s19
    %s22 = sphi 0, %s20
    %s23 = sphi 0, %s21
    %s35 = sphi 0, %s37
    %s38 = sphi 0, %s35
    %s39 = sphi 0, %s38
    %s55 = sphi 0, %s39
    %s61 = sphi 0, %s63
    %s64 = sphi 0, %s61
    %s65 = sphi 0, %s64
    %s81 = sphi 0, %s65
    %s85 = sphi 0, %s85
    %s87 = sphi 0, %s85
    %s88 = sphi 0, %s87
    %s102 = sphi 0, %s88
    %s106 = sphi 0, %s106
    %s108 = sphi 0, %s106
    %s109 = sphi 0, %s108
    %s123 = sphi 0, %s109
    %s131 = sphi 0, %s133
    %s134 = sphi 0, %s131
    %s135 = sphi 0, %s134
    %s151 = sphi 0, %s135
    %s159 = sphi 0, %s161
    %s162 = sphi 0, %s159
    %s163 = sphi 0, %s162
    %s179 = sphi 0, %s163
  $region4: #{mbconv_forward.5} parent=0 // loop_header_branch
    %14 = sbr.rel (%p12) target = $region8
  $region5: #{mbconv_forward.5} parent=0 // loop_body
    %s16 = ssub.s32 %s11, 1
    %s17 = ssub.s32 %s11, 2
    %s24 = sadd.s32 1, %s19
    %p25 = scmp.ge.s32.totalorder %s24, 1
    %s26 = scalar_select %p25, 0, %s24
    %s27 = sadd.s32 1, %s18
    %s28 = scalar_select %p25, %s27, %s18
    %p29 = scmp.ge.s32.totalorder %s28, 2
    %s30 = scalar_select %p29, 0, %s28
    %s31 = ssub.s32 %s18, %s30
    %s32 = ssub.s32 %s19, %s26
    %s33 = sor.u32 %s31, %s32
    %p34 = scmp.eq.s32.totalorder %s33, 0
    %s36 = sadd.s32 %s35, 1
    %s37 = scalar_select %p34, %s35, %s36
    %p40 = pneg %p34
    %p41 = scmp.eq.s32.totalorder %s11, 1
    %p42 = por %p40, %p41
    %p43 = scmp.ne.s32.totalorder %s35, %s38
    %p44 = scmp.eq.s32.totalorder %s11, 0
    %p45 = por %p43, %p44
    %p46 = scmp.ne.s32.totalorder %s35, %s38
    %p47 = scmp.eq.s32.totalorder %s16, 1
    %p48 = por %p46, %p47
    %p49 = scmp.ne.s32.totalorder %s38, %s39
    %p50 = scmp.eq.s32.totalorder %s16, 0
    %p51 = por %p49, %p50
    %p52 = scmp.ne.s32.totalorder %s38, %s39
    %p53 = scmp.eq.s32.totalorder %s17, 1
    %p54 = por %p52, %p53
    %p56 = scmp.ne.s32.totalorder %s39, %s55
    %p57 = scmp.eq.s32.totalorder %s17, 0
    %p58 = por %p56, %p57
    %s59 = ssub.s32 %s18, %s30
    %p60 = scmp.eq.s32.totalorder %s59, 0
    %s62 = sadd.s32 %s61, 1
    %s63 = scalar_select %p60, %s61, %s62
    %p66 = pneg %p60
    %p67 = scmp.eq.s32.totalorder %s11, 1
    %p68 = por %p66, %p67
    %p69 = scmp.ne.s32.totalorder %s61, %s64
    %p70 = scmp.eq.s32.totalorder %s11, 0
    %p71 = por %p69, %p70
    %p72 = scmp.ne.s32.totalorder %s61, %s64
    %p73 = scmp.eq.s32.totalorder %s16, 1
    %p74 = por %p72, %p73
    %p75 = scmp.ne.s32.totalorder %s64, %s65
    %p76 = scmp.eq.s32.totalorder %s16, 0
    %p77 = por %p75, %p76
    %p78 = scmp.ne.s32.totalorder %s64, %s65
    %p79 = scmp.eq.s32.totalorder %s17, 1
    %p80 = por %p78, %p79
    %p82 = scmp.ne.s32.totalorder %s65, %s81
    %p83 = scmp.eq.s32.totalorder %s17, 0
    %p84 = por %p82, %p83
    %s86 = sadd.s32 %s85, 1
    %p89 = scmp.eq.s32.totalorder %s11, 1
    %p90 = scmp.ne.s32.totalorder %s85, %s87
    %p91 = scmp.eq.s32.totalorder %s11, 0
    %p92 = por %p90, %p91
    %p93 = scmp.ne.s32.totalorder %s85, %s87
    %p94 = scmp.eq.s32.totalorder %s16, 1
    %p95 = por %p93, %p94
    %p96 = scmp.ne.s32.totalorder %s87, %s88
    %p97 = scmp.eq.s32.totalorder %s16, 0
    %p98 = por %p96, %p97
    %p99 = scmp.ne.s32.totalorder %s87, %s88
    %p100 = scmp.eq.s32.totalorder %s17, 1
    %p101 = por %p99, %p100
    %p103 = scmp.ne.s32.totalorder %s88, %s102
    %p104 = scmp.eq.s32.totalorder %s17, 0
    %p105 = por %p103, %p104
    %s107 = sadd.s32 %s106, 1
    %p110 = scmp.eq.s32.totalorder %s11, 1
    %p111 = scmp.ne.s32.totalorder %s106, %s108
    %p112 = scmp.eq.s32.totalorder %s11, 0
    %p113 = por %p111, %p112
    %p114 = scmp.ne.s32.totalorder %s106, %s108
    %p115 = scmp.eq.s32.totalorder %s16, 1
    %p116 = por %p114, %p115
    %p117 = scmp.ne.s32.totalorder %s108, %s109
    %p118 = scmp.eq.s32.totalorder %s16, 0
    %p119 = por %p117, %p118
    %p120 = scmp.ne.s32.totalorder %s108, %s109
    %p121 = scmp.eq.s32.totalorder %s17, 1
    %p122 = por %p120, %p121
    %p124 = scmp.ne.s32.totalorder %s109, %s123
    %p125 = scmp.eq.s32.totalorder %s17, 0
    %p126 = por %p124, %p125
    %s127 = ssub.s32 %s18, %s30
    %s128 = ssub.s32 %s19, %s26
    %s129 = sor.u32 %s127, %s128
    %p130 = scmp.eq.s32.totalorder %s129, 0
    %s132 = sadd.s32 %s131, 1
    %s133 = scalar_select %p130, %s131, %s132
    %p136 = pneg %p130
    %p137 = scmp.eq.s32.totalorder %s11, 1
    %p138 = por %p136, %p137
    %p139 = scmp.ne.s32.totalorder %s131, %s134
    %p140 = scmp.eq.s32.totalorder %s11, 0
    %p141 = por %p139, %p140
    %p142 = scmp.ne.s32.totalorder %s131, %s134
    %p143 = scmp.eq.s32.totalorder %s16, 1
    %p144 = por %p142, %p143
    %p145 = scmp.ne.s32.totalorder %s134, %s135
    %p146 = scmp.eq.s32.totalorder %s16, 0
    %p147 = por %p145, %p146
    %p148 = scmp.ne.s32.totalorder %s134, %s135
    %p149 = scmp.eq.s32.totalorder %s17, 1
    %p150 = por %p148, %p149
    %p152 = scmp.ne.s32.totalorder %s135, %s151
    %p153 = scmp.eq.s32.totalorder %s17, 0
    %p154 = por %p152, %p153
    %s155 = ssub.s32 %s18, %s30
    %s156 = ssub.s32 %s19, %s26
    %s157 = sor.u32 %s155, %s156
    %p158 = scmp.eq.s32.totalorder %s157, 0
    %s160 = sadd.s32 %s159, 1
    %s161 = scalar_select %p158, %s159, %s160
    %p164 = pneg %p158
    %p165 = scmp.eq.s32.totalorder %s11, 1
    %p166 = por %p164, %p165
    %p167 = scmp.ne.s32.totalorder %s159, %s162
    %p168 = scmp.eq.s32.totalorder %s11, 0
    %p169 = por %p167, %p168
    %p170 = scmp.ne.s32.totalorder %s159, %s162
    %p171 = scmp.eq.s32.totalorder %s16, 1
    %p172 = por %p170, %p171
    %p173 = scmp.ne.s32.totalorder %s162, %s163
    %p174 = scmp.eq.s32.totalorder %s16, 0
    %p175 = por %p173, %p174
    %p176 = scmp.ne.s32.totalorder %s162, %s163
    %p177 = scmp.eq.s32.totalorder %s17, 1
    %p178 = por %p176, %p177
    %p180 = scmp.ne.s32.totalorder %s163, %s179
    %p181 = scmp.eq.s32.totalorder %s17, 0
    %p182 = por %p180, %p181
    %p183 = scmp.le.s32.totalorder 1, %s11
    %p184 = scmp.lt.s32.totalorder %s11, 3
    %p185 = pnand %p183, %p184
    %p186 = pneg %p185
    // Predicated region
    $region9: #{mbconv_forward.5} parent=5 // pred_check
      _
    $region10: #{mbconv_forward.5} parent=5 // pred_check_branch
      %188 = sbr.rel (%p185) target = $region12
    $region11: #{mbconv_forward.5} parent=5 // pred_region
      %s189 = ssub.s32 %s11, 1
      // Predicated region
      $region13: #{mbconv_forward.5} parent=11 // pred_check
        %p190 = pneg %p98
      $region14: #{mbconv_forward.5} parent=11 // pred_check_branch
        %192 = sbr.rel (%p190) target = $region16
      $region15: #{mbconv_forward.5} parent=11 // pred_region
        _
      $region16: #{mbconv_forward.5} parent=11 // pred_fallthru
        _
      // Predicated region
      $region17: #{mbconv_forward.5} parent=11 // pred_check
        %p193 = pneg %p119
      $region18: #{mbconv_forward.5} parent=11 // pred_check_branch
        %195 = sbr.rel (%p193) target = $region20
      $region19: #{mbconv_forward.5} parent=11 // pred_region
        _
      $region20: #{mbconv_forward.5} parent=11 // pred_fallthru
        _
    $region12: #{mbconv_forward.5} parent=5 // pred_fallthru
      _
    %p196 = scmp.lt.s32.totalorder %s11, 2
    // Predicated region
    $region21: #{mbconv_forward.5} parent=5 // pred_check
      %p197 = pneg %p196
    $region22: #{mbconv_forward.5} parent=5 // pred_check_branch
      %199 = sbr.rel (%p197) target = $region24
    $region23: #{mbconv_forward.5} parent=5 // pred_region
      // Predicated region
      $region25: #{mbconv_forward.5} parent=23 // pred_check
        %p200 = pneg %p45
      $region26: #{mbconv_forward.5} parent=23 // pred_check_branch
        %202 = sbr.rel (%p200) target = $region28
      $region27: #{mbconv_forward.5} parent=23 // pred_region
        %s203 = smul.u32 32, %s19
        %p204 = scmp.lt.s32.totalorder %s18, 1
        %s205 = scalar_select %p204, %s18, 1
        %p206 = scmp.lt.s32.totalorder %s203, 31
        %s207 = scalar_select %p206, %s203, 31
        %s208 = smul.addr %s205, 32
        %s209 = sadd.s32 %s207, %s208
        %s210 = smul.addr %s209, 4
        %s211 = scalar_lea.vmem %s0, %s210
        %s212 = smul.u32 32, %s19
      $region28: #{mbconv_forward.5} parent=23 // pred_fallthru
        _
      // Predicated region
      $region29: #{mbconv_forward.5} parent=23 // pred_check
        %p213 = pneg %p71
      $region30: #{mbconv_forward.5} parent=23 // pred_check_branch
        %215 = sbr.rel (%p213) target = $region32
      $region31: #{mbconv_forward.5} parent=23 // pred_region
        %p216 = scmp.lt.s32.totalorder %s18, 1
        %s217 = scalar_select %p216, %s18, 1
        %s218 = scalar_lea.vmem %s1, %s217
      $region32: #{mbconv_forward.5} parent=23 // pred_fallthru
        _
      // Predicated region
      $region33: #{mbconv_forward.5} parent=23 // pred_check
        %p219 = pneg %p141
      $region34: #{mbconv_forward.5} parent=23 // pred_check_branch
        %221 = sbr.rel (%p219) target = $region36
      $region35: #{mbconv_forward.5} parent=23 // pred_region
        %s222 = smul.u32 32, %s19
        %p223 = scmp.lt.s32.totalorder %s18, 1
        %s224 = scalar_select %p223, %s18, 1
        %p225 = scmp.lt.s32.totalorder %s222, 31
        %s226 = scalar_select %p225, %s222, 31
        %s227 = smul.addr %s224, 32
        %s228 = sadd.s32 %s226, %s227
        %s229 = smul.addr %s228, 4
        %s230 = scalar_lea.vmem %s4, %s229
        %s231 = smul.u32 32, %s19
      $region36: #{mbconv_forward.5} parent=23 // pred_fallthru
        _
    $region24: #{mbconv_forward.5} parent=5 // pred_fallthru
      _
    %p232 = scmp.le.s32.totalorder 1, %s11
    %p233 = scmp.lt.s32.totalorder %s11, 3
    %p234 = pnand %p232, %p233
    %p235 = pneg %p234
    // Predicated region
    $region37: #{mbconv_forward.5} parent=5 // pred_check
      _
    $region38: #{mbconv_forward.5} parent=5 // pred_check_branch
      %237 = sbr.rel (%p234) target = $region40
    $region39: #{mbconv_forward.5} parent=5 // pred_region
      %s238 = ssub.s32 %s11, 1
      %s239 = smul.u32 32, %s21
      %p240 = scmp.lt.s32.totalorder %s20, 1
      %s241 = scalar_select %p240, %s20, 1
      %p242 = scmp.lt.s32.totalorder %s239, 31
      %s243 = scalar_select %p242, %s239, 31
      %s244 = smul.addr %s241, 32
      %s245 = sadd.s32 %s243, %s244
      %s246 = smul.addr %s245, 4
      %s247 = scalar_lea.vmem %s0, %s246
      %p248 = pneg %p51
      %p249 = pneg %p48
      %p250 = scmp.lt.s32.totalorder %s20, 1
      %s251 = scalar_select %p250, %s20, 1
      %s252 = scalar_lea.vmem %s1, %s251
      %p253 = pneg %p77
      %p254 = pneg %p74
      %p255 = pneg %p98
      %p256 = pneg %p95
      %p257 = pneg %p119
      %p258 = pneg %p116
      %s259 = smul.u32 32, %s21
      %p260 = scmp.lt.s32.totalorder %s20, 1
      %s261 = scalar_select %p260, %s20, 1
      %p262 = scmp.lt.s32.totalorder %s259, 31
      %s263 = scalar_select %p262, %s259, 31
      %s264 = smul.addr %s261, 32
      %s265 = sadd.s32 %s263, %s264
      %s266 = smul.addr %s265, 4
      %s267 = scalar_lea.vmem %s4, %s266
      %p268 = pneg %p147
      %p269 = pneg %p144
      %p270 = pneg %p175
      %p271 = pneg %p172
      %s272 = smul.u32 32, %s21
      %p273 = scmp.lt.s32.totalorder %s20, 1
      %s274 = scalar_select %p273, %s20, 1
      %p275 = scmp.lt.s32.totalorder %s272, 31
      %s276 = scalar_select %p275, %s272, 31
      %s277 = smul.addr %s274, 32
      %s278 = sadd.s32 %s276, %s277
      %s279 = smul.addr %s278, 4
      %s280 = scalar_lea.vmem %s5, %s279
      %s281 = smul.u32 32, %s21
      %p282 = scmp.lt.s32.totalorder %s20, 1
      %s283 = scalar_select %p282, %s20, 1
      %p284 = scmp.lt.s32.totalorder %s281, 31
      %s285 = scalar_select %p284, %s281, 31
      %s286 = smul.addr %s283, 32
      %s287 = sadd.s32 %s285, %s286
      %s288 = smul.addr %s287, 4
      %s289 = scalar_lea.vmem %s0, %s288
      %s290 = smul.u32 32, %s21
      %p291 = scmp.lt.s32.totalorder %s20, 1
      %s292 = scalar_select %p291, %s20, 1
      %s293 = scalar_lea.vmem %s1, %s292
      %s294 = smul.u32 32, %s21
      %p295 = scmp.lt.s32.totalorder %s20, 1
      %s296 = scalar_select %p295, %s20, 1
      %p297 = scmp.lt.s32.totalorder %s294, 31
      %s298 = scalar_select %p297, %s294, 31
      %s299 = smul.addr %s296, 32
      %s300 = sadd.s32 %s298, %s299
      %s301 = smul.addr %s300, 4
      %s302 = scalar_lea.vmem %s4, %s301
      %s303 = smul.u32 32, %s21
      %s304 = smul.u32 32, %s21
      %p305 = scmp.lt.s32.totalorder %s20, 1
      %s306 = scalar_select %p305, %s20, 1
      %p307 = scmp.lt.s32.totalorder %s304, 31
      %s308 = scalar_select %p307, %s304, 31
      %s309 = smul.addr %s306, 32
      %s310 = sadd.s32 %s308, %s309
      %s311 = smul.addr %s310, 4
      %s312 = scalar_lea.vmem %s5, %s311
      %s313 = smul.u32 32, %s21
      %v315 = vld [vmem:[%s289] sm:$0xf]
      %v316 = vld [vmem:[%s289 + $0x4] sm:$0xf]
      %v317 = vld [vmem:[%s289 + $0x8] sm:$0xf]
      %v318 = vld [vmem:[%s289 + $0xc] sm:$0xf]
      %v319 = vld [vmem:[%s289 + $0x10] sm:$0xf]
      %v320 = vld [vmem:[%s289 + $0x14] sm:$0xf]
      %v321 = vld [vmem:[%s289 + $0x18] sm:$0xf]
      %v322 = vld [vmem:[%s289 + $0x1c] sm:$0xf]
      %v323 = vld [vmem:[%s289 + $0x20] sm:$0xf]
      %v324 = vld [vmem:[%s289 + $0x24] sm:$0xf]
      %v325 = vld [vmem:[%s289 + $0x28] sm:$0xf]
      %v326 = vld [vmem:[%s289 + $0x2c] sm:$0xf]
      %v327 = vld [vmem:[%s289 + $0x30] sm:$0xf]
      %v328 = vld [vmem:[%s289 + $0x34] sm:$0xf]
      %v329 = vld [vmem:[%s289 + $0x38] sm:$0xf]
      %v330 = vld [vmem:[%s289 + $0x3c] sm:$0xf]
      %v331 = vld [vmem:[%s289 + $0x40] sm:$0xf]
      %v332 = vld [vmem:[%s289 + $0x44] sm:$0xf]
      %v333 = vld [vmem:[%s289 + $0x48] sm:$0xf]
      %v334 = vld [vmem:[%s289 + $0x4c] sm:$0xf]
      %v335 = vld [vmem:[%s289 + $0x50] sm:$0xf]
      %v336 = vld [vmem:[%s289 + $0x54] sm:$0xf]
      %v337 = vld [vmem:[%s289 + $0x58] sm:$0xf]
      %v338 = vld [vmem:[%s289 + $0x5c] sm:$0xf]
      %v339 = vld [vmem:[%s289 + $0x60] sm:$0xf]
      %v340 = vld [vmem:[%s289 + $0x64] sm:$0xf]
      %v341 = vld [vmem:[%s289 + $0x68] sm:$0xf]
      %v342 = vld [vmem:[%s289 + $0x6c] sm:$0xf]
      %v343 = vld [vmem:[%s289 + $0x70] sm:$0xf]
      %v344 = vld [vmem:[%s289 + $0x74] sm:$0xf]
      %v345 = vld [vmem:[%s289 + $0x78] sm:$0xf]
      %v346 = vld [vmem:[%s289 + $0x7c] sm:$0xf]
      %v347 = vld [vmem:[%s293] sm:$0x1]
      %v349 = vpack.i.b16 %v347, %v347
      %v351 = vlaneseq
      %v352 = vshrl.u32 %v351, 7
      %v353 = vsub.s32 0, %v352
      %v354 = vrot.slane %v349, %v353
      %v356 = vunpack.c.l.b16 %v354
      %v357 = vpack.c.b16 %v356, %v356
      %v359 = vmul.bf16 %v315, %v357
      %v360 = vmul.bf16 %v316, %v357
      %v361 = vmul.bf16 %v317, %v357
      %v362 = vmul.bf16 %v318, %v357
      %v363 = vmul.bf16 %v319, %v357
      %v364 = vmul.bf16 %v320, %v357
      %v365 = vmul.bf16 %v321, %v357
      %v366 = vmul.bf16 %v322, %v357
      %v367 = vmul.bf16 %v323, %v357
      %v368 = vmul.bf16 %v324, %v357
      %v369 = vmul.bf16 %v325, %v357
      %v370 = vmul.bf16 %v326, %v357
      %v371 = vmul.bf16 %v327, %v357
      %v372 = vmul.bf16 %v328, %v357
      %v373 = vmul.bf16 %v329, %v357
      %v374 = vmul.bf16 %v330, %v357
      %v375 = vmul.bf16 %v331, %v357
      %v376 = vmul.bf16 %v332, %v357
      %v377 = vmul.bf16 %v333, %v357
      %v378 = vmul.bf16 %v334, %v357
      %v379 = vmul.bf16 %v335, %v357
      %v380 = vmul.bf16 %v336, %v357
      %v381 = vmul.bf16 %v337, %v357
      %v382 = vmul.bf16 %v338, %v357
      %v383 = vmul.bf16 %v339, %v357
      %v384 = vmul.bf16 %v340, %v357
      %v385 = vmul.bf16 %v341, %v357
      %v386 = vmul.bf16 %v342, %v357
      %v387 = vmul.bf16 %v343, %v357
      %v388 = vmul.bf16 %v344, %v357
      %v389 = vmul.bf16 %v345, %v357
      %v390 = vmul.bf16 %v346, %v357
      %v391 = vld [vmem:[%s2] sm:$0xf]
      %v392 = vld [vmem:[%s2 + $0x4] sm:$0xf]
      %v393 = vld [vmem:[%s2 + $0x8] sm:$0xf]
      %v394 = vld [vmem:[%s2 + $0xc] sm:$0xf]
      %v395 = vld [vmem:[%s2 + $0x10] sm:$0xf]
      %v396 = vld [vmem:[%s2 + $0x14] sm:$0xf]
      %v397 = vld [vmem:[%s2 + $0x18] sm:$0xf]
      %v398 = vld [vmem:[%s2 + $0x1c] sm:$0xf]
      %v399 = vld [vmem:[%s2 + $0x20] sm:$0xf]
      %v400 = vld [vmem:[%s2 + $0x24] sm:$0xf]
      %v401 = vld [vmem:[%s2 + $0x28] sm:$0xf]
      %v402 = vld [vmem:[%s2 + $0x2c] sm:$0xf]
      %v403 = vld [vmem:[%s2 + $0x30] sm:$0xf]
      %v404 = vld [vmem:[%s2 + $0x34] sm:$0xf]
      %v405 = vld [vmem:[%s2 + $0x38] sm:$0xf]
      %v406 = vld [vmem:[%s2 + $0x3c] sm:$0xf]
      %v407 = vld [vmem:[%s3] sm:$0x1]
      %v409 = vlaneseq
      %v410 = vshrl.u32 %v409, 7
      %v411 = vsub.s32 0, %v410
      %v412 = vrot.slane %v407, %v411
      %v446 = vunpack.c.l.b16 %v359
      %v447 = vunpack.c.l.b16 %v360
      %v448 = vunpack.c.l.b16 %v361
      %v449 = vunpack.c.l.b16 %v362
      %v450 = vunpack.c.l.b16 %v363
      %v451 = vunpack.c.l.b16 %v364
      %v452 = vunpack.c.l.b16 %v365
      %v453 = vunpack.c.l.b16 %v366
      %v454 = vunpack.c.l.b16 %v367
      %v455 = vunpack.c.l.b16 %v368
      %v456 = vunpack.c.l.b16 %v369
      %v457 = vunpack.c.l.b16 %v370
      %v458 = vunpack.c.l.b16 %v371
      %v459 = vunpack.c.l.b16 %v372
      %v460 = vunpack.c.l.b16 %v373
      %v461 = vunpack.c.l.b16 %v374
      %v462 = vunpack.c.l.b16 %v375
      %v463 = vunpack.c.l.b16 %v376
      %v464 = vunpack.c.l.b16 %v377
      %v465 = vunpack.c.l.b16 %v378
      %v466 = vunpack.c.l.b16 %v379
      %v467 = vunpack.c.l.b16 %v380
      %v468 = vunpack.c.l.b16 %v381
      %v469 = vunpack.c.l.b16 %v382
      %v470 = vunpack.c.l.b16 %v383
      %v471 = vunpack.c.l.b16 %v384
      %v472 = vunpack.c.l.b16 %v385
      %v473 = vunpack.c.l.b16 %v386
      %v474 = vunpack.c.l.b16 %v387
      %v475 = vunpack.c.l.b16 %v388
      %v476 = vunpack.c.l.b16 %v389
      %v477 = vunpack.c.l.b16 %v390
      %v478 = vpack.c.b16 %v447, %v446
      %v479 = vpack.c.b16 %v449, %v448
      %v480 = vpack.c.b16 %v451, %v450
      %v481 = vpack.c.b16 %v453, %v452
      %v482 = vpack.c.b16 %v455, %v454
      %v483 = vpack.c.b16 %v457, %v456
      %v484 = vpack.c.b16 %v459, %v458
      %v485 = vpack.c.b16 %v461, %v460
      %v486 = vpack.c.b16 %v463, %v462
      %v487 = vpack.c.b16 %v465, %v464
      %v488 = vpack.c.b16 %v467, %v466
      %v489 = vpack.c.b16 %v469, %v468
      %v490 = vpack.c.b16 %v471, %v470
      %v491 = vpack.c.b16 %v473, %v472
      %v492 = vpack.c.b16 %v475, %v474
      %v493 = vpack.c.b16 %v477, %v476
      %v526 = vunpack.c.l.b16 %v391
      %v527 = vunpack.c.l.b16 %v392
      %v528 = vunpack.c.l.b16 %v393
      %v529 = vunpack.c.l.b16 %v394
      %v530 = vunpack.c.l.b16 %v395
      %v531 = vunpack.c.l.b16 %v396
      %v532 = vunpack.c.l.b16 %v397
      %v533 = vunpack.c.l.b16 %v398
      %v534 = vunpack.c.l.b16 %v399
      %v535 = vunpack.c.l.b16 %v400
      %v536 = vunpack.c.l.b16 %v401
      %v537 = vunpack.c.l.b16 %v402
      %v538 = vunpack.c.l.b16 %v403
      %v539 = vunpack.c.l.b16 %v404
      %v540 = vunpack.c.l.b16 %v405
      %v541 = vunpack.c.l.b16 %v406
      %v542 = vpack.c.b16 %v527, %v526
      %v543 = vpack.c.b16 %v529, %v528
      %v544 = vpack.c.b16 %v531, %v530
      %v545 = vpack.c.b16 %v533, %v532
      %v546 = vpack.c.b16 %v535, %v534
      %v547 = vpack.c.b16 %v537, %v536
      %v548 = vpack.c.b16 %v539, %v538
      %v549 = vpack.c.b16 %v541, %v540
      %558 = vmatprep.subr.bf16.mxu0 0
      %559 = vmatpush1.bf16.msra.mxu0 %v542
      %560 = vmatprep.subr.bf16.mxu0 0
      %561 = vmatpush1.bf16.msra.mxu0 %v543
      %562 = vmatprep.subr.bf16.mxu0 0
      %563 = vmatpush1.bf16.msra.mxu0 %v544
      %564 = vmatprep.subr.bf16.mxu0 0
      %565 = vmatpush1.bf16.msra.mxu0 %v545
      %566 = vmatprep.subr.bf16.mxu0 0
      %567 = vmatpush1.bf16.msra.mxu0 %v546
      %568 = vmatprep.subr.bf16.mxu0 0
      %569 = vmatpush1.bf16.msra.mxu0 %v547
      %570 = vmatprep.subr.bf16.mxu0 0
      %571 = vmatpush1.bf16.msra.mxu0 %v548
      %572 = vmatprep.subr.bf16.mxu0 0
      %573 = vmatpush1.bf16.msra.mxu0 %v549
      %574 = vmatprep.subr.bf16.mxu0 0
      %575 = vmatpush1.bf16.msra.mxu0 0
      %576 = vmatprep.subr.bf16.mxu0 0
      %577 = vmatpush1.bf16.msra.mxu0 0
      %578 = vmatprep.subr.bf16.mxu0 0
      %579 = vmatpush1.bf16.msra.mxu0 0
      %580 = vmatprep.subr.bf16.mxu0 0
      %581 = vmatpush1.bf16.msra.mxu0 0
      %582 = vmatprep.subr.bf16.mxu0 0
      %583 = vmatpush1.bf16.msra.mxu0 0
      %584 = vmatprep.subr.bf16.mxu0 0
      %585 = vmatpush1.bf16.msra.mxu0 0
      %586 = vmatprep.subr.bf16.mxu0 0
      %587 = vmatpush1.bf16.msra.mxu0 0
      %588 = vmatprep.subr.bf16.mxu0 0
      %589 = vmatpush1.bf16.msra.mxu0 0
      %590 = vmatprep.mubr.bf16.mxu0 0
      %591 = vmatmul.mubr.bf16.gmra.mrb[0].mxu0 %v478
      %v592 = vpop.f32.mrb[0].mxu0
      %v593 = vadd.f32 %v412, %v592
      %v594 = vpop.f32.mrb[0].mxu0
      %v595 = vpop.f32.mrb[0].mxu0
      %v596 = vadd.f32 %v412, %v595
      %v597 = vpop.f32.mrb[0].mxu0
      %598 = vmatprep.mubr.bf16.mxu0 0
      %599 = vmatmul.mubr.bf16.gmra.mrb[0].mxu0 %v479
      %v600 = vpop.f32.mrb[0].mxu0
      %v601 = vadd.f32 %v412, %v600
      %v602 = vpop.f32.mrb[0].mxu0
      %v603 = vpop.f32.mrb[0].mxu0
      %v604 = vadd.f32 %v412, %v603
      %v605 = vpop.f32.mrb[0].mxu0
      %606 = vmatprep.mubr.bf16.mxu0 0
      %607 = vmatmul.mubr.bf16.gmra.mrb[0].mxu0 %v480
      %v608 = vpop.f32.mrb[0].mxu0
      %v609 = vadd.f32 %v412, %v608
      %v610 = vpop.f32.mrb[0].mxu0
      %v611 = vpop.f32.mrb[0].mxu0
      %v612 = vadd.f32 %v412, %v611
      %v613 = vpop.f32.mrb[0].mxu0
      %614 = vmatprep.mubr.bf16.mxu0 0
      %615 = vmatmul.mubr.bf16.gmra.mrb[0].mxu0 %v481
      %v616 = vpop.f32.mrb[0].mxu0
      %v617 = vadd.f32 %v412, %v616
      %v618 = vpop.f32.mrb[0].mxu0
      %v619 = vpop.f32.mrb[0].mxu0
      %v620 = vadd.f32 %v412, %v619
      %v621 = vpop.f32.mrb[0].mxu0
      %622 = vmatprep.mubr.bf16.mxu0 0
      %623 = vmatmul.mubr.bf16.gmra.mrb[0].mxu0 %v482
      %v624 = vpop.f32.mrb[0].mxu0
      %v625 = vadd.f32 %v412, %v624
      %v626 = vpop.f32.mrb[0].mxu0
      %v627 = vpop.f32.mrb[0].mxu0
      %v628 = vadd.f32 %v412, %v627
      %v629 = vpop.f32.mrb[0].mxu0
      %630 = vmatprep.mubr.bf16.mxu0 0
      %631 = vmatmul.mubr.bf16.gmra.mrb[0].mxu0 %v483
      %v632 = vpop.f32.mrb[0].mxu0
      %v633 = vadd.f32 %v412, %v632
      %v634 = vpop.f32.mrb[0].mxu0
      %v635 = vpop.f32.mrb[0].mxu0
      %v636 = vadd.f32 %v412, %v635
      %v637 = vpop.f32.mrb[0].mxu0
      %638 = vmatprep.mubr.bf16.mxu0 0
      %639 = vmatmul.mubr.bf16.gmra.mrb[0].mxu0 %v484
      %v640 = vpop.f32.mrb[0].mxu0
      %v641 = vadd.f32 %v412, %v640
      %v642 = vpop.f32.mrb[0].mxu0
      %v643 = vpop.f32.mrb[0].mxu0
      %v644 = vadd.f32 %v412, %v643
      %v645 = vpop.f32.mrb[0].mxu0
      %646 = vmatprep.mubr.bf16.mxu0 0
      %647 = vmatmul.mubr.bf16.gmra.mrb[0].mxu0 %v485
      %v648 = vpop.f32.mrb[0].mxu0
      %v649 = vadd.f32 %v412, %v648
      %v650 = vpop.f32.mrb[0].mxu0
      %v651 = vpop.f32.mrb[0].mxu0
      %v652 = vadd.f32 %v412, %v651
      %v653 = vpop.f32.mrb[0].mxu0
      %654 = vmatprep.mubr.bf16.mxu0 0
      %655 = vmatmul.mubr.bf16.gmra.mrb[0].mxu0 %v486
      %v656 = vpop.f32.mrb[0].mxu0
      %v657 = vadd.f32 %v412, %v656
      %v658 = vpop.f32.mrb[0].mxu0
      %v659 = vpop.f32.mrb[0].mxu0
      %v660 = vadd.f32 %v412, %v659
      %v661 = vpop.f32.mrb[0].mxu0
      %662 = vmatprep.mubr.bf16.mxu0 0
      %663 = vmatmul.mubr.bf16.gmra.mrb[0].mxu0 %v487
      %v664 = vpop.f32.mrb[0].mxu0
      %v665 = vadd.f32 %v412, %v664
      %v666 = vpop.f32.mrb[0].mxu0
      %v667 = vpop.f32.mrb[0].mxu0
      %v668 = vadd.f32 %v412, %v667
      %v669 = vpop.f32.mrb[0].mxu0
      %670 = vmatprep.mubr.bf16.mxu0 0
      %671 = vmatmul.mubr.bf16.gmra.mrb[0].mxu0 %v488
      %v672 = vpop.f32.mrb[0].mxu0
      %v673 = vadd.f32 %v412, %v672
      %v674 = vpop.f32.mrb[0].mxu0
      %v675 = vpop.f32.mrb[0].mxu0
      %v676 = vadd.f32 %v412, %v675
      %v677 = vpop.f32.mrb[0].mxu0
      %678 = vmatprep.mubr.bf16.mxu0 0
      %679 = vmatmul.mubr.bf16.gmra.mrb[0].mxu0 %v489
      %v680 = vpop.f32.mrb[0].mxu0
      %v681 = vadd.f32 %v412, %v680
      %v682 = vpop.f32.mrb[0].mxu0
      %v683 = vpop.f32.mrb[0].mxu0
      %v684 = vadd.f32 %v412, %v683
      %v685 = vpop.f32.mrb[0].mxu0
      %686 = vmatprep.mubr.bf16.mxu0 0
      %687 = vmatmul.mubr.bf16.gmra.mrb[0].mxu0 %v490
      %v688 = vpop.f32.mrb[0].mxu0
      %v689 = vadd.f32 %v412, %v688
      %v690 = vpop.f32.mrb[0].mxu0
      %v691 = vpop.f32.mrb[0].mxu0
      %v692 = vadd.f32 %v412, %v691
      %v693 = vpop.f32.mrb[0].mxu0
      %694 = vmatprep.mubr.bf16.mxu0 0
      %695 = vmatmul.mubr.bf16.gmra.mrb[0].mxu0 %v491
      %v696 = vpop.f32.mrb[0].mxu0
      %v697 = vadd.f32 %v412, %v696
      %v698 = vpop.f32.mrb[0].mxu0
      %v699 = vpop.f32.mrb[0].mxu0
      %v700 = vadd.f32 %v412, %v699
      %v701 = vpop.f32.mrb[0].mxu0
      %702 = vmatprep.mubr.bf16.mxu0 0
      %703 = vmatmul.mubr.bf16.gmra.mrb[0].mxu0 %v492
      %v704 = vpop.f32.mrb[0].mxu0
      %v705 = vadd.f32 %v412, %v704
      %v706 = vpop.f32.mrb[0].mxu0
      %v707 = vpop.f32.mrb[0].mxu0
      %v708 = vadd.f32 %v412, %v707
      %v709 = vpop.f32.mrb[0].mxu0
      %710 = vmatprep.mubr.bf16.mxu0 0
      %711 = vmatmul.mubr.bf16.gmra.mrb[0].mxu0 %v493
      %v712 = vpop.f32.mrb[0].mxu0
      %v713 = vadd.f32 %v412, %v712
      %v714 = vpop.f32.mrb[0].mxu0
      %v715 = vpop.f32.mrb[0].mxu0
      %v716 = vadd.f32 %v412, %v715
      %v717 = vpop.f32.mrb[0].mxu0
      %718 = vdwg.mxu0
      %v719 = vld [vmem:[%s302] sm:$0xf]
      %v720 = vld [vmem:[%s302 + $0x4] sm:$0xf]
      %v721 = vld [vmem:[%s302 + $0x8] sm:$0xf]
      %v722 = vld [vmem:[%s302 + $0xc] sm:$0xf]
      %v723 = vld [vmem:[%s302 + $0x10] sm:$0xf]
      %v724 = vld [vmem:[%s302 + $0x14] sm:$0xf]
      %v725 = vld [vmem:[%s302 + $0x18] sm:$0xf]
      %v726 = vld [vmem:[%s302 + $0x1c] sm:$0xf]
      %v727 = vld [vmem:[%s302 + $0x20] sm:$0xf]
      %v728 = vld [vmem:[%s302 + $0x24] sm:$0xf]
      %v729 = vld [vmem:[%s302 + $0x28] sm:$0xf]
      %v730 = vld [vmem:[%s302 + $0x2c] sm:$0xf]
      %v731 = vld [vmem:[%s302 + $0x30] sm:$0xf]
      %v732 = vld [vmem:[%s302 + $0x34] sm:$0xf]
      %v733 = vld [vmem:[%s302 + $0x38] sm:$0xf]
      %v734 = vld [vmem:[%s302 + $0x3c] sm:$0xf]
      %v735 = vld [vmem:[%s302 + $0x40] sm:$0xf]
      %v736 = vld [vmem:[%s302 + $0x44] sm:$0xf]
      %v737 = vld [vmem:[%s302 + $0x48] sm:$0xf]
      %v738 = vld [vmem:[%s302 + $0x4c] sm:$0xf]
      %v739 = vld [vmem:[%s302 + $0x50] sm:$0xf]
      %v740 = vld [vmem:[%s302 + $0x54] sm:$0xf]
      %v741 = vld [vmem:[%s302 + $0x58] sm:$0xf]
      %v742 = vld [vmem:[%s302 + $0x5c] sm:$0xf]
      %v743 = vld [vmem:[%s302 + $0x60] sm:$0xf]
      %v744 = vld [vmem:[%s302 + $0x64] sm:$0xf]
      %v745 = vld [vmem:[%s302 + $0x68] sm:$0xf]
      %v746 = vld [vmem:[%s302 + $0x6c] sm:$0xf]
      %v747 = vld [vmem:[%s302 + $0x70] sm:$0xf]
      %v748 = vld [vmem:[%s302 + $0x74] sm:$0xf]
      %v749 = vld [vmem:[%s302 + $0x78] sm:$0xf]
      %v750 = vld [vmem:[%s302 + $0x7c] sm:$0xf]
      %v751 = vunpack.c.l.bf16 %v719
      %v752 = vunpack.c.l.bf16 %v720
      %v753 = vunpack.c.l.bf16 %v721
      %v754 = vunpack.c.l.bf16 %v722
      %v755 = vunpack.c.l.bf16 %v723
      %v756 = vunpack.c.l.bf16 %v724
      %v757 = vunpack.c.l.bf16 %v725
      %v758 = vunpack.c.l.bf16 %v726
      %v759 = vunpack.c.l.bf16 %v727
      %v760 = vunpack.c.l.bf16 %v728
      %v761 = vunpack.c.l.bf16 %v729
      %v762 = vunpack.c.l.bf16 %v730
      %v763 = vunpack.c.l.bf16 %v731
      %v764 = vunpack.c.l.bf16 %v732
      %v765 = vunpack.c.l.bf16 %v733
      %v766 = vunpack.c.l.bf16 %v734
      %v767 = vunpack.c.l.bf16 %v735
      %v768 = vunpack.c.l.bf16 %v736
      %v769 = vunpack.c.l.bf16 %v737
      %v770 = vunpack.c.l.bf16 %v738
      %v771 = vunpack.c.l.bf16 %v739
      %v772 = vunpack.c.l.bf16 %v740
      %v773 = vunpack.c.l.bf16 %v741
      %v774 = vunpack.c.l.bf16 %v742
      %v775 = vunpack.c.l.bf16 %v743
      %v776 = vunpack.c.l.bf16 %v744
      %v777 = vunpack.c.l.bf16 %v745
      %v778 = vunpack.c.l.bf16 %v746
      %v779 = vunpack.c.l.bf16 %v747
      %v780 = vunpack.c.l.bf16 %v748
      %v781 = vunpack.c.l.bf16 %v749
      %v782 = vunpack.c.l.bf16 %v750
      %v783 = vadd.f32 %v593, %v751
      %v784 = vadd.f32 %v596, %v752
      %v785 = vadd.f32 %v601, %v753
      %v786 = vadd.f32 %v604, %v754
      %v787 = vadd.f32 %v609, %v755
      %v788 = vadd.f32 %v612, %v756
      %v789 = vadd.f32 %v617, %v757
      %v790 = vadd.f32 %v620, %v758
      %v791 = vadd.f32 %v625, %v759
      %v792 = vadd.f32 %v628, %v760
      %v793 = vadd.f32 %v633, %v761
      %v794 = vadd.f32 %v636, %v762
      %v795 = vadd.f32 %v641, %v763
      %v796 = vadd.f32 %v644, %v764
      %v797 = vadd.f32 %v649, %v765
      %v798 = vadd.f32 %v652, %v766
      %v799 = vadd.f32 %v657, %v767
      %v800 = vadd.f32 %v660, %v768
      %v801 = vadd.f32 %v665, %v769
      %v802 = vadd.f32 %v668, %v770
      %v803 = vadd.f32 %v673, %v771
      %v804 = vadd.f32 %v676, %v772
      %v805 = vadd.f32 %v681, %v773
      %v806 = vadd.f32 %v684, %v774
      %v807 = vadd.f32 %v689, %v775
      %v808 = vadd.f32 %v692, %v776
      %v809 = vadd.f32 %v697, %v777
      %v810 = vadd.f32 %v700, %v778
      %v811 = vadd.f32 %v705, %v779
      %v812 = vadd.f32 %v708, %v780
      %v813 = vadd.f32 %v713, %v781
      %v814 = vadd.f32 %v716, %v782
      %v815 = vpack.c.bf16 %v784, %v783
      %v816 = vpack.c.bf16 %v786, %v785
      %v817 = vpack.c.bf16 %v788, %v787
      %v818 = vpack.c.bf16 %v790, %v789
      %v819 = vpack.c.bf16 %v792, %v791
      %v820 = vpack.c.bf16 %v794, %v793
      %v821 = vpack.c.bf16 %v796, %v795
      %v822 = vpack.c.bf16 %v798, %v797
      %v823 = vpack.c.bf16 %v800, %v799
      %v824 = vpack.c.bf16 %v802, %v801
      %v825 = vpack.c.bf16 %v804, %v803
      %v826 = vpack.c.bf16 %v806, %v805
      %v827 = vpack.c.bf16 %v808, %v807
      %v828 = vpack.c.bf16 %v810, %v809
      %v829 = vpack.c.bf16 %v812, %v811
      %v830 = vpack.c.bf16 %v814, %v813
      %v847 = vunpack.c.l.b16 %v815
      %v848 = vunpack.c.h.b16 %v815
      %v849 = vunpack.c.l.b16 %v816
      %v850 = vunpack.c.h.b16 %v816
      %v851 = vunpack.c.l.b16 %v817
      %v852 = vunpack.c.h.b16 %v817
      %v853 = vunpack.c.l.b16 %v818
      %v854 = vunpack.c.h.b16 %v818
      %v855 = vunpack.c.l.b16 %v819
      %v856 = vunpack.c.h.b16 %v819
      %v857 = vunpack.c.l.b16 %v820
      %v858 = vunpack.c.h.b16 %v820
      %v859 = vunpack.c.l.b16 %v821
      %v860 = vunpack.c.h.b16 %v821
      %v861 = vunpack.c.l.b16 %v822
      %v862 = vunpack.c.h.b16 %v822
      %v863 = vunpack.c.l.b16 %v823
      %v864 = vunpack.c.h.b16 %v823
      %v865 = vunpack.c.l.b16 %v824
      %v866 = vunpack.c.h.b16 %v824
      %v867 = vunpack.c.l.b16 %v825
      %v868 = vunpack.c.h.b16 %v825
      %v869 = vunpack.c.l.b16 %v826
      %v870 = vunpack.c.h.b16 %v826
      %v871 = vunpack.c.l.b16 %v827
      %v872 = vunpack.c.h.b16 %v827
      %v873 = vunpack.c.l.b16 %v828
      %v874 = vunpack.c.h.b16 %v828
      %v875 = vunpack.c.l.b16 %v829
      %v876 = vunpack.c.h.b16 %v829
      %v877 = vunpack.c.l.b16 %v830
      %v878 = vunpack.c.h.b16 %v830
      %v879 = vpack.c.b16 %v847, %v847
      %v880 = vpack.c.b16 %v848, %v848
      %v881 = vpack.c.b16 %v849, %v849
      %v882 = vpack.c.b16 %v850, %v850
      %v883 = vpack.c.b16 %v851, %v851
      %v884 = vpack.c.b16 %v852, %v852
      %v885 = vpack.c.b16 %v853, %v853
      %v886 = vpack.c.b16 %v854, %v854
      %v887 = vpack.c.b16 %v855, %v855
      %v888 = vpack.c.b16 %v856, %v856
      %v889 = vpack.c.b16 %v857, %v857
      %v890 = vpack.c.b16 %v858, %v858
      %v891 = vpack.c.b16 %v859, %v859
      %v892 = vpack.c.b16 %v860, %v860
      %v893 = vpack.c.b16 %v861, %v861
      %v894 = vpack.c.b16 %v862, %v862
      %v895 = vpack.c.b16 %v863, %v863
      %v896 = vpack.c.b16 %v864, %v864
      %v897 = vpack.c.b16 %v865, %v865
      %v898 = vpack.c.b16 %v866, %v866
      %v899 = vpack.c.b16 %v867, %v867
      %v900 = vpack.c.b16 %v868, %v868
      %v901 = vpack.c.b16 %v869, %v869
      %v902 = vpack.c.b16 %v870, %v870
      %v903 = vpack.c.b16 %v871, %v871
      %v904 = vpack.c.b16 %v872, %v872
      %v905 = vpack.c.b16 %v873, %v873
      %v906 = vpack.c.b16 %v874, %v874
      %v907 = vpack.c.b16 %v875, %v875
      %v908 = vpack.c.b16 %v876, %v876
      %v909 = vpack.c.b16 %v877, %v877
      %v910 = vpack.c.b16 %v878, %v878
      %943 = vst [vmem:[%s312] sm:$0xf] %v879
      %944 = vst [vmem:[%s312 + $0x4] sm:$0xf] %v880
      %945 = vst [vmem:[%s312 + $0x8] sm:$0xf] %v881
      %946 = vst [vmem:[%s312 + $0xc] sm:$0xf] %v882
      %947 = vst [vmem:[%s312 + $0x10] sm:$0xf] %v883
      %948 = vst [vmem:[%s312 + $0x14] sm:$0xf] %v884
      %949 = vst [vmem:[%s312 + $0x18] sm:$0xf] %v885
      %950 = vst [vmem:[%s312 + $0x1c] sm:$0xf] %v886
      %951 = vst [vmem:[%s312 + $0x20] sm:$0xf] %v887
      %952 = vst [vmem:[%s312 + $0x24] sm:$0xf] %v888
      %953 = vst [vmem:[%s312 + $0x28] sm:$0xf] %v889
      %954 = vst [vmem:[%s312 + $0x2c] sm:$0xf] %v890
      %955 = vst [vmem:[%s312 + $0x30] sm:$0xf] %v891
      %956 = vst [vmem:[%s312 + $0x34] sm:$0xf] %v892
      %957 = vst [vmem:[%s312 + $0x38] sm:$0xf] %v893
      %958 = vst [vmem:[%s312 + $0x3c] sm:$0xf] %v894
      %959 = vst [vmem:[%s312 + $0x40] sm:$0xf] %v895
      %960 = vst [vmem:[%s312 + $0x44] sm:$0xf] %v896
      %961 = vst [vmem:[%s312 + $0x48] sm:$0xf] %v897
      %962 = vst [vmem:[%s312 + $0x4c] sm:$0xf] %v898
      %963 = vst [vmem:[%s312 + $0x50] sm:$0xf] %v899
      %964 = vst [vmem:[%s312 + $0x54] sm:$0xf] %v900
      %965 = vst [vmem:[%s312 + $0x58] sm:$0xf] %v901
      %966 = vst [vmem:[%s312 + $0x5c] sm:$0xf] %v902
      %967 = vst [vmem:[%s312 + $0x60] sm:$0xf] %v903
      %968 = vst [vmem:[%s312 + $0x64] sm:$0xf] %v904
      %969 = vst [vmem:[%s312 + $0x68] sm:$0xf] %v905
      %970 = vst [vmem:[%s312 + $0x6c] sm:$0xf] %v906
      %971 = vst [vmem:[%s312 + $0x70] sm:$0xf] %v907
      %972 = vst [vmem:[%s312 + $0x74] sm:$0xf] %v908
      %973 = vst [vmem:[%s312 + $0x78] sm:$0xf] %v909
      %974 = vst [vmem:[%s312 + $0x7c] sm:$0xf] %v910
      %s975 = smul.u32 32, %s21
      %p976 = scmp.lt.s32.totalorder %s20, 1
      %s977 = scalar_select %p976, %s20, 1
      %p978 = scmp.lt.s32.totalorder %s975, 31
      %s979 = scalar_select %p978, %s975, 31
      %s980 = smul.addr %s977, 32
      %s981 = sadd.s32 %s979, %s980
      %s982 = smul.addr %s981, 4
      %s983 = scalar_lea.vmem %s5, %s982
      // Predicated region
      $region41: #{mbconv_forward.5} parent=39 // pred_check
        %p984 = pneg %p172
      $region42: #{mbconv_forward.5} parent=39 // pred_check_branch
        %986 = sbr.rel (%p984) target = $region44
      $region43: #{mbconv_forward.5} parent=39 // pred_region
        %s987 = smul.u32 32, %s21
      $region44: #{mbconv_forward.5} parent=39 // pred_fallthru
        _
    $region40: #{mbconv_forward.5} parent=5 // pred_fallthru
      _
    %p988 = scmp.le.s32.totalorder 2, %s11
    // Predicated region
    $region45: #{mbconv_forward.5} parent=5 // pred_check
      %p989 = pneg %p988
    $region46: #{mbconv_forward.5} parent=5 // pred_check_branch
      %991 = sbr.rel (%p989) target = $region48
    $region47: #{mbconv_forward.5} parent=5 // pred_region
      %s992 = ssub.s32 %s11, 2
      // Predicated region
      $region49: #{mbconv_forward.5} parent=47 // pred_check
        %p993 = pneg %p178
      $region50: #{mbconv_forward.5} parent=47 // pred_check_branch
        %995 = sbr.rel (%p993) target = $region52
      $region51: #{mbconv_forward.5} parent=47 // pred_region
        %s996 = smul.u32 32, %s23
        %p997 = scmp.lt.s32.totalorder %s22, 1
        %s998 = scalar_select %p997, %s22, 1
        %p999 = scmp.lt.s32.totalorder %s996, 31
        %s1000 = scalar_select %p999, %s996, 31
        %s1001 = smul.addr %s998, 32
        %s1002 = sadd.s32 %s1000, %s1001
        %s1003 = smul.addr %s1002, 4
        %s1004 = scalar_lea.vmem %s5, %s1003
      $region52: #{mbconv_forward.5} parent=47 // pred_fallthru
        _
    $region48: #{mbconv_forward.5} parent=5 // pred_fallthru
      _
  $region6: #{mbconv_forward.5} parent=0 // loop_footer
    %s15 = sadd.s32 1, %s11
  $region7: #{mbconv_forward.5} parent=0 // loop_footer_branch
    %10 = sbr.rel target = $region3
  $region8: #{mbconv_forward.5} parent=0 // loop_exit
    _

// kernel: mbconv_forward.3
$region0: #{mbconv_forward.3}
  #allocation0 [shape = 'u32[]', space=smem, size = 0x4, offset = 0x4, fixed_abs, tag = 'smem constant byte address 0x4 - core index']
  #allocation1 [shape = 'u32[144,128]{1,0:T(1,128)}', space=vmem, size = 0x12000, scoped, tag = 'internal scratch']
  #allocation2 [shape = 'bf16[10,32,128]{2,1,0:T(16,128)(2,1)}', space=vmem, size = 0x14000, scoped, tag = 'scratch operand']
  %s0 = inlined_call_operand.vmem [shape: bf16[2,18,16,128], index: 0, kind: input, shape index: {}]
  %s1 = inlined_call_operand.vmem [shape: bf16[128,128], index: 1, kind: input, shape index: {}]
  %s2 = inlined_call_operand.vmem [shape: f32[1,128], index: 2, kind: input, shape index: {}]
  %s3 = inlined_call_operand.vmem [shape: f32[9,1,128], index: 3, kind: input, shape index: {}]
  %s4 = inlined_call_operand.vmem [shape: f32[1,128], index: 4, kind: input, shape index: {}]
  %s5 = inlined_call_operand.vmem [shape: bf16[2,16,16,128], index: 5, kind: output, shape index: {0}]
  %s6 = inlined_call_operand.vmem [shape: f32[2,2,1,128], index: 6, kind: output, shape index: {1}]
  %7 = xla_tuple %s5, %s6
  %s8 = sld [smem:[#allocation0]]
  $region73: #{mbconv_forward.3} parent=0
    _
  %s10 = ssub.s32 1, %s8
  %s11 = scalar_select 0, %s10, %s8
  loop: start=0, step=1, limit=6
  $region2: #{mbconv_forward.3} parent=0 // loop_pre_header
    _
  $region3: #{mbconv_forward.3} parent=0 // loop_header
    %s13 = sphi 0, %s17
    %p14 = scmp.ge.s32.totalorder %s13, 6
    %s20 = sphi 0, %s39
    %s21 = sphi 0, %s35
    %s22 = sphi 0, %s31
    %s23 = sphi 0, %s20
    %s24 = sphi 0, %s21
    %s25 = sphi 0, %s22
    %s26 = sphi 0, %s23
    %s27 = sphi 0, %s24
    %s28 = sphi 0, %s25
    %s42 = sphi 0, %s44
    %s45 = sphi 0, %s42
    %s46 = sphi 0, %s45
    %s62 = sphi 0, %s46
    %s66 = sphi 0, %s66
    %s68 = sphi 0, %s66
    %s69 = sphi 0, %s68
    %s83 = sphi 0, %s69
    %s87 = sphi 0, %s87
    %s89 = sphi 0, %s87
    %s90 = sphi 0, %s89
    %s104 = sphi 0, %s90
    %s108 = sphi 0, %s108
    %s110 = sphi 0, %s108
    %s111 = sphi 0, %s110
    %s125 = sphi 0, %s111
    %s129 = sphi 0, %s129
    %s131 = sphi 0, %s129
    %s132 = sphi 0, %s131
    %s146 = sphi 0, %s132
    %s156 = sphi 0, %s158
    %s159 = sphi 0, %s156
    %s160 = sphi 0, %s159
    %s176 = sphi 0, %s160
    %s184 = sphi 0, %s186
    %s187 = sphi 0, %s184
    %s188 = sphi 0, %s187
    %s204 = sphi 0, %s188
  $region4: #{mbconv_forward.3} parent=0 // loop_header_branch
    %16 = sbr.rel (%p14) target = $region8
  $region5: #{mbconv_forward.3} parent=0 // loop_body
    %s18 = ssub.s32 %s13, 1
    %s19 = ssub.s32 %s13, 2
    %s29 = sadd.s32 1, %s22
    %p30 = scmp.ge.s32.totalorder %s29, 1
    %s31 = scalar_select %p30, 0, %s29
    %s32 = sadd.s32 1, %s21
    %s33 = scalar_select %p30, %s32, %s21
    %p34 = scmp.ge.s32.totalorder %s33, 2
    %s35 = scalar_select %p34, 0, %s33
    %s36 = sadd.s32 1, %s20
    %s37 = scalar_select %p34, %s36, %s20
    %p38 = scmp.ge.s32.totalorder %s37, 2
    %s39 = scalar_select %p38, 0, %s37
    %s40 = ssub.s32 %s21, %s35
    %p41 = scmp.eq.s32.totalorder %s40, 0
    %s43 = sadd.s32 %s42, 1
    %s44 = scalar_select %p41, %s42, %s43
    %p47 = pneg %p41
    %p48 = scmp.eq.s32.totalorder %s13, 3
    %p49 = por %p47, %p48
    %p50 = scmp.ne.s32.totalorder %s42, %s45
    %p51 = scmp.eq.s32.totalorder %s13, 0
    %p52 = por %p50, %p51
    %p53 = scmp.ne.s32.totalorder %s42, %s45
    %p54 = scmp.eq.s32.totalorder %s18, 3
    %p55 = por %p53, %p54
    %p56 = scmp.ne.s32.totalorder %s45, %s46
    %p57 = scmp.eq.s32.totalorder %s18, 0
    %p58 = por %p56, %p57
    %p59 = scmp.ne.s32.totalorder %s45, %s46
    %p60 = scmp.eq.s32.totalorder %s19, 3
    %p61 = por %p59, %p60
    %p63 = scmp.ne.s32.totalorder %s46, %s62
    %p64 = scmp.eq.s32.totalorder %s19, 0
    %p65 = por %p63, %p64
    %s67 = sadd.s32 %s66, 1
    %p70 = scmp.eq.s32.totalorder %s13, 3
    %p71 = scmp.ne.s32.totalorder %s66, %s68
    %p72 = scmp.eq.s32.totalorder %s13, 0
    %p73 = por %p71, %p72
    %p74 = scmp.ne.s32.totalorder %s66, %s68
    %p75 = scmp.eq.s32.totalorder %s18, 3
    %p76 = por %p74, %p75
    %p77 = scmp.ne.s32.totalorder %s68, %s69
    %p78 = scmp.eq.s32.totalorder %s18, 0
    %p79 = por %p77, %p78
    %p80 = scmp.ne.s32.totalorder %s68, %s69
    %p81 = scmp.eq.s32.totalorder %s19, 3
    %p82 = por %p80, %p81
    %p84 = scmp.ne.s32.totalorder %s69, %s83
    %p85 = scmp.eq.s32.totalorder %s19, 0
    %p86 = por %p84, %p85
    %s88 = sadd.s32 %s87, 1
    %p91 = scmp.eq.s32.totalorder %s13, 3
    %p92 = scmp.ne.s32.totalorder %s87, %s89
    %p93 = scmp.eq.s32.totalorder %s13, 0
    %p94 = por %p92, %p93
    %p95 = scmp.ne.s32.totalorder %s87, %s89
    %p96 = scmp.eq.s32.totalorder %s18, 3
    %p97 = por %p95, %p96
    %p98 = scmp.ne.s32.totalorder %s89, %s90
    %p99 = scmp.eq.s32.totalorder %s18, 0
    %p100 = por %p98, %p99
    %p101 = scmp.ne.s32.totalorder %s89, %s90
    %p102 = scmp.eq.s32.totalorder %s19, 3
    %p103 = por %p101, %p102
    %p105 = scmp.ne.s32.totalorder %s90, %s104
    %p106 = scmp.eq.s32.totalorder %s19, 0
    %p107 = por %p105, %p106
    %s109 = sadd.s32 %s108, 1
    %p112 = scmp.eq.s32.totalorder %s13, 3
    %p113 = scmp.ne.s32.totalorder %s108, %s110
    %p114 = scmp.eq.s32.totalorder %s13, 0
    %p115 = por %p113, %p114
    %p116 = scmp.ne.s32.totalorder %s108, %s110
    %p117 = scmp.eq.s32.totalorder %s18, 3
    %p118 = por %p116, %p117
    %p119 = scmp.ne.s32.totalorder %s110, %s111
    %p120 = scmp.eq.s32.totalorder %s18, 0
    %p121 = por %p119, %p120
    %p122 = scmp.ne.s32.totalorder %s110, %s111
    %p123 = scmp.eq.s32.totalorder %s19, 3
    %p124 = por %p122, %p123
    %p126 = scmp.ne.s32.totalorder %s111, %s125
    %p127 = scmp.eq.s32.totalorder %s19, 0
    %p128 = por %p126, %p127
    %s130 = sadd.s32 %s129, 1
    %p133 = scmp.eq.s32.totalorder %s13, 3
    %p134 = scmp.ne.s32.totalorder %s129, %s131
    %p135 = scmp.eq.s32.totalorder %s13, 0
    %p136 = por %p134, %p135
    %p137 = scmp.ne.s32.totalorder %s129, %s131
    %p138 = scmp.eq.s32.totalorder %s18, 3
    %p139 = por %p137, %p138
    %p140 = scmp.ne.s32.totalorder %s131, %s132
    %p141 = scmp.eq.s32.totalorder %s18, 0
    %p142 = por %p140, %p141
    %p143 = scmp.ne.s32.totalorder %s131, %s132
    %p144 = scmp.eq.s32.totalorder %s19, 3
    %p145 = por %p143, %p144
    %p147 = scmp.ne.s32.totalorder %s132, %s146
    %p148 = scmp.eq.s32.totalorder %s19, 0
    %p149 = por %p147, %p148
    %s150 = sadd.s32 %s20, %s22
    %s151 = sadd.s32 %s39, %s31
    %s152 = ssub.s32 %s21, %s35
    %s153 = ssub.s32 %s150, %s151
    %s154 = sor.u32 %s152, %s153
    %p155 = scmp.eq.s32.totalorder %s154, 0
    %s157 = sadd.s32 %s156, 1
    %s158 = scalar_select %p155, %s156, %s157
    %p161 = pneg %p155
    %p162 = scmp.eq.s32.totalorder %s13, 3
    %p163 = por %p161, %p162
    %p164 = scmp.ne.s32.totalorder %s156, %s159
    %p165 = scmp.eq.s32.totalorder %s13, 0
    %p166 = por %p164, %p165
    %p167 = scmp.ne.s32.totalorder %s156, %s159
    %p168 = scmp.eq.s32.totalorder %s18, 3
    %p169 = por %p167, %p168
    %p170 = scmp.ne.s32.totalorder %s159, %s160
    %p171 = scmp.eq.s32.totalorder %s18, 0
    %p172 = por %p170, %p171
    %p173 = scmp.ne.s32.totalorder %s159, %s160
    %p174 = scmp.eq.s32.totalorder %s19, 3
    %p175 = por %p173, %p174
    %p177 = scmp.ne.s32.totalorder %s160, %s176
    %p178 = scmp.eq.s32.totalorder %s19, 0
    %p179 = por %p177, %p178
    %s180 = ssub.s32 %s21, %s35
    %s181 = ssub.s32 %s20, %s39
    %s182 = sor.u32 %s180, %s181
    %p183 = scmp.eq.s32.totalorder %s182, 0
    %s185 = sadd.s32 %s184, 1
    %s186 = scalar_select %p183, %s184, %s185
    %p189 = pneg %p183
    %p190 = scmp.eq.s32.totalorder %s13, 3
    %p191 = por %p189, %p190
    %p192 = scmp.ne.s32.totalorder %s184, %s187
    %p193 = scmp.eq.s32.totalorder %s13, 0
    %p194 = por %p192, %p193
    %p195 = scmp.ne.s32.totalorder %s184, %s187
    %p196 = scmp.eq.s32.totalorder %s18, 3
    %p197 = por %p195, %p196
    %p198 = scmp.ne.s32.totalorder %s187, %s188
    %p199 = scmp.eq.s32.totalorder %s18, 0
    %p200 = por %p198, %p199
    %p201 = scmp.ne.s32.totalorder %s187, %s188
    %p202 = scmp.eq.s32.totalorder %s19, 3
    %p203 = por %p201, %p202
    %p205 = scmp.ne.s32.totalorder %s188, %s204
    %p206 = scmp.eq.s32.totalorder %s19, 0
    %p207 = por %p205, %p206
    %p208 = scmp.le.s32.totalorder 1, %s13
    %p209 = scmp.lt.s32.totalorder %s13, 5
    %p210 = pnand %p208, %p209
    %p211 = pneg %p210
    // Predicated region
    $region9: #{mbconv_forward.3} parent=5 // pred_check
      _
    $region10: #{mbconv_forward.3} parent=5 // pred_check_branch
      %213 = sbr.rel (%p210) target = $region12
    $region11: #{mbconv_forward.3} parent=5 // pred_region
      %s214 = ssub.s32 %s13, 1
      // Predicated region
      $region13: #{mbconv_forward.3} parent=11 // pred_check
        %p215 = pneg %p79
      $region14: #{mbconv_forward.3} parent=11 // pred_check_branch
        %217 = sbr.rel (%p215) target = $region16
      $region15: #{mbconv_forward.3} parent=11 // pred_region
        _
      $region16: #{mbconv_forward.3} parent=11 // pred_fallthru
        _
      // Predicated region
      $region17: #{mbconv_forward.3} parent=11 // pred_check
        %p218 = pneg %p100
      $region18: #{mbconv_forward.3} parent=11 // pred_check_branch
        %220 = sbr.rel (%p218) target = $region20
      $region19: #{mbconv_forward.3} parent=11 // pred_region
        _
      $region20: #{mbconv_forward.3} parent=11 // pred_fallthru
        _
      // Predicated region
      $region21: #{mbconv_forward.3} parent=11 // pred_check
        %p221 = pneg %p121
      $region22: #{mbconv_forward.3} parent=11 // pred_check_branch
        %223 = sbr.rel (%p221) target = $region24
      $region23: #{mbconv_forward.3} parent=11 // pred_region
        _
      $region24: #{mbconv_forward.3} parent=11 // pred_fallthru
        _
      // Predicated region
      $region25: #{mbconv_forward.3} parent=11 // pred_check
        %p224 = pneg %p142
      $region26: #{mbconv_forward.3} parent=11 // pred_check_branch
        %226 = sbr.rel (%p224) target = $region28
      $region27: #{mbconv_forward.3} parent=11 // pred_region
        _
      $region28: #{mbconv_forward.3} parent=11 // pred_fallthru
        _
    $region12: #{mbconv_forward.3} parent=5 // pred_fallthru
      _
    %p227 = scmp.lt.s32.totalorder %s13, 4
    // Predicated region
    $region29: #{mbconv_forward.3} parent=5 // pred_check
      %p228 = pneg %p227
    $region30: #{mbconv_forward.3} parent=5 // pred_check_branch
      %230 = sbr.rel (%p228) target = $region32
    $region31: #{mbconv_forward.3} parent=5 // pred_region
      // Predicated region
      $region33: #{mbconv_forward.3} parent=31 // pred_check
        %p231 = pneg %p52
      $region34: #{mbconv_forward.3} parent=31 // pred_check_branch
        %233 = sbr.rel (%p231) target = $region36
      $region35: #{mbconv_forward.3} parent=31 // pred_region
        %p234 = scmp.lt.s32.totalorder %s21, 1
        %s235 = scalar_select %p234, %s21, 1
        %s236 = smul.addr %s235, 36
        %s237 = smul.addr %s236, 4
        %s238 = scalar_lea.vmem %s0, %s237
      $region36: #{mbconv_forward.3} parent=31 // pred_fallthru
        _
    $region32: #{mbconv_forward.3} parent=5 // pred_fallthru
      _
    %p239 = scmp.le.s32.totalorder 1, %s13
    %p240 = scmp.lt.s32.totalorder %s13, 5
    %p241 = pnand %p239, %p240
    %p242 = pneg %p241
    // Predicated region
    $region37: #{mbconv_forward.3} parent=5 // pred_check
      _
    $region38: #{mbconv_forward.3} parent=5 // pred_check_branch
      %244 = sbr.rel (%p241) target = $region40
    $region39: #{mbconv_forward.3} parent=5 // pred_region
      %s245 = ssub.s32 %s13, 1
      %p246 = scmp.lt.s32.totalorder %s24, 1
      %s247 = scalar_select %p246, %s24, 1
      %s248 = smul.addr %s247, 36
      %s249 = smul.addr %s248, 4
      %s250 = scalar_lea.vmem %s0, %s249
      %p251 = pneg %p58
      %p252 = pneg %p55
      %p253 = pneg %p79
      %p254 = pneg %p76
      %p255 = pneg %p100
      %p256 = pneg %p97
      %p257 = pneg %p121
      %p258 = pneg %p118
      %p259 = pneg %p142
      %p260 = pneg %p139
      %p261 = pneg %p172
      %p262 = pneg %p169
      %s263 = sadd.s32 %s23, %s25
      %s264 = smul.u32 8, %s263
      %p265 = scmp.lt.s32.totalorder %s24, 1
      %s266 = scalar_select %p265, %s24, 1
      %p267 = scmp.lt.s32.totalorder %s264, 15
      %s268 = scalar_select %p267, %s264, 15
      %s269 = smul.addr %s268, 2
      %s270 = smul.addr %s266, 32
      %s271 = sadd.s32 %s269, %s270
      %s272 = smul.addr %s271, 4
      %s273 = scalar_lea.vmem %s5, %s272
      %p274 = pneg %p200
      %p275 = pneg %p197
      %p276 = scmp.lt.s32.totalorder %s24, 1
      %s277 = scalar_select %p276, %s24, 1
      %p278 = scmp.lt.s32.totalorder %s23, 1
      %s279 = scalar_select %p278, %s23, 1
      %s280 = smul.addr %s277, 2
      %s281 = sadd.s32 %s279, %s280
      %s282 = scalar_lea.vmem %s6, %s281
      %p283 = scmp.lt.s32.totalorder %s24, 1
      %s284 = scalar_select %p283, %s24, 1
      %s285 = smul.addr %s284, 36
      %s286 = smul.addr %s285, 4
      %s287 = scalar_lea.vmem %s0, %s286
      %s288 = sadd.s32 %s23, %s25
      %s289 = smul.u32 8, %s288
      %p290 = scmp.lt.s32.totalorder %s24, 1
      %s291 = scalar_select %p290, %s24, 1
      %p292 = scmp.lt.s32.totalorder %s289, 15
      %s293 = scalar_select %p292, %s289, 15
      %s294 = smul.addr %s293, 2
      %s295 = smul.addr %s291, 32
      %s296 = sadd.s32 %s294, %s295
      %s297 = smul.addr %s296, 4
      %s298 = scalar_lea.vmem %s5, %s297
      %s299 = sadd.s32 %s23, %s25
      %s300 = smul.u32 8, %s299
      %p301 = scmp.lt.s32.totalorder %s24, 1
      %s302 = scalar_select %p301, %s24, 1
      %p303 = scmp.lt.s32.totalorder %s23, 1
      %s304 = scalar_select %p303, %s23, 1
      %s305 = smul.addr %s302, 2
      %s306 = sadd.s32 %s304, %s305
      %s307 = scalar_lea.vmem %s6, %s306
      %s309 = sadd.s32 %s23, %s25
      %p310 = scmp.eq.s32.totalorder %s25, 0
      // Predicated region
      $region41: #{mbconv_forward.3} parent=39 // pred_check
        %p311 = pneg %p310
      $region42: #{mbconv_forward.3} parent=39 // pred_check_branch
        %313 = sbr.rel (%p311) target = $region44
      $region43: #{mbconv_forward.3} parent=39 // pred_region
        %314 = vst [vmem:[%s307] sm:$0x1] 0.0
        %315 = vst [vmem:[#allocation2] sm:$0xf] 0
        %316 = vst [vmem:[#allocation2 + $0x10] sm:$0xf] 0
        %317 = vst [vmem:[#allocation2 + $0x20] sm:$0xf] 0
        %318 = vst [vmem:[#allocation2 + $0x30] sm:$0xf] 0
        %319 = vst [vmem:[#allocation2 + $0x40] sm:$0xf] 0
        %320 = vst [vmem:[#allocation2 + $0x50] sm:$0xf] 0
        %321 = vst [vmem:[#allocation2 + $0x60] sm:$0xf] 0
        %322 = vst [vmem:[#allocation2 + $0x70] sm:$0xf] 0
        %323 = vst [vmem:[#allocation2 + $0x80] sm:$0xf] 0
        %324 = vst [vmem:[#allocation2 + $0x90] sm:$0xf] 0
        %325 = vst [vmem:[#allocation2 + $0x8] sm:$0xf0] 0
        %326 = vst [vmem:[#allocation2 + $0x18] sm:$0xf0] 0
        %327 = vst [vmem:[#allocation2 + $0x28] sm:$0xf0] 0
        %328 = vst [vmem:[#allocation2 + $0x38] sm:$0xf0] 0
        %329 = vst [vmem:[#allocation2 + $0x48] sm:$0xf0] 0
        %330 = vst [vmem:[#allocation2 + $0x58] sm:$0xf0] 0
        %331 = vst [vmem:[#allocation2 + $0x68] sm:$0xf0] 0
        %332 = vst [vmem:[#allocation2 + $0x78] sm:$0xf0] 0
        %333 = vst [vmem:[#allocation2 + $0x88] sm:$0xf0] 0
        %334 = vst [vmem:[#allocation2 + $0x98] sm:$0xf0] 0
      $region44: #{mbconv_forward.3} parent=39 // pred_fallthru
        _
      %s335 = smul.u32 %s309, 8
      %s336 = smul.u32 %s335, 2
      %s337 = smul.addr %s336, 4
      %s338 = scalar_lea.vmem %s287, %s337
      %v339 = vld [vmem:[%s338] sm:$0xf]
      %v340 = vld [vmem:[%s338 + $0x4] sm:$0xf]
      %v341 = vld [vmem:[%s338 + $0x8] sm:$0xf]
      %v342 = vld [vmem:[%s338 + $0xc] sm:$0xf]
      %v343 = vld [vmem:[%s338 + $0x10] sm:$0xf]
      %v344 = vld [vmem:[%s338 + $0x14] sm:$0xf]
      %v345 = vld [vmem:[%s338 + $0x18] sm:$0xf]
      %v346 = vld [vmem:[%s338 + $0x1c] sm:$0xf]
      %v347 = vld [vmem:[%s338 + $0x20] sm:$0xf]
      %v348 = vld [vmem:[%s338 + $0x24] sm:$0xf]
      %v349 = vld [vmem:[%s338 + $0x28] sm:$0xf]
      %v350 = vld [vmem:[%s338 + $0x2c] sm:$0xf]
      %v351 = vld [vmem:[%s338 + $0x30] sm:$0xf]
      %v352 = vld [vmem:[%s338 + $0x34] sm:$0xf]
      %v353 = vld [vmem:[%s338 + $0x38] sm:$0xf]
      %v354 = vld [vmem:[%s338 + $0x3c] sm:$0xf]
      %v355 = vld [vmem:[%s338 + $0x40] sm:$0xf]
      %v356 = vld [vmem:[%s338 + $0x44] sm:$0xf]
      %v357 = vld [vmem:[%s338 + $0x48] sm:$0xf]
      %v358 = vld [vmem:[%s338 + $0x4c] sm:$0xf]
      %v359 = vld [vmem:[%s1] sm:$0xf]
      %v360 = vld [vmem:[%s1 + $0x4] sm:$0xf]
      %v361 = vld [vmem:[%s1 + $0x8] sm:$0xf]
      %v362 = vld [vmem:[%s1 + $0xc] sm:$0xf]
      %v363 = vld [vmem:[%s1 + $0x10] sm:$0xf]
      %v364 = vld [vmem:[%s1 + $0x14] sm:$0xf]
      %v365 = vld [vmem:[%s1 + $0x18] sm:$0xf]
      %v366 = vld [vmem:[%s1 + $0x1c] sm:$0xf]
      %v367 = vld [vmem:[%s1 + $0x20] sm:$0xf]
      %v368 = vld [vmem:[%s1 + $0x24] sm:$0xf]
      %v369 = vld [vmem:[%s1 + $0x28] sm:$0xf]
      %v370 = vld [vmem:[%s1 + $0x2c] sm:$0xf]
      %v371 = vld [vmem:[%s1 + $0x30] sm:$0xf]
      %v372 = vld [vmem:[%s1 + $0x34] sm:$0xf]
      %v373 = vld [vmem:[%s1 + $0x38] sm:$0xf]
      %v374 = vld [vmem:[%s1 + $0x3c] sm:$0xf]
      %v375 = vld [vmem:[%s2] sm:$0x1]
      %v377 = vlaneseq
      %v378 = vshrl.u32 %v377, 7
      %v379 = vsub.s32 0, %v378
      %v380 = vrot.slane %v375, %v379
      %v402 = vunpack.c.l.b16 %v339
      %v403 = vunpack.c.l.b16 %v340
      %v404 = vunpack.c.l.b16 %v341
      %v405 = vunpack.c.l.b16 %v342
      %v406 = vunpack.c.l.b16 %v343
      %v407 = vunpack.c.l.b16 %v344
      %v408 = vunpack.c.l.b16 %v345
      %v409 = vunpack.c.l.b16 %v346
      %v410 = vunpack.c.l.b16 %v347
      %v411 = vunpack.c.l.b16 %v348
      %v412 = vunpack.c.l.b16 %v349
      %v413 = vunpack.c.l.b16 %v350
      %v414 = vunpack.c.l.b16 %v351
      %v415 = vunpack.c.l.b16 %v352
      %v416 = vunpack.c.l.b16 %v353
      %v417 = vunpack.c.l.b16 %v354
      %v418 = vunpack.c.l.b16 %v355
      %v419 = vunpack.c.l.b16 %v356
      %v420 = vunpack.c.l.b16 %v357
      %v421 = vunpack.c.l.b16 %v358
      %v422 = vpack.c.b16 %v403, %v402
      %v423 = vpack.c.b16 %v405, %v404
      %v424 = vpack.c.b16 %v407, %v406
      %v425 = vpack.c.b16 %v409, %v408
      %v426 = vpack.c.b16 %v411, %v410
      %v427 = vpack.c.b16 %v413, %v412
      %v428 = vpack.c.b16 %v415, %v414
      %v429 = vpack.c.b16 %v417, %v416
      %v430 = vpack.c.b16 %v419, %v418
      %v431 = vpack.c.b16 %v421, %v420
      %v458 = vunpack.c.l.b16 %v359
      %v459 = vunpack.c.l.b16 %v360
      %v460 = vunpack.c.l.b16 %v361
      %v461 = vunpack.c.l.b16 %v362
      %v462 = vunpack.c.l.b16 %v363
      %v463 = vunpack.c.l.b16 %v364
      %v464 = vunpack.c.l.b16 %v365
      %v465 = vunpack.c.l.b16 %v366
      %v466 = vunpack.c.l.b16 %v367
      %v467 = vunpack.c.l.b16 %v368
      %v468 = vunpack.c.l.b16 %v369
      %v469 = vunpack.c.l.b16 %v370
      %v470 = vunpack.c.l.b16 %v371
      %v471 = vunpack.c.l.b16 %v372
      %v472 = vunpack.c.l.b16 %v373
      %v473 = vunpack.c.l.b16 %v374
      %v474 = vpack.c.b16 %v459, %v458
      %v475 = vpack.c.b16 %v461, %v460
      %v476 = vpack.c.b16 %v463, %v462
      %v477 = vpack.c.b16 %v465, %v464
      %v478 = vpack.c.b16 %v467, %v466
      %v479 = vpack.c.b16 %v469, %v468
      %v480 = vpack.c.b16 %v471, %v470
      %v481 = vpack.c.b16 %v473, %v472
      %490 = vmatprep.subr.bf16.mxu0 0
      %491 = vmatpush1.bf16.msra.mxu0 %v474
      %492 = vmatprep.subr.bf16.mxu0 0
      %493 = vmatpush1.bf16.msra.mxu0 %v475
      %494 = vmatprep.subr.bf16.mxu0 0
      %495 = vmatpush1.bf16.msra.mxu0 %v476
      %496 = vmatprep.subr.bf16.mxu0 0
      %497 = vmatpush1.bf16.msra.mxu0 %v477
      %498 = vmatprep.subr.bf16.mxu0 0
      %499 = vmatpush1.bf16.msra.mxu0 %v478
      %500 = vmatprep.subr.bf16.mxu0 0
      %501 = vmatpush1.bf16.msra.mxu0 %v479
      %502 = vmatprep.subr.bf16.mxu0 0
      %503 = vmatpush1.bf16.msra.mxu0 %v480
      %504 = vmatprep.subr.bf16.mxu0 0
      %505 = vmatpush1.bf16.msra.mxu0 %v481
      %506 = vmatprep.subr.bf16.mxu0 0
      %507 = vmatpush1.bf16.msra.mxu0 0
      %508 = vmatprep.subr.bf16.mxu0 0
      %509 = vmatpush1.bf16.msra.mxu0 0
      %510 = vmatprep.subr.bf16.mxu0 0
      %511 = vmatpush1.bf16.msra.mxu0 0
      %512 = vmatprep.subr.bf16.mxu0 0
      %513 = vmatpush1.bf16.msra.mxu0 0
      %514 = vmatprep.subr.bf16.mxu0 0
      %515 = vmatpush1.bf16.msra.mxu0 0
      %516 = vmatprep.subr.bf16.mxu0 0
      %517 = vmatpush1.bf16.msra.mxu0 0
      %518 = vmatprep.subr.bf16.mxu0 0
      %519 = vmatpush1.bf16.msra.mxu0 0
      %520 = vmatprep.subr.bf16.mxu0 0
      %521 = vmatpush1.bf16.msra.mxu0 0
      %522 = vmatprep.mubr.bf16.mxu0 0
      %523 = vmatmul.mubr.bf16.gmra.mrb[0].mxu0 %v422
      %v524 = vpop.f32.mrb[0].mxu0
      %v525 = vadd.f32 %v380, %v524
      %v526 = vpop.f32.mrb[0].mxu0
      %v527 = vpop.f32.mrb[0].mxu0
      %v528 = vadd.f32 %v380, %v527
      %v529 = vpop.f32.mrb[0].mxu0
      %530 = vmatprep.mubr.bf16.mxu0 0
      %531 = vmatmul.mubr.bf16.gmra.mrb[0].mxu0 %v423
      %v532 = vpop.f32.mrb[0].mxu0
      %v533 = vadd.f32 %v380, %v532
      %v534 = vpop.f32.mrb[0].mxu0
      %v535 = vpop.f32.mrb[0].mxu0
      %v536 = vadd.f32 %v380, %v535
      %v537 = vpop.f32.mrb[0].mxu0
      %538 = vmatprep.mubr.bf16.mxu0 0
      %539 = vmatmul.mubr.bf16.gmra.mrb[0].mxu0 %v424
      %v540 = vpop.f32.mrb[0].mxu0
      %v541 = vadd.f32 %v380, %v540
      %v542 = vpop.f32.mrb[0].mxu0
      %v543 = vpop.f32.mrb[0].mxu0
      %v544 = vadd.f32 %v380, %v543
      %v545 = vpop.f32.mrb[0].mxu0
      %546 = vmatprep.mubr.bf16.mxu0 0
      %547 = vmatmul.mubr.bf16.gmra.mrb[0].mxu0 %v425
      %v548 = vpop.f32.mrb[0].mxu0
      %v549 = vadd.f32 %v380, %v548
      %v550 = vpop.f32.mrb[0].mxu0
      %v551 = vpop.f32.mrb[0].mxu0
      %v552 = vadd.f32 %v380, %v551
      %v553 = vpop.f32.mrb[0].mxu0
      %554 = vmatprep.mubr.bf16.mxu0 0
      %555 = vmatmul.mubr.bf16.gmra.mrb[0].mxu0 %v426
      %v556 = vpop.f32.mrb[0].mxu0
      %v557 = vadd.f32 %v380, %v556
      %v558 = vpop.f32.mrb[0].mxu0
      %v559 = vpop.f32.mrb[0].mxu0
      %v560 = vadd.f32 %v380, %v559
      %v561 = vpop.f32.mrb[0].mxu0
      %562 = vmatprep.mubr.bf16.mxu0 0
      %563 = vmatmul.mubr.bf16.gmra.mrb[0].mxu0 %v427
      %v564 = vpop.f32.mrb[0].mxu0
      %v565 = vadd.f32 %v380, %v564
      %v566 = vpop.f32.mrb[0].mxu0
      %v567 = vpop.f32.mrb[0].mxu0
      %v568 = vadd.f32 %v380, %v567
      %v569 = vpop.f32.mrb[0].mxu0
      %570 = vmatprep.mubr.bf16.mxu0 0
      %571 = vmatmul.mubr.bf16.gmra.mrb[0].mxu0 %v428
      %v572 = vpop.f32.mrb[0].mxu0
      %v573 = vadd.f32 %v380, %v572
      %v574 = vpop.f32.mrb[0].mxu0
      %v575 = vpop.f32.mrb[0].mxu0
      %v576 = vadd.f32 %v380, %v575
      %v577 = vpop.f32.mrb[0].mxu0
      %578 = vmatprep.mubr.bf16.mxu0 0
      %579 = vmatmul.mubr.bf16.gmra.mrb[0].mxu0 %v429
      %v580 = vpop.f32.mrb[0].mxu0
      %v581 = vadd.f32 %v380, %v580
      %v582 = vpop.f32.mrb[0].mxu0
      %v583 = vpop.f32.mrb[0].mxu0
      %v584 = vadd.f32 %v380, %v583
      %v585 = vpop.f32.mrb[0].mxu0
      %586 = vmatprep.mubr.bf16.mxu0 0
      %587 = vmatmul.mubr.bf16.gmra.mrb[0].mxu0 %v430
      %v588 = vpop.f32.mrb[0].mxu0
      %v589 = vadd.f32 %v380, %v588
      %v590 = vpop.f32.mrb[0].mxu0
      %v591 = vpop.f32.mrb[0].mxu0
      %v592 = vadd.f32 %v380, %v591
      %v593 = vpop.f32.mrb[0].mxu0
      %594 = vmatprep.mubr.bf16.mxu0 0
      %595 = vmatmul.mubr.bf16.gmra.mrb[0].mxu0 %v431
      %v596 = vpop.f32.mrb[0].mxu0
      %v597 = vadd.f32 %v380, %v596
      %v598 = vpop.f32.mrb[0].mxu0
      %v599 = vpop.f32.mrb[0].mxu0
      %v600 = vadd.f32 %v380, %v599
      %v601 = vpop.f32.mrb[0].mxu0
      %602 = vdwg.mxu0
      %v603 = vxor.u32 %v525, 2147483648
      %v604 = vxor.u32 %v528, 2147483648
      %v605 = vxor.u32 %v533, 2147483648
      %v606 = vxor.u32 %v536, 2147483648
      %v607 = vxor.u32 %v541, 2147483648
      %v608 = vxor.u32 %v544, 2147483648
      %v609 = vxor.u32 %v549, 2147483648
      %v610 = vxor.u32 %v552, 2147483648
      %v611 = vxor.u32 %v557, 2147483648
      %v612 = vxor.u32 %v560, 2147483648
      %v613 = vxor.u32 %v565, 2147483648
      %v614 = vxor.u32 %v568, 2147483648
      %v615 = vxor.u32 %v573, 2147483648
      %v616 = vxor.u32 %v576, 2147483648
      %v617 = vxor.u32 %v581, 2147483648
      %v618 = vxor.u32 %v584, 2147483648
      %v619 = vxor.u32 %v589, 2147483648
      %v620 = vxor.u32 %v592, 2147483648
      %v621 = vxor.u32 %v597, 2147483648
      %v622 = vxor.u32 %v600, 2147483648
      %v623 = vmul.f32 %v603, 1.442695
      %v624 = vpow.pop %v623
      %v625 = vmul.f32 %v604, 1.442695
      %v626 = vpow.pop %v625
      %v627 = vmul.f32 %v605, 1.442695
      %v628 = vpow.pop %v627
      %v629 = vmul.f32 %v606, 1.442695
      %v630 = vpow.pop %v629
      %v631 = vmul.f32 %v607, 1.442695
      %v632 = vpow.pop %v631
      %v633 = vmul.f32 %v608, 1.442695
      %v634 = vpow.pop %v633
      %v635 = vmul.f32 %v609, 1.442695
      %v636 = vpow.pop %v635
      %v637 = vmul.f32 %v610, 1.442695
      %v638 = vpow.pop %v637
      %v639 = vmul.f32 %v611, 1.442695
      %v640 = vpow.pop %v639
      %v641 = vmul.f32 %v612, 1.442695
      %v642 = vpow.pop %v641
      %v643 = vmul.f32 %v613, 1.442695
      %v644 = vpow.pop %v643
      %v645 = vmul.f32 %v614, 1.442695
      %v646 = vpow.pop %v645
      %v647 = vmul.f32 %v615, 1.442695
      %v648 = vpow.pop %v647
      %v649 = vmul.f32 %v616, 1.442695
      %v650 = vpow.pop %v649
      %v651 = vmul.f32 %v617, 1.442695
      %v652 = vpow.pop %v651
      %v653 = vmul.f32 %v618, 1.442695
      %v654 = vpow.pop %v653
      %v655 = vmul.f32 %v619, 1.442695
      %v656 = vpow.pop %v655
      %v657 = vmul.f32 %v620, 1.442695
      %v658 = vpow.pop %v657
      %v659 = vmul.f32 %v621, 1.442695
      %v660 = vpow.pop %v659
      %v661 = vmul.f32 %v622, 1.442695
      %v662 = vpow.pop %v661
      %v663 = vadd.f32 %v624, 1.0
      %v664 = vadd.f32 %v626, 1.0
      %v665 = vadd.f32 %v628, 1.0
      %v666 = vadd.f32 %v630, 1.0
      %v667 = vadd.f32 %v632, 1.0
      %v668 = vadd.f32 %v634, 1.0
      %v669 = vadd.f32 %v636, 1.0
      %v670 = vadd.f32 %v638, 1.0
      %v671 = vadd.f32 %v640, 1.0
      %v672 = vadd.f32 %v642, 1.0
      %v673 = vadd.f32 %v644, 1.0
      %v674 = vadd.f32 %v646, 1.0
      %v675 = vadd.f32 %v648, 1.0
      %v676 = vadd.f32 %v650, 1.0
      %v677 = vadd.f32 %v652, 1.0
      %v678 = vadd.f32 %v654, 1.0
      %v679 = vadd.f32 %v656, 1.0
      %v680 = vadd.f32 %v658, 1.0
      %v681 = vadd.f32 %v660, 1.0
      %v682 = vadd.f32 %v662, 1.0
      %v683 = vrcp.pop %v663
      %v684 = vmul.f32 1.0, %v683
      %v685 = vrcp.pop %v664
      %v686 = vmul.f32 1.0, %v685
      %v687 = vrcp.pop %v665
      %v688 = vmul.f32 1.0, %v687
      %v689 = vrcp.pop %v666
      %v690 = vmul.f32 1.0, %v689
      %v691 = vrcp.pop %v667
      %v692 = vmul.f32 1.0, %v691
      %v693 = vrcp.pop %v668
      %v694 = vmul.f32 1.0, %v693
      %v695 = vrcp.pop %v669
      %v696 = vmul.f32 1.0, %v695
      %v697 = vrcp.pop %v670
      %v698 = vmul.f32 1.0, %v697
      %v699 = vrcp.pop %v671
      %v700 = vmul.f32 1.0, %v699
      %v701 = vrcp.pop %v672
      %v702 = vmul.f32 1.0, %v701
      %v703 = vrcp.pop %v673
      %v704 = vmul.f32 1.0, %v703
      %v705 = vrcp.pop %v674
      %v706 = vmul.f32 1.0, %v705
      %v707 = vrcp.pop %v675
      %v708 = vmul.f32 1.0, %v707
      %v709 = vrcp.pop %v676
      %v710 = vmul.f32 1.0, %v709
      %v711 = vrcp.pop %v677
      %v712 = vmul.f32 1.0, %v711
      %v713 = vrcp.pop %v678
      %v714 = vmul.f32 1.0, %v713
      %v715 = vrcp.pop %v679
      %v716 = vmul.f32 1.0, %v715
      %v717 = vrcp.pop %v680
      %v718 = vmul.f32 1.0, %v717
      %v719 = vrcp.pop %v681
      %v720 = vmul.f32 1.0, %v719
      %v721 = vrcp.pop %v682
      %v722 = vmul.f32 1.0, %v721
      %v723 = vmul.f32 %v525, %v684
      %v724 = vmul.f32 %v528, %v686
      %v725 = vmul.f32 %v533, %v688
      %v726 = vmul.f32 %v536, %v690
      %v727 = vmul.f32 %v541, %v692
      %v728 = vmul.f32 %v544, %v694
      %v729 = vmul.f32 %v549, %v696
      %v730 = vmul.f32 %v552, %v698
      %v731 = vmul.f32 %v557, %v700
      %v732 = vmul.f32 %v560, %v702
      %v733 = vmul.f32 %v565, %v704
      %v734 = vmul.f32 %v568, %v706
      %v735 = vmul.f32 %v573, %v708
      %v736 = vmul.f32 %v576, %v710
      %v737 = vmul.f32 %v581, %v712
      %v738 = vmul.f32 %v584, %v714
      %v739 = vmul.f32 %v589, %v716
      %v740 = vmul.f32 %v592, %v718
      %v741 = vmul.f32 %v597, %v720
      %v742 = vmul.f32 %v600, %v722
      %v743 = vpack.c.bf16 %v724, %v723
      %v744 = vpack.c.bf16 %v726, %v725
      %v745 = vpack.c.bf16 %v728, %v727
      %v746 = vpack.c.bf16 %v730, %v729
      %v747 = vpack.c.bf16 %v732, %v731
      %v748 = vpack.c.bf16 %v734, %v733
      %v749 = vpack.c.bf16 %v736, %v735
      %v750 = vpack.c.bf16 %v738, %v737
      %v751 = vpack.c.bf16 %v740, %v739
      %v752 = vpack.c.bf16 %v742, %v741
      %v763 = vrot.slane %v743, 4
      %v764 = vrot.slane %v744, 4
      %v765 = vrot.slane %v745, 4
      %v766 = vrot.slane %v746, 4
      %v767 = vrot.slane %v747, 4
      %v768 = vrot.slane %v748, 4
      %v769 = vrot.slane %v749, 4
      %v770 = vrot.slane %v750, 4
      %v771 = vrot.slane %v751, 4
      %v772 = vrot.slane %v752, 4
      %783 = vst [vmem:[#allocation2] sm:$0xf0] %v763
      %784 = vst [vmem:[#allocation2 + $0x8] sm:$0xf] %v763
      %785 = vst [vmem:[#allocation2 + $0x10] sm:$0xf0] %v764
      %786 = vst [vmem:[#allocation2 + $0x18] sm:$0xf] %v764
      %787 = vst [vmem:[#allocation2 + $0x20] sm:$0xf0] %v765
      %788 = vst [vmem:[#allocation2 + $0x28] sm:$0xf] %v765
      %789 = vst [vmem:[#allocation2 + $0x30] sm:$0xf0] %v766
      %790 = vst [vmem:[#allocation2 + $0x38] sm:$0xf] %v766
      %791 = vst [vmem:[#allocation2 + $0x40] sm:$0xf0] %v767
      %792 = vst [vmem:[#allocation2 + $0x48] sm:$0xf] %v767
      %793 = vst [vmem:[#allocation2 + $0x50] sm:$0xf0] %v768
      %794 = vst [vmem:[#allocation2 + $0x58] sm:$0xf] %v768
      %795 = vst [vmem:[#allocation2 + $0x60] sm:$0xf0] %v769
      %796 = vst [vmem:[#allocation2 + $0x68] sm:$0xf] %v769
      %797 = vst [vmem:[#allocation2 + $0x70] sm:$0xf0] %v770
      %798 = vst [vmem:[#allocation2 + $0x78] sm:$0xf] %v770
      %799 = vst [vmem:[#allocation2 + $0x80] sm:$0xf0] %v771
      %800 = vst [vmem:[#allocation2 + $0x88] sm:$0xf] %v771
      %801 = vst [vmem:[#allocation2 + $0x90] sm:$0xf0] %v772
      %802 = vst [vmem:[#allocation2 + $0x98] sm:$0xf] %v772
      %p803 = scmp.eq.s32.totalorder %s309, 0
      // Predicated region
      $region45: #{mbconv_forward.3} parent=39 // pred_check
        %p804 = pneg %p803
      $region46: #{mbconv_forward.3} parent=39 // pred_check_branch
        %806 = sbr.rel (%p804) target = $region48
      $region47: #{mbconv_forward.3} parent=39 // pred_region
        %807 = vst [vmem:[#allocation2] sm:$0xf0] 0
        %808 = vst [vmem:[#allocation2 + $0x8] sm:$0xf] 0
      $region48: #{mbconv_forward.3} parent=39 // pred_fallthru
        _
      %p809 = scmp.eq.s32.totalorder %s309, 1
      // Predicated region
      $region49: #{mbconv_forward.3} parent=39 // pred_check
        %p810 = pneg %p809
      $region50: #{mbconv_forward.3} parent=39 // pred_check_branch
        %812 = sbr.rel (%p810) target = $region52
      $region51: #{mbconv_forward.3} parent=39 // pred_region
        %s813 = scalar_lea.vmem [#allocation2], 144
        %814 = vst [vmem:[%s813] sm:$0xf0] 0
        %815 = vst [vmem:[%s813 + $0x8] sm:$0xf] 0
      $region52: #{mbconv_forward.3} parent=39 // pred_fallthru
        _
      %v816 = vld [vmem:[#allocation2] sm:$0xf8]
      %v817 = vld [vmem:[#allocation2 + $0x8] sm:$0xf]
      %v818 = vld [vmem:[#allocation2 + $0x10] sm:$0xf8]
      %v819 = vld [vmem:[#allocation2 + $0x18] sm:$0xf]
      %v820 = vld [vmem:[#allocation2 + $0x20] sm:$0xf8]
      %v821 = vld [vmem:[#allocation2 + $0x28] sm:$0xf]
      %v822 = vld [vmem:[#allocation2 + $0x30] sm:$0xf8]
      %v823 = vld [vmem:[#allocation2 + $0x38] sm:$0xf]
      %v824 = vld [vmem:[#allocation2 + $0x40] sm:$0xf8]
      %v825 = vld [vmem:[#allocation2 + $0x48] sm:$0xf]
      %v826 = vld [vmem:[#allocation2 + $0x50] sm:$0xf8]
      %v827 = vld [vmem:[#allocation2 + $0x58] sm:$0xf]
      %v828 = vld [vmem:[#allocation2 + $0x60] sm:$0xf8]
      %v829 = vld [vmem:[#allocation2 + $0x68] sm:$0xf]
      %v830 = vld [vmem:[#allocation2 + $0x70] sm:$0xf8]
      %v831 = vld [vmem:[#allocation2 + $0x78] sm:$0xf]
      %v832 = vld [vmem:[#allocation2 + $0x80] sm:$0xf8]
      %v833 = vld [vmem:[#allocation2 + $0x88] sm:$0xf]
      %v834 = vld [vmem:[#allocation2 + $0x90] sm:$0xf8]
      %v835 = vld [vmem:[#allocation2 + $0x98] sm:$0xf]
      %v836 = vunpack.c.l.bf16 %v816
      %v837 = vunpack.c.h.bf16 %v816
      %v838 = vunpack.c.l.bf16 %v817
      %v839 = vunpack.c.l.bf16 %v818
      %v840 = vunpack.c.h.bf16 %v818
      %v841 = vunpack.c.l.bf16 %v819
      %v842 = vunpack.c.l.bf16 %v820
      %v843 = vunpack.c.h.bf16 %v820
      %v844 = vunpack.c.l.bf16 %v821
      %v845 = vunpack.c.l.bf16 %v822
      %v846 = vunpack.c.h.bf16 %v822
      %v847 = vunpack.c.l.bf16 %v823
      %v848 = vunpack.c.l.bf16 %v824
      %v849 = vunpack.c.h.bf16 %v824
      %v850 = vunpack.c.l.bf16 %v825
      %v851 = vunpack.c.l.bf16 %v826
      %v852 = vunpack.c.h.bf16 %v826
      %v853 = vunpack.c.l.bf16 %v827
      %v854 = vunpack.c.l.bf16 %v828
      %v855 = vunpack.c.h.bf16 %v828
      %v856 = vunpack.c.l.bf16 %v829
      %v857 = vunpack.c.l.bf16 %v830
      %v858 = vunpack.c.h.bf16 %v830
      %v859 = vunpack.c.l.bf16 %v831
      %v860 = vunpack.c.l.bf16 %v832
      %v861 = vunpack.c.h.bf16 %v832
      %v862 = vunpack.c.l.bf16 %v833
      %v863 = vunpack.c.l.bf16 %v834
      %v864 = vunpack.c.h.bf16 %v834
      %v865 = vunpack.c.l.bf16 %v835
      %v866 = vld [vmem:[%s3] sm:$0x1]
      %v868 = vlaneseq
      %v869 = vshrl.u32 %v868, 7
      %v870 = vsub.s32 0, %v869
      %v871 = vrot.slane %v866, %v870
      %v873 = vmul.f32 %v836, %v871
      %v874 = vmul.f32 %v837, %v871
      %v875 = vmul.f32 %v838, %v871
      %v876 = vmul.f32 %v839, %v871
      %v877 = vmul.f32 %v840, %v871
      %v878 = vmul.f32 %v841, %v871
      %v879 = vmul.f32 %v842, %v871
      %v880 = vmul.f32 %v843, %v871
      %v881 = vmul.f32 %v844, %v871
      %v882 = vmul.f32 %v845, %v871
      %v883 = vmul.f32 %v846, %v871
      %v884 = vmul.f32 %v847, %v871
      %v885 = vmul.f32 %v848, %v871
      %v886 = vmul.f32 %v849, %v871
      %v887 = vmul.f32 %v850, %v871
      %v888 = vmul.f32 %v851, %v871
      %v889 = vmul.f32 %v852, %v871
      %v890 = vmul.f32 %v853, %v871
      %v891 = vmul.f32 %v854, %v871
      %v892 = vmul.f32 %v855, %v871
      %v893 = vmul.f32 %v856, %v871
      %v894 = vmul.f32 %v857, %v871
      %v895 = vmul.f32 %v858, %v871
      %v896 = vmul.f32 %v859, %v871
      %v897 = vadd.f32 %v873, 0.0
      %v898 = vadd.f32 %v874, 0.0
      %v899 = vadd.f32 %v875, 0.0
      %v900 = vadd.f32 %v876, 0.0
      %v901 = vadd.f32 %v877, 0.0
      %v902 = vadd.f32 %v878, 0.0
      %v903 = vadd.f32 %v879, 0.0
      %v904 = vadd.f32 %v880, 0.0
      %v905 = vadd.f32 %v881, 0.0
      %v906 = vadd.f32 %v882, 0.0
      %v907 = vadd.f32 %v883, 0.0
      %v908 = vadd.f32 %v884, 0.0
      %v909 = vadd.f32 %v885, 0.0
      %v910 = vadd.f32 %v886, 0.0
      %v911 = vadd.f32 %v887, 0.0
      %v912 = vadd.f32 %v888, 0.0
      %v913 = vadd.f32 %v889, 0.0
      %v914 = vadd.f32 %v890, 0.0
      %v915 = vadd.f32 %v891, 0.0
      %v916 = vadd.f32 %v892, 0.0
      %v917 = vadd.f32 %v893, 0.0
      %v918 = vadd.f32 %v894, 0.0
      %v919 = vadd.f32 %v895, 0.0
      %v920 = vadd.f32 %v896, 0.0
      %s921 = scalar_lea.vmem %s3, 3
      %v922 = vld [vmem:[%s921] sm:$0x1]
      %v924 = vlaneseq
      %v925 = vshrl.u32 %v924, 7
      %v926 = vsub.s32 0, %v925
      %v927 = vrot.slane %v922, %v926
      %v929 = vmul.f32 %v839, %v927
      %v930 = vmul.f32 %v840, %v927
      %v931 = vmul.f32 %v841, %v927
      %v932 = vmul.f32 %v842, %v927
      %v933 = vmul.f32 %v843, %v927
      %v934 = vmul.f32 %v844, %v927
      %v935 = vmul.f32 %v845, %v927
      %v936 = vmul.f32 %v846, %v927
      %v937 = vmul.f32 %v847, %v927
      %v938 = vmul.f32 %v848, %v927
      %v939 = vmul.f32 %v849, %v927
      %v940 = vmul.f32 %v850, %v927
      %v941 = vmul.f32 %v851, %v927
      %v942 = vmul.f32 %v852, %v927
      %v943 = vmul.f32 %v853, %v927
      %v944 = vmul.f32 %v854, %v927
      %v945 = vmul.f32 %v855, %v927
      %v946 = vmul.f32 %v856, %v927
      %v947 = vmul.f32 %v857, %v927
      %v948 = vmul.f32 %v858, %v927
      %v949 = vmul.f32 %v859, %v927
      %v950 = vmul.f32 %v860, %v927
      %v951 = vmul.f32 %v861, %v927
      %v952 = vmul.f32 %v862, %v927
      %v953 = vadd.f32 %v897, %v929
      %v954 = vadd.f32 %v898, %v930
      %v955 = vadd.f32 %v899, %v931
      %v956 = vadd.f32 %v900, %v932
      %v957 = vadd.f32 %v901, %v933
      %v958 = vadd.f32 %v902, %v934
      %v959 = vadd.f32 %v903, %v935
      %v960 = vadd.f32 %v904, %v936
      %v961 = vadd.f32 %v905, %v937
      %v962 = vadd.f32 %v906, %v938
      %v963 = vadd.f32 %v907, %v939
      %v964 = vadd.f32 %v908, %v940
      %v965 = vadd.f32 %v909, %v941
      %v966 = vadd.f32 %v910, %v942
      %v967 = vadd.f32 %v911, %v943
      %v968 = vadd.f32 %v912, %v944
      %v969 = vadd.f32 %v913, %v945
      %v970 = vadd.f32 %v914, %v946
      %v971 = vadd.f32 %v915, %v947
      %v972 = vadd.f32 %v916, %v948
      %v973 = vadd.f32 %v917, %v949
      %v974 = vadd.f32 %v918, %v950
      %v975 = vadd.f32 %v919, %v951
      %v976 = vadd.f32 %v920, %v952
      %s977 = scalar_lea.vmem %s3, 6
      %v978 = vld [vmem:[%s977] sm:$0x1]
      %v980 = vlaneseq
      %v981 = vshrl.u32 %v980, 7
      %v982 = vsub.s32 0, %v981
      %v983 = vrot.slane %v978, %v982
      %v985 = vmul.f32 %v842, %v983
      %v986 = vmul.f32 %v843, %v983
      %v987 = vmul.f32 %v844, %v983
      %v988 = vmul.f32 %v845, %v983
      %v989 = vmul.f32 %v846, %v983
      %v990 = vmul.f32 %v847, %v983
      %v991 = vmul.f32 %v848, %v983
      %v992 = vmul.f32 %v849, %v983
      %v993 = vmul.f32 %v850, %v983
      %v994 = vmul.f32 %v851, %v983
      %v995 = vmul.f32 %v852, %v983
      %v996 = vmul.f32 %v853, %v983
      %v997 = vmul.f32 %v854, %v983
      %v998 = vmul.f32 %v855, %v983
      %v999 = vmul.f32 %v856, %v983
      %v1000 = vmul.f32 %v857, %v983
      %v1001 = vmul.f32 %v858, %v983
      %v1002 = vmul.f32 %v859, %v983
      %v1003 = vmul.f32 %v860, %v983
      %v1004 = vmul.f32 %v861, %v983
      %v1005 = vmul.f32 %v862, %v983
      %v1006 = vmul.f32 %v863, %v983
      %v1007 = vmul.f32 %v864, %v983
      %v1008 = vmul.f32 %v865, %v983
      %v1009 = vadd.f32 %v953, %v985
      %v1010 = vadd.f32 %v954, %v986
      %v1011 = vadd.f32 %v955, %v987
      %v1012 = vadd.f32 %v956, %v988
      %v1013 = vadd.f32 %v957, %v989
      %v1014 = vadd.f32 %v958, %v990
      %v1015 = vadd.f32 %v959, %v991
      %v1016 = vadd.f32 %v960, %v992
      %v1017 = vadd.f32 %v961, %v993
      %v1018 = vadd.f32 %v962, %v994
      %v1019 = vadd.f32 %v963, %v995
      %v1020 = vadd.f32 %v964, %v996
      %v1021 = vadd.f32 %v965, %v997
      %v1022 = vadd.f32 %v966, %v998
      %v1023 = vadd.f32 %v967, %v999
      %v1024 = vadd.f32 %v968, %v1000
      %v1025 = vadd.f32 %v969, %v1001
      %v1026 = vadd.f32 %v970, %v1002
      %v1027 = vadd.f32 %v971, %v1003
      %v1028 = vadd.f32 %v972, %v1004
      %v1029 = vadd.f32 %v973, %v1005
      %v1030 = vadd.f32 %v974, %v1006
      %v1031 = vadd.f32 %v975, %v1007
      %v1032 = vadd.f32 %v976, %v1008
      %v1033 = vld [vmem:[#allocation2] sm:$0xf0]
      %v1034 = vld [vmem:[#allocation2 + $0x10] sm:$0xf0]
      %v1035 = vld [vmem:[#allocation2 + $0x20] sm:$0xf0]
      %v1036 = vld [vmem:[#allocation2 + $0x30] sm:$0xf0]
      %v1037 = vld [vmem:[#allocation2 + $0x40] sm:$0xf0]
      %v1038 = vld [vmem:[#allocation2 + $0x50] sm:$0xf0]
      %v1039 = vld [vmem:[#allocation2 + $0x60] sm:$0xf0]
      %v1040 = vld [vmem:[#allocation2 + $0x70] sm:$0xf0]
      %v1041 = vld [vmem:[#allocation2 + $0x80] sm:$0xf0]
      %v1042 = vld [vmem:[#allocation2 + $0x90] sm:$0xf0]
      %vm1063 = vcmask 1043456
      %v1064 = vrot.slane %v1033, 4
      %v1065 = vrot.slane %v817, 4
      %v1066 = vsel %vm1063, %v1064, %v1065
      %v1067 = vrot.slane %v1034, 4
      %v1068 = vrot.slane %v819, 4
      %v1069 = vsel %vm1063, %v1067, %v1068
      %v1070 = vrot.slane %v1035, 4
      %v1071 = vrot.slane %v821, 4
      %v1072 = vsel %vm1063, %v1070, %v1071
      %v1073 = vrot.slane %v1036, 4
      %v1074 = vrot.slane %v823, 4
      %v1075 = vsel %vm1063, %v1073, %v1074
      %v1076 = vrot.slane %v1037, 4
      %v1077 = vrot.slane %v825, 4
      %v1078 = vsel %vm1063, %v1076, %v1077
      %v1079 = vrot.slane %v1038, 4
      %v1080 = vrot.slane %v827, 4
      %v1081 = vsel %vm1063, %v1079, %v1080
      %v1082 = vrot.slane %v1039, 4
      %v1083 = vrot.slane %v829, 4
      %v1084 = vsel %vm1063, %v1082, %v1083
      %v1085 = vrot.slane %v1040, 4
      %v1086 = vrot.slane %v831, 4
      %v1087 = vsel %vm1063, %v1085, %v1086
      %v1088 = vrot.slane %v1041, 4
      %v1089 = vrot.slane %v833, 4
      %v1090 = vsel %vm1063, %v1088, %v1089
      %v1091 = vrot.slane %v1042, 4
      %v1092 = vrot.slane %v835, 4
      %v1093 = vsel %vm1063, %v1091, %v1092
      %v1104 = vunpack.c.l.bf16 %v1066
      %v1105 = vunpack.c.h.bf16 %v1066
      %v1106 = vunpack.c.l.bf16 %v1069
      %v1107 = vunpack.c.h.bf16 %v1069
      %v1108 = vunpack.c.l.bf16 %v1072
      %v1109 = vunpack.c.h.bf16 %v1072
      %v1110 = vunpack.c.l.bf16 %v1075
      %v1111 = vunpack.c.h.bf16 %v1075
      %v1112 = vunpack.c.l.bf16 %v1078
      %v1113 = vunpack.c.h.bf16 %v1078
      %v1114 = vunpack.c.l.bf16 %v1081
      %v1115 = vunpack.c.h.bf16 %v1081
      %v1116 = vunpack.c.l.bf16 %v1084
      %v1117 = vunpack.c.h.bf16 %v1084
      %v1118 = vunpack.c.l.bf16 %v1087
      %v1119 = vunpack.c.h.bf16 %v1087
      %v1120 = vunpack.c.l.bf16 %v1090
      %v1121 = vunpack.c.h.bf16 %v1090
      %v1122 = vunpack.c.l.bf16 %v1093
      %v1123 = vunpack.c.h.bf16 %v1093
      %s1124 = scalar_lea.vmem %s3, 1
      %v1125 = vld [vmem:[%s1124] sm:$0x1]
      %v1127 = vlaneseq
      %v1128 = vshrl.u32 %v1127, 7
      %v1129 = vsub.s32 0, %v1128
      %v1130 = vrot.slane %v1125, %v1129
      %v1132 = vmul.f32 %v1104, %v1130
      %v1133 = vmul.f32 %v1105, %v1130
      %v1134 = vmul.f32 %v1106, %v1130
      %v1135 = vmul.f32 %v1107, %v1130
      %v1136 = vmul.f32 %v1108, %v1130
      %v1137 = vmul.f32 %v1109, %v1130
      %v1138 = vmul.f32 %v1110, %v1130
      %v1139 = vmul.f32 %v1111, %v1130
      %v1140 = vmul.f32 %v1112, %v1130
      %v1141 = vmul.f32 %v1113, %v1130
      %v1142 = vmul.f32 %v1114, %v1130
      %v1143 = vmul.f32 %v1115, %v1130
      %v1144 = vmul.f32 %v1116, %v1130
      %v1145 = vmul.f32 %v1117, %v1130
      %v1146 = vmul.f32 %v1118, %v1130
      %v1147 = vmul.f32 %v1119, %v1130
      %vm1164 = vcmask 1046528
      %v1165 = vrot.slane %v1132, 1
      %v1166 = vrot.slane %v1133, 1
      %v1167 = vsel %vm1164, %v1165, %v1166
      %v1168 = vrot.slane %v1134, 1
      %v1169 = vrot.slane %v1135, 1
      %v1170 = vsel %vm1164, %v1168, %v1169
      %v1171 = vrot.slane %v1136, 1
      %v1172 = vrot.slane %v1137, 1
      %v1173 = vsel %vm1164, %v1171, %v1172
      %v1174 = vrot.slane %v1138, 1
      %v1175 = vrot.slane %v1139, 1
      %v1176 = vsel %vm1164, %v1174, %v1175
      %v1177 = vrot.slane %v1140, 1
      %v1178 = vrot.slane %v1141, 1
      %v1179 = vsel %vm1164, %v1177, %v1178
      %v1180 = vrot.slane %v1142, 1
      %v1181 = vrot.slane %v1143, 1
      %v1182 = vsel %vm1164, %v1180, %v1181
      %v1183 = vrot.slane %v1144, 1
      %v1184 = vrot.slane %v1145, 1
      %v1185 = vsel %vm1164, %v1183, %v1184
      %v1186 = vrot.slane %v1146, 1
      %v1187 = vrot.slane %v1147, 1
      %v1188 = vsel %vm1164, %v1186, %v1187
      %v1213 = vadd.f32 %v1009, %v1165
      %v1214 = vadd.f32 %v1010, %v1167
      %v1215 = vadd.f32 %v1011, %v1166
      %v1216 = vadd.f32 %v1012, %v1168
      %v1217 = vadd.f32 %v1013, %v1170
      %v1218 = vadd.f32 %v1014, %v1169
      %v1219 = vadd.f32 %v1015, %v1171
      %v1220 = vadd.f32 %v1016, %v1173
      %v1221 = vadd.f32 %v1017, %v1172
      %v1222 = vadd.f32 %v1018, %v1174
      %v1223 = vadd.f32 %v1019, %v1176
      %v1224 = vadd.f32 %v1020, %v1175
      %v1225 = vadd.f32 %v1021, %v1177
      %v1226 = vadd.f32 %v1022, %v1179
      %v1227 = vadd.f32 %v1023, %v1178
      %v1228 = vadd.f32 %v1024, %v1180
      %v1229 = vadd.f32 %v1025, %v1182
      %v1230 = vadd.f32 %v1026, %v1181
      %v1231 = vadd.f32 %v1027, %v1183
      %v1232 = vadd.f32 %v1028, %v1185
      %v1233 = vadd.f32 %v1029, %v1184
      %v1234 = vadd.f32 %v1030, %v1186
      %v1235 = vadd.f32 %v1031, %v1188
      %v1236 = vadd.f32 %v1032, %v1187
      %s1237 = scalar_lea.vmem %s3, 4
      %v1238 = vld [vmem:[%s1237] sm:$0x1]
      %v1240 = vlaneseq
      %v1241 = vshrl.u32 %v1240, 7
      %v1242 = vsub.s32 0, %v1241
      %v1243 = vrot.slane %v1238, %v1242
      %v1245 = vmul.f32 %v1106, %v1243
      %v1246 = vmul.f32 %v1107, %v1243
      %v1247 = vmul.f32 %v1108, %v1243
      %v1248 = vmul.f32 %v1109, %v1243
      %v1249 = vmul.f32 %v1110, %v1243
      %v1250 = vmul.f32 %v1111, %v1243
      %v1251 = vmul.f32 %v1112, %v1243
      %v1252 = vmul.f32 %v1113, %v1243
      %v1253 = vmul.f32 %v1114, %v1243
      %v1254 = vmul.f32 %v1115, %v1243
      %v1255 = vmul.f32 %v1116, %v1243
      %v1256 = vmul.f32 %v1117, %v1243
      %v1257 = vmul.f32 %v1118, %v1243
      %v1258 = vmul.f32 %v1119, %v1243
      %v1259 = vmul.f32 %v1120, %v1243
      %v1260 = vmul.f32 %v1121, %v1243
      %v1277 = vrot.slane %v1245, 1
      %v1278 = vrot.slane %v1246, 1
      %v1279 = vsel %vm1164, %v1277, %v1278
      %v1280 = vrot.slane %v1247, 1
      %v1281 = vrot.slane %v1248, 1
      %v1282 = vsel %vm1164, %v1280, %v1281
      %v1283 = vrot.slane %v1249, 1
      %v1284 = vrot.slane %v1250, 1
      %v1285 = vsel %vm1164, %v1283, %v1284
      %v1286 = vrot.slane %v1251, 1
      %v1287 = vrot.slane %v1252, 1
      %v1288 = vsel %vm1164, %v1286, %v1287
      %v1289 = vrot.slane %v1253, 1
      %v1290 = vrot.slane %v1254, 1
      %v1291 = vsel %vm1164, %v1289, %v1290
      %v1292 = vrot.slane %v1255, 1
      %v1293 = vrot.slane %v1256, 1
      %v1294 = vsel %vm1164, %v1292, %v1293
      %v1295 = vrot.slane %v1257, 1
      %v1296 = vrot.slane %v1258, 1
      %v1297 = vsel %vm1164, %v1295, %v1296
      %v1298 = vrot.slane %v1259, 1
      %v1299 = vrot.slane %v1260, 1
      %v1300 = vsel %vm1164, %v1298, %v1299
      %v1325 = vadd.f32 %v1213, %v1277
      %v1326 = vadd.f32 %v1214, %v1279
      %v1327 = vadd.f32 %v1215, %v1278
      %v1328 = vadd.f32 %v1216, %v1280
      %v1329 = vadd.f32 %v1217, %v1282
      %v1330 = vadd.f32 %v1218, %v1281
      %v1331 = vadd.f32 %v1219, %v1283
      %v1332 = vadd.f32 %v1220, %v1285
      %v1333 = vadd.f32 %v1221, %v1284
      %v1334 = vadd.f32 %v1222, %v1286
      %v1335 = vadd.f32 %v1223, %v1288
      %v1336 = vadd.f32 %v1224, %v1287
      %v1337 = vadd.f32 %v1225, %v1289
      %v1338 = vadd.f32 %v1226, %v1291
      %v1339 = vadd.f32 %v1227, %v1290
      %v1340 = vadd.f32 %v1228, %v1292
      %v1341 = vadd.f32 %v1229, %v1294
      %v1342 = vadd.f32 %v1230, %v1293
      %v1343 = vadd.f32 %v1231, %v1295
      %v1344 = vadd.f32 %v1232, %v1297
      %v1345 = vadd.f32 %v1233, %v1296
      %v1346 = vadd.f32 %v1234, %v1298
      %v1347 = vadd.f32 %v1235, %v1300
      %v1348 = vadd.f32 %v1236, %v1299
      %s1349 = scalar_lea.vmem %s3, 7
      %v1350 = vld [vmem:[%s1349] sm:$0x1]
      %v1352 = vlaneseq
      %v1353 = vshrl.u32 %v1352, 7
      %v1354 = vsub.s32 0, %v1353
      %v1355 = vrot.slane %v1350, %v1354
      %v1357 = vmul.f32 %v1108, %v1355
      %v1358 = vmul.f32 %v1109, %v1355
      %v1359 = vmul.f32 %v1110, %v1355
      %v1360 = vmul.f32 %v1111, %v1355
      %v1361 = vmul.f32 %v1112, %v1355
      %v1362 = vmul.f32 %v1113, %v1355
      %v1363 = vmul.f32 %v1114, %v1355
      %v1364 = vmul.f32 %v1115, %v1355
      %v1365 = vmul.f32 %v1116, %v1355
      %v1366 = vmul.f32 %v1117, %v1355
      %v1367 = vmul.f32 %v1118, %v1355
      %v1368 = vmul.f32 %v1119, %v1355
      %v1369 = vmul.f32 %v1120, %v1355
      %v1370 = vmul.f32 %v1121, %v1355
      %v1371 = vmul.f32 %v1122, %v1355
      %v1372 = vmul.f32 %v1123, %v1355
      %v1389 = vrot.slane %v1357, 1
      %v1390 = vrot.slane %v1358, 1
      %v1391 = vsel %vm1164, %v1389, %v1390
      %v1392 = vrot.slane %v1359, 1
      %v1393 = vrot.slane %v1360, 1
      %v1394 = vsel %vm1164, %v1392, %v1393
      %v1395 = vrot.slane %v1361, 1
      %v1396 = vrot.slane %v1362, 1
      %v1397 = vsel %vm1164, %v1395, %v1396
      %v1398 = vrot.slane %v1363, 1
      %v1399 = vrot.slane %v1364, 1
      %v1400 = vsel %vm1164, %v1398, %v1399
      %v1401 = vrot.slane %v1365, 1
      %v1402 = vrot.slane %v1366, 1
      %v1403 = vsel %vm1164, %v1401, %v1402
      %v1404 = vrot.slane %v1367, 1
      %v1405 = vrot.slane %v1368, 1
      %v1406 = vsel %vm1164, %v1404, %v1405
      %v1407 = vrot.slane %v1369, 1
      %v1408 = vrot.slane %v1370, 1
      %v1409 = vsel %vm1164, %v1407, %v1408
      %v1410 = vrot.slane %v1371, 1
      %v1411 = vrot.slane %v1372, 1
      %v1412 = vsel %vm1164, %v1410, %v1411
      %v1437 = vadd.f32 %v1325, %v1389
      %v1438 = vadd.f32 %v1326, %v1391
      %v1439 = vadd.f32 %v1327, %v1390
      %v1440 = vadd.f32 %v1328, %v1392
      %v1441 = vadd.f32 %v1329, %v1394
      %v1442 = vadd.f32 %v1330, %v1393
      %v1443 = vadd.f32 %v1331, %v1395
      %v1444 = vadd.f32 %v1332, %v1397
      %v1445 = vadd.f32 %v1333, %v1396
      %v1446 = vadd.f32 %v1334, %v1398
      %v1447 = vadd.f32 %v1335, %v1400
      %v1448 = vadd.f32 %v1336, %v1399
      %v1449 = vadd.f32 %v1337, %v1401
      %v1450 = vadd.f32 %v1338, %v1403
      %v1451 = vadd.f32 %v1339, %v1402
      %v1452 = vadd.f32 %v1340, %v1404
      %v1453 = vadd.f32 %v1341, %v1406
      %v1454 = vadd.f32 %v1342, %v1405
      %v1455 = vadd.f32 %v1343, %v1407
      %v1456 = vadd.f32 %v1344, %v1409
      %v1457 = vadd.f32 %v1345, %v1408
      %v1458 = vadd.f32 %v1346, %v1410
      %v1459 = vadd.f32 %v1347, %v1412
      %v1460 = vadd.f32 %v1348, %v1411
      %v1461 = vld [vmem:[#allocation2 + $0x8] sm:$0x1f]
      %v1462 = vld [vmem:[#allocation2 + $0x18] sm:$0x1f]
      %v1463 = vld [vmem:[#allocation2 + $0x28] sm:$0x1f]
      %v1464 = vld [vmem:[#allocation2 + $0x38] sm:$0x1f]
      %v1465 = vld [vmem:[#allocation2 + $0x48] sm:$0x1f]
      %v1466 = vld [vmem:[#allocation2 + $0x58] sm:$0x1f]
      %v1467 = vld [vmem:[#allocation2 + $0x68] sm:$0x1f]
      %v1468 = vld [vmem:[#allocation2 + $0x78] sm:$0x1f]
      %v1469 = vld [vmem:[#allocation2 + $0x88] sm:$0x1f]
      %v1470 = vld [vmem:[#allocation2 + $0x98] sm:$0x1f]
      %v1481 = vrot.slane %v1461, 4
      %v1482 = vsel %vm1063, %v1064, %v1481
      %v1483 = vrot.slane %v1462, 4
      %v1484 = vsel %vm1063, %v1067, %v1483
      %v1485 = vrot.slane %v1463, 4
      %v1486 = vsel %vm1063, %v1070, %v1485
      %v1487 = vrot.slane %v1464, 4
      %v1488 = vsel %vm1063, %v1073, %v1487
      %v1489 = vrot.slane %v1465, 4
      %v1490 = vsel %vm1063, %v1076, %v1489
      %v1491 = vrot.slane %v1466, 4
      %v1492 = vsel %vm1063, %v1079, %v1491
      %v1493 = vrot.slane %v1467, 4
      %v1494 = vsel %vm1063, %v1082, %v1493
      %v1495 = vrot.slane %v1468, 4
      %v1496 = vsel %vm1063, %v1085, %v1495
      %v1497 = vrot.slane %v1469, 4
      %v1498 = vsel %vm1063, %v1088, %v1497
      %v1499 = vrot.slane %v1470, 4
      %v1500 = vsel %vm1063, %v1091, %v1499
      %v1521 = vunpack.c.l.bf16 %v1482
      %v1522 = vunpack.c.h.bf16 %v1482
      %v1523 = vunpack.c.l.bf16 %v1481
      %v1524 = vunpack.c.l.bf16 %v1484
      %v1525 = vunpack.c.h.bf16 %v1484
      %v1526 = vunpack.c.l.bf16 %v1483
      %v1527 = vunpack.c.l.bf16 %v1486
      %v1528 = vunpack.c.h.bf16 %v1486
      %v1529 = vunpack.c.l.bf16 %v1485
      %v1530 = vunpack.c.l.bf16 %v1488
      %v1531 = vunpack.c.h.bf16 %v1488
      %v1532 = vunpack.c.l.bf16 %v1487
      %v1533 = vunpack.c.l.bf16 %v1490
      %v1534 = vunpack.c.h.bf16 %v1490
      %v1535 = vunpack.c.l.bf16 %v1489
      %v1536 = vunpack.c.l.bf16 %v1492
      %v1537 = vunpack.c.h.bf16 %v1492
      %v1538 = vunpack.c.l.bf16 %v1491
      %v1539 = vunpack.c.l.bf16 %v1494
      %v1540 = vunpack.c.h.bf16 %v1494
      %v1541 = vunpack.c.l.bf16 %v1493
      %v1542 = vunpack.c.l.bf16 %v1496
      %v1543 = vunpack.c.h.bf16 %v1496
      %v1544 = vunpack.c.l.bf16 %v1495
      %v1545 = vunpack.c.l.bf16 %v1498
      %v1546 = vunpack.c.h.bf16 %v1498
      %v1547 = vunpack.c.l.bf16 %v1497
      %v1548 = vunpack.c.l.bf16 %v1500
      %v1549 = vunpack.c.h.bf16 %v1500
      %v1550 = vunpack.c.l.bf16 %v1499
      %s1551 = scalar_lea.vmem %s3, 2
      %v1552 = vld [vmem:[%s1551] sm:$0x1]
      %v1554 = vlaneseq
      %v1555 = vshrl.u32 %v1554, 7
      %v1556 = vsub.s32 0, %v1555
      %v1557 = vrot.slane %v1552, %v1556
      %v1559 = vmul.f32 %v1521, %v1557
      %v1560 = vmul.f32 %v1522, %v1557
      %v1561 = vmul.f32 %v1523, %v1557
      %v1562 = vmul.f32 %v1524, %v1557
      %v1563 = vmul.f32 %v1525, %v1557
      %v1564 = vmul.f32 %v1526, %v1557
      %v1565 = vmul.f32 %v1527, %v1557
      %v1566 = vmul.f32 %v1528, %v1557
      %v1567 = vmul.f32 %v1529, %v1557
      %v1568 = vmul.f32 %v1530, %v1557
      %v1569 = vmul.f32 %v1531, %v1557
      %v1570 = vmul.f32 %v1532, %v1557
      %v1571 = vmul.f32 %v1533, %v1557
      %v1572 = vmul.f32 %v1534, %v1557
      %v1573 = vmul.f32 %v1535, %v1557
      %v1574 = vmul.f32 %v1536, %v1557
      %v1575 = vmul.f32 %v1537, %v1557
      %v1576 = vmul.f32 %v1538, %v1557
      %v1577 = vmul.f32 %v1539, %v1557
      %v1578 = vmul.f32 %v1540, %v1557
      %v1579 = vmul.f32 %v1541, %v1557
      %v1580 = vmul.f32 %v1542, %v1557
      %v1581 = vmul.f32 %v1543, %v1557
      %v1582 = vmul.f32 %v1544, %v1557
      %vm1607 = vcmask 1045504
      %v1608 = vrot.slane %v1559, 2
      %v1609 = vrot.slane %v1560, 2
      %v1610 = vsel %vm1607, %v1608, %v1609
      %v1611 = vrot.slane %v1561, 2
      %v1612 = vsel %vm1607, %v1609, %v1611
      %v1613 = vrot.slane %v1562, 2
      %v1614 = vrot.slane %v1563, 2
      %v1615 = vsel %vm1607, %v1613, %v1614
      %v1616 = vrot.slane %v1564, 2
      %v1617 = vsel %vm1607, %v1614, %v1616
      %v1618 = vrot.slane %v1565, 2
      %v1619 = vrot.slane %v1566, 2
      %v1620 = vsel %vm1607, %v1618, %v1619
      %v1621 = vrot.slane %v1567, 2
      %v1622 = vsel %vm1607, %v1619, %v1621
      %v1623 = vrot.slane %v1568, 2
      %v1624 = vrot.slane %v1569, 2
      %v1625 = vsel %vm1607, %v1623, %v1624
      %v1626 = vrot.slane %v1570, 2
      %v1627 = vsel %vm1607, %v1624, %v1626
      %v1628 = vrot.slane %v1571, 2
      %v1629 = vrot.slane %v1572, 2
      %v1630 = vsel %vm1607, %v1628, %v1629
      %v1631 = vrot.slane %v1573, 2
      %v1632 = vsel %vm1607, %v1629, %v1631
      %v1633 = vrot.slane %v1574, 2
      %v1634 = vrot.slane %v1575, 2
      %v1635 = vsel %vm1607, %v1633, %v1634
      %v1636 = vrot.slane %v1576, 2
      %v1637 = vsel %vm1607, %v1634, %v1636
      %v1638 = vrot.slane %v1577, 2
      %v1639 = vrot.slane %v1578, 2
      %v1640 = vsel %vm1607, %v1638, %v1639
      %v1641 = vrot.slane %v1579, 2
      %v1642 = vsel %vm1607, %v1639, %v1641
      %v1643 = vrot.slane %v1580, 2
      %v1644 = vrot.slane %v1581, 2
      %v1645 = vsel %vm1607, %v1643, %v1644
      %v1646 = vrot.slane %v1582, 2
      %v1647 = vsel %vm1607, %v1644, %v1646
      %v1672 = vadd.f32 %v1437, %v1608
      %v1673 = vadd.f32 %v1438, %v1610
      %v1674 = vadd.f32 %v1439, %v1612
      %v1675 = vadd.f32 %v1440, %v1613
      %v1676 = vadd.f32 %v1441, %v1615
      %v1677 = vadd.f32 %v1442, %v1617
      %v1678 = vadd.f32 %v1443, %v1618
      %v1679 = vadd.f32 %v1444, %v1620
      %v1680 = vadd.f32 %v1445, %v1622
      %v1681 = vadd.f32 %v1446, %v1623
      %v1682 = vadd.f32 %v1447, %v1625
      %v1683 = vadd.f32 %v1448, %v1627
      %v1684 = vadd.f32 %v1449, %v1628
      %v1685 = vadd.f32 %v1450, %v1630
      %v1686 = vadd.f32 %v1451, %v1632
      %v1687 = vadd.f32 %v1452, %v1633
      %v1688 = vadd.f32 %v1453, %v1635
      %v1689 = vadd.f32 %v1454, %v1637
      %v1690 = vadd.f32 %v1455, %v1638
      %v1691 = vadd.f32 %v1456, %v1640
      %v1692 = vadd.f32 %v1457, %v1642
      %v1693 = vadd.f32 %v1458, %v1643
      %v1694 = vadd.f32 %v1459, %v1645
      %v1695 = vadd.f32 %v1460, %v1647
      %s1696 = scalar_lea.vmem %s3, 5
      %v1697 = vld [vmem:[%s1696] sm:$0x1]
      %v1699 = vlaneseq
      %v1700 = vshrl.u32 %v1699, 7
      %v1701 = vsub.s32 0, %v1700
      %v1702 = vrot.slane %v1697, %v1701
      %v1704 = vmul.f32 %v1524, %v1702
      %v1705 = vmul.f32 %v1525, %v1702
      %v1706 = vmul.f32 %v1526, %v1702
      %v1707 = vmul.f32 %v1527, %v1702
      %v1708 = vmul.f32 %v1528, %v1702
      %v1709 = vmul.f32 %v1529, %v1702
      %v1710 = vmul.f32 %v1530, %v1702
      %v1711 = vmul.f32 %v1531, %v1702
      %v1712 = vmul.f32 %v1532, %v1702
      %v1713 = vmul.f32 %v1533, %v1702
      %v1714 = vmul.f32 %v1534, %v1702
      %v1715 = vmul.f32 %v1535, %v1702
      %v1716 = vmul.f32 %v1536, %v1702
      %v1717 = vmul.f32 %v1537, %v1702
      %v1718 = vmul.f32 %v1538, %v1702
      %v1719 = vmul.f32 %v1539, %v1702
      %v1720 = vmul.f32 %v1540, %v1702
      %v1721 = vmul.f32 %v1541, %v1702
      %v1722 = vmul.f32 %v1542, %v1702
      %v1723 = vmul.f32 %v1543, %v1702
      %v1724 = vmul.f32 %v1544, %v1702
      %v1725 = vmul.f32 %v1545, %v1702
      %v1726 = vmul.f32 %v1546, %v1702
      %v1727 = vmul.f32 %v1547, %v1702
      %v1752 = vrot.slane %v1704, 2
      %v1753 = vrot.slane %v1705, 2
      %v1754 = vsel %vm1607, %v1752, %v1753
      %v1755 = vrot.slane %v1706, 2
      %v1756 = vsel %vm1607, %v1753, %v1755
      %v1757 = vrot.slane %v1707, 2
      %v1758 = vrot.slane %v1708, 2
      %v1759 = vsel %vm1607, %v1757, %v1758
      %v1760 = vrot.slane %v1709, 2
      %v1761 = vsel %vm1607, %v1758, %v1760
      %v1762 = vrot.slane %v1710, 2
      %v1763 = vrot.slane %v1711, 2
      %v1764 = vsel %vm1607, %v1762, %v1763
      %v1765 = vrot.slane %v1712, 2
      %v1766 = vsel %vm1607, %v1763, %v1765
      %v1767 = vrot.slane %v1713, 2
      %v1768 = vrot.slane %v1714, 2
      %v1769 = vsel %vm1607, %v1767, %v1768
      %v1770 = vrot.slane %v1715, 2
      %v1771 = vsel %vm1607, %v1768, %v1770
      %v1772 = vrot.slane %v1716, 2
      %v1773 = vrot.slane %v1717, 2
      %v1774 = vsel %vm1607, %v1772, %v1773
      %v1775 = vrot.slane %v1718, 2
      %v1776 = vsel %vm1607, %v1773, %v1775
      %v1777 = vrot.slane %v1719, 2
      %v1778 = vrot.slane %v1720, 2
      %v1779 = vsel %vm1607, %v1777, %v1778
      %v1780 = vrot.slane %v1721, 2
      %v1781 = vsel %vm1607, %v1778, %v1780
      %v1782 = vrot.slane %v1722, 2
      %v1783 = vrot.slane %v1723, 2
      %v1784 = vsel %vm1607, %v1782, %v1783
      %v1785 = vrot.slane %v1724, 2
      %v1786 = vsel %vm1607, %v1783, %v1785
      %v1787 = vrot.slane %v1725, 2
      %v1788 = vrot.slane %v1726, 2
      %v1789 = vsel %vm1607, %v1787, %v1788
      %v1790 = vrot.slane %v1727, 2
      %v1791 = vsel %vm1607, %v1788, %v1790
      %v1816 = vadd.f32 %v1672, %v1752
      %v1817 = vadd.f32 %v1673, %v1754
      %v1818 = vadd.f32 %v1674, %v1756
      %v1819 = vadd.f32 %v1675, %v1757
      %v1820 = vadd.f32 %v1676, %v1759
      %v1821 = vadd.f32 %v1677, %v1761
      %v1822 = vadd.f32 %v1678, %v1762
      %v1823 = vadd.f32 %v1679, %v1764
      %v1824 = vadd.f32 %v1680, %v1766
      %v1825 = vadd.f32 %v1681, %v1767
      %v1826 = vadd.f32 %v1682, %v1769
      %v1827 = vadd.f32 %v1683, %v1771
      %v1828 = vadd.f32 %v1684, %v1772
      %v1829 = vadd.f32 %v1685, %v1774
      %v1830 = vadd.f32 %v1686, %v1776
      %v1831 = vadd.f32 %v1687, %v1777
      %v1832 = vadd.f32 %v1688, %v1779
      %v1833 = vadd.f32 %v1689, %v1781
      %v1834 = vadd.f32 %v1690, %v1782
      %v1835 = vadd.f32 %v1691, %v1784
      %v1836 = vadd.f32 %v1692, %v1786
      %v1837 = vadd.f32 %v1693, %v1787
      %v1838 = vadd.f32 %v1694, %v1789
      %v1839 = vadd.f32 %v1695, %v1791
      %s1840 = scalar_lea.vmem %s3, 8
      %v1841 = vld [vmem:[%s1840] sm:$0x1]
      %v1843 = vlaneseq
      %v1844 = vshrl.u32 %v1843, 7
      %v1845 = vsub.s32 0, %v1844
      %v1846 = vrot.slane %v1841, %v1845
      %v1848 = vmul.f32 %v1527, %v1846
      %v1849 = vmul.f32 %v1528, %v1846
      %v1850 = vmul.f32 %v1529, %v1846
      %v1851 = vmul.f32 %v1530, %v1846
      %v1852 = vmul.f32 %v1531, %v1846
      %v1853 = vmul.f32 %v1532, %v1846
      %v1854 = vmul.f32 %v1533, %v1846
      %v1855 = vmul.f32 %v1534, %v1846
      %v1856 = vmul.f32 %v1535, %v1846
      %v1857 = vmul.f32 %v1536, %v1846
      %v1858 = vmul.f32 %v1537, %v1846
      %v1859 = vmul.f32 %v1538, %v1846
      %v1860 = vmul.f32 %v1539, %v1846
      %v1861 = vmul.f32 %v1540, %v1846
      %v1862 = vmul.f32 %v1541, %v1846
      %v1863 = vmul.f32 %v1542, %v1846
      %v1864 = vmul.f32 %v1543, %v1846
      %v1865 = vmul.f32 %v1544, %v1846
      %v1866 = vmul.f32 %v1545, %v1846
      %v1867 = vmul.f32 %v1546, %v1846
      %v1868 = vmul.f32 %v1547, %v1846
      %v1869 = vmul.f32 %v1548, %v1846
      %v1870 = vmul.f32 %v1549, %v1846
      %v1871 = vmul.f32 %v1550, %v1846
      %v1896 = vrot.slane %v1848, 2
      %v1897 = vrot.slane %v1849, 2
      %v1898 = vsel %vm1607, %v1896, %v1897
      %v1899 = vrot.slane %v1850, 2
      %v1900 = vsel %vm1607, %v1897, %v1899
      %v1901 = vrot.slane %v1851, 2
      %v1902 = vrot.slane %v1852, 2
      %v1903 = vsel %vm1607, %v1901, %v1902
      %v1904 = vrot.slane %v1853, 2
      %v1905 = vsel %vm1607, %v1902, %v1904
      %v1906 = vrot.slane %v1854, 2
      %v1907 = vrot.slane %v1855, 2
      %v1908 = vsel %vm1607, %v1906, %v1907
      %v1909 = vrot.slane %v1856, 2
      %v1910 = vsel %vm1607, %v1907, %v1909
      %v1911 = vrot.slane %v1857, 2
      %v1912 = vrot.slane %v1858, 2
      %v1913 = vsel %vm1607, %v1911, %v1912
      %v1914 = vrot.slane %v1859, 2
      %v1915 = vsel %vm1607, %v1912, %v1914
      %v1916 = vrot.slane %v1860, 2
      %v1917 = vrot.slane %v1861, 2
      %v1918 = vsel %vm1607, %v1916, %v1917
      %v1919 = vrot.slane %v1862, 2
      %v1920 = vsel %vm1607, %v1917, %v1919
      %v1921 = vrot.slane %v1863, 2
      %v1922 = vrot.slane %v1864, 2
      %v1923 = vsel %vm1607, %v1921, %v1922
      %v1924 = vrot.slane %v1865, 2
      %v1925 = vsel %vm1607, %v1922, %v1924
      %v1926 = vrot.slane %v1866, 2
      %v1927 = vrot.slane %v1867, 2
      %v1928 = vsel %vm1607, %v1926, %v1927
      %v1929 = vrot.slane %v1868, 2
      %v1930 = vsel %vm1607, %v1927, %v1929
      %v1931 = vrot.slane %v1869, 2
      %v1932 = vrot.slane %v1870, 2
      %v1933 = vsel %vm1607, %v1931, %v1932
      %v1934 = vrot.slane %v1871, 2
      %v1935 = vsel %vm1607, %v1932, %v1934
      %v1960 = vadd.f32 %v1816, %v1896
      %v1961 = vadd.f32 %v1817, %v1898
      %v1962 = vadd.f32 %v1818, %v1900
      %v1963 = vadd.f32 %v1819, %v1901
      %v1964 = vadd.f32 %v1820, %v1903
      %v1965 = vadd.f32 %v1821, %v1905
      %v1966 = vadd.f32 %v1822, %v1906
      %v1967 = vadd.f32 %v1823, %v1908
      %v1968 = vadd.f32 %v1824, %v1910
      %v1969 = vadd.f32 %v1825, %v1911
      %v1970 = vadd.f32 %v1826, %v1913
      %v1971 = vadd.f32 %v1827, %v1915
      %v1972 = vadd.f32 %v1828, %v1916
      %v1973 = vadd.f32 %v1829, %v1918
      %v1974 = vadd.f32 %v1830, %v1920
      %v1975 = vadd.f32 %v1831, %v1921
      %v1976 = vadd.f32 %v1832, %v1923
      %v1977 = vadd.f32 %v1833, %v1925
      %v1978 = vadd.f32 %v1834, %v1926
      %v1979 = vadd.f32 %v1835, %v1928
      %v1980 = vadd.f32 %v1836, %v1930
      %v1981 = vadd.f32 %v1837, %v1931
      %v1982 = vadd.f32 %v1838, %v1933
      %v1983 = vadd.f32 %v1839, %v1935
      %v1984 = vld [vmem:[%s4] sm:$0x1]
      %v1986 = vlaneseq
      %v1987 = vshrl.u32 %v1986, 7
      %v1988 = vsub.s32 0, %v1987
      %v1989 = vrot.slane %v1984, %v1988
      %v1991 = vadd.f32 %v1960, %v1989
      %v1992 = vadd.f32 %v1961, %v1989
      %v1993 = vadd.f32 %v1962, %v1989
      %v1994 = vadd.f32 %v1963, %v1989
      %v1995 = vadd.f32 %v1964, %v1989
      %v1996 = vadd.f32 %v1965, %v1989
      %v1997 = vadd.f32 %v1966, %v1989
      %v1998 = vadd.f32 %v1967, %v1989
      %v1999 = vadd.f32 %v1968, %v1989
      %v2000 = vadd.f32 %v1969, %v1989
      %v2001 = vadd.f32 %v1970, %v1989
      %v2002 = vadd.f32 %v1971, %v1989
      %v2003 = vadd.f32 %v1972, %v1989
      %v2004 = vadd.f32 %v1973, %v1989
      %v2005 = vadd.f32 %v1974, %v1989
      %v2006 = vadd.f32 %v1975, %v1989
      %v2007 = vadd.f32 %v1976, %v1989
      %v2008 = vadd.f32 %v1977, %v1989
      %v2009 = vadd.f32 %v1978, %v1989
      %v2010 = vadd.f32 %v1979, %v1989
      %v2011 = vadd.f32 %v1980, %v1989
      %v2012 = vadd.f32 %v1981, %v1989
      %v2013 = vadd.f32 %v1982, %v1989
      %v2014 = vadd.f32 %v1983, %v1989
      %v2015 = vxor.u32 %v1991, 2147483648
      %v2016 = vxor.u32 %v1992, 2147483648
      %v2017 = vxor.u32 %v1993, 2147483648
      %v2018 = vxor.u32 %v1994, 2147483648
      %v2019 = vxor.u32 %v1995, 2147483648
      %v2020 = vxor.u32 %v1996, 2147483648
      %v2021 = vxor.u32 %v1997, 2147483648
      %v2022 = vxor.u32 %v1998, 2147483648
      %v2023 = vxor.u32 %v1999, 2147483648
      %v2024 = vxor.u32 %v2000, 2147483648
      %v2025 = vxor.u32 %v2001, 2147483648
      %v2026 = vxor.u32 %v2002, 2147483648
      %v2027 = vxor.u32 %v2003, 2147483648
      %v2028 = vxor.u32 %v2004, 2147483648
      %v2029 = vxor.u32 %v2005, 2147483648
      %v2030 = vxor.u32 %v2006, 2147483648
      %v2031 = vxor.u32 %v2007, 2147483648
      %v2032 = vxor.u32 %v2008, 2147483648
      %v2033 = vxor.u32 %v2009, 2147483648
      %v2034 = vxor.u32 %v2010, 2147483648
      %v2035 = vxor.u32 %v2011, 2147483648
      %v2036 = vxor.u32 %v2012, 2147483648
      %v2037 = vxor.u32 %v2013, 2147483648
      %v2038 = vxor.u32 %v2014, 2147483648
      %v2039 = vmul.f32 %v2015, 1.442695
      %v2040 = vpow.pop %v2039
      %v2041 = vmul.f32 %v2016, 1.442695
      %v2042 = vpow.pop %v2041
      %v2043 = vmul.f32 %v2017, 1.442695
      %v2044 = vpow.pop %v2043
      %v2045 = vmul.f32 %v2018, 1.442695
      %v2046 = vpow.pop %v2045
      %v2047 = vmul.f32 %v2019, 1.442695
      %v2048 = vpow.pop %v2047
      %v2049 = vmul.f32 %v2020, 1.442695
      %v2050 = vpow.pop %v2049
      %v2051 = vmul.f32 %v2021, 1.442695
      %v2052 = vpow.pop %v2051
      %v2053 = vmul.f32 %v2022, 1.442695
      %v2054 = vpow.pop %v2053
      %v2055 = vmul.f32 %v2023, 1.442695
      %v2056 = vpow.pop %v2055
      %v2057 = vmul.f32 %v2024, 1.442695
      %v2058 = vpow.pop %v2057
      %v2059 = vmul.f32 %v2025, 1.442695
      %v2060 = vpow.pop %v2059
      %v2061 = vmul.f32 %v2026, 1.442695
      %v2062 = vpow.pop %v2061
      %v2063 = vmul.f32 %v2027, 1.442695
      %v2064 = vpow.pop %v2063
      %v2065 = vmul.f32 %v2028, 1.442695
      %v2066 = vpow.pop %v2065
      %v2067 = vmul.f32 %v2029, 1.442695
      %v2068 = vpow.pop %v2067
      %v2069 = vmul.f32 %v2030, 1.442695
      %v2070 = vpow.pop %v2069
      %v2071 = vmul.f32 %v2031, 1.442695
      %v2072 = vpow.pop %v2071
      %v2073 = vmul.f32 %v2032, 1.442695
      %v2074 = vpow.pop %v2073
      %v2075 = vmul.f32 %v2033, 1.442695
      %v2076 = vpow.pop %v2075
      %v2077 = vmul.f32 %v2034, 1.442695
      %v2078 = vpow.pop %v2077
      %v2079 = vmul.f32 %v2035, 1.442695
      %v2080 = vpow.pop %v2079
      %v2081 = vmul.f32 %v2036, 1.442695
      %v2082 = vpow.pop %v2081
      %v2083 = vmul.f32 %v2037, 1.442695
      %v2084 = vpow.pop %v2083
      %v2085 = vmul.f32 %v2038, 1.442695
      %v2086 = vpow.pop %v2085
      %v2087 = vadd.f32 %v2040, 1.0
      %v2088 = vadd.f32 %v2042, 1.0
      %v2089 = vadd.f32 %v2044, 1.0
      %v2090 = vadd.f32 %v2046, 1.0
      %v2091 = vadd.f32 %v2048, 1.0
      %v2092 = vadd.f32 %v2050, 1.0
      %v2093 = vadd.f32 %v2052, 1.0
      %v2094 = vadd.f32 %v2054, 1.0
      %v2095 = vadd.f32 %v2056, 1.0
      %v2096 = vadd.f32 %v2058, 1.0
      %v2097 = vadd.f32 %v2060, 1.0
      %v2098 = vadd.f32 %v2062, 1.0
      %v2099 = vadd.f32 %v2064, 1.0
      %v2100 = vadd.f32 %v2066, 1.0
      %v2101 = vadd.f32 %v2068, 1.0
      %v2102 = vadd.f32 %v2070, 1.0
      %v2103 = vadd.f32 %v2072, 1.0
      %v2104 = vadd.f32 %v2074, 1.0
      %v2105 = vadd.f32 %v2076, 1.0
      %v2106 = vadd.f32 %v2078, 1.0
      %v2107 = vadd.f32 %v2080, 1.0
      %v2108 = vadd.f32 %v2082, 1.0
      %v2109 = vadd.f32 %v2084, 1.0
      %v2110 = vadd.f32 %v2086, 1.0
      %v2111 = vrcp.pop %v2087
      %v2112 = vmul.f32 1.0, %v2111
      %v2113 = vrcp.pop %v2088
      %v2114 = vmul.f32 1.0, %v2113
      %v2115 = vrcp.pop %v2089
      %v2116 = vmul.f32 1.0, %v2115
      %v2117 = vrcp.pop %v2090
      %v2118 = vmul.f32 1.0, %v2117
      %v2119 = vrcp.pop %v2091
      %v2120 = vmul.f32 1.0, %v2119
      %v2121 = vrcp.pop %v2092
      %v2122 = vmul.f32 1.0, %v2121
      %v2123 = vrcp.pop %v2093
      %v2124 = vmul.f32 1.0, %v2123
      %v2125 = vrcp.pop %v2094
      %v2126 = vmul.f32 1.0, %v2125
      %v2127 = vrcp.pop %v2095
      %v2128 = vmul.f32 1.0, %v2127
      %v2129 = vrcp.pop %v2096
      %v2130 = vmul.f32 1.0, %v2129
      %v2131 = vrcp.pop %v2097
      %v2132 = vmul.f32 1.0, %v2131
      %v2133 = vrcp.pop %v2098
      %v2134 = vmul.f32 1.0, %v2133
      %v2135 = vrcp.pop %v2099
      %v2136 = vmul.f32 1.0, %v2135
      %v2137 = vrcp.pop %v2100
      %v2138 = vmul.f32 1.0, %v2137
      %v2139 = vrcp.pop %v2101
      %v2140 = vmul.f32 1.0, %v2139
      %v2141 = vrcp.pop %v2102
      %v2142 = vmul.f32 1.0, %v2141
      %v2143 = vrcp.pop %v2103
      %v2144 = vmul.f32 1.0, %v2143
      %v2145 = vrcp.pop %v2104
      %v2146 = vmul.f32 1.0, %v2145
      %v2147 = vrcp.pop %v2105
      %v2148 = vmul.f32 1.0, %v2147
      %v2149 = vrcp.pop %v2106
      %v2150 = vmul.f32 1.0, %v2149
      %v2151 = vrcp.pop %v2107
      %v2152 = vmul.f32 1.0, %v2151
      %v2153 = vrcp.pop %v2108
      %v2154 = vmul.f32 1.0, %v2153
      %v2155 = vrcp.pop %v2109
      %v2156 = vmul.f32 1.0, %v2155
      %v2157 = vrcp.pop %v2110
      %v2158 = vmul.f32 1.0, %v2157
      %v2159 = vmul.f32 %v1991, %v2112
      %v2160 = vmul.f32 %v1992, %v2114
      %v2161 = vmul.f32 %v1993, %v2116
      %v2162 = vmul.f32 %v1994, %v2118
      %v2163 = vmul.f32 %v1995, %v2120
      %v2164 = vmul.f32 %v1996, %v2122
      %v2165 = vmul.f32 %v1997, %v2124
      %v2166 = vmul.f32 %v1998, %v2126
      %v2167 = vmul.f32 %v1999, %v2128
      %v2168 = vmul.f32 %v2000, %v2130
      %v2169 = vmul.f32 %v2001, %v2132
      %v2170 = vmul.f32 %v2002, %v2134
      %v2171 = vmul.f32 %v2003, %v2136
      %v2172 = vmul.f32 %v2004, %v2138
      %v2173 = vmul.f32 %v2005, %v2140
      %v2174 = vmul.f32 %v2006, %v2142
      %v2175 = vmul.f32 %v2007, %v2144
      %v2176 = vmul.f32 %v2008, %v2146
      %v2177 = vmul.f32 %v2009, %v2148
      %v2178 = vmul.f32 %v2010, %v2150
      %v2179 = vmul.f32 %v2011, %v2152
      %v2180 = vmul.f32 %v2012, %v2154
      %v2181 = vmul.f32 %v2013, %v2156
      %v2182 = vmul.f32 %v2014, %v2158
      %v2183 = vpack.c.bf16 %v2160, %v2159
      %v2184 = vpack.c.bf16 %v2161, %v2161
      %v2185 = vpack.c.bf16 %v2163, %v2162
      %v2186 = vpack.c.bf16 %v2164, %v2164
      %v2187 = vpack.c.bf16 %v2166, %v2165
      %v2188 = vpack.c.bf16 %v2167, %v2167
      %v2189 = vpack.c.bf16 %v2169, %v2168
      %v2190 = vpack.c.bf16 %v2170, %v2170
      %v2191 = vpack.c.bf16 %v2172, %v2171
      %v2192 = vpack.c.bf16 %v2173, %v2173
      %v2193 = vpack.c.bf16 %v2175, %v2174
      %v2194 = vpack.c.bf16 %v2176, %v2176
      %v2195 = vpack.c.bf16 %v2178, %v2177
      %v2196 = vpack.c.bf16 %v2179, %v2179
      %v2197 = vpack.c.bf16 %v2181, %v2180
      %v2198 = vpack.c.bf16 %v2182, %v2182
      %v2215 = vunpack.c.l.b16 %v2183
      %v2216 = vunpack.c.h.b16 %v2183
      %v2217 = vunpack.c.l.b16 %v2184
      %v2218 = vunpack.c.l.b16 %v2185
      %v2219 = vunpack.c.h.b16 %v2185
      %v2220 = vunpack.c.l.b16 %v2186
      %v2221 = vunpack.c.l.b16 %v2187
      %v2222 = vunpack.c.h.b16 %v2187
      %v2223 = vunpack.c.l.b16 %v2188
      %v2224 = vunpack.c.l.b16 %v2189
      %v2225 = vunpack.c.h.b16 %v2189
      %v2226 = vunpack.c.l.b16 %v2190
      %v2227 = vunpack.c.l.b16 %v2191
      %v2228 = vunpack.c.h.b16 %v2191
      %v2229 = vunpack.c.l.b16 %v2192
      %v2230 = vunpack.c.l.b16 %v2193
      %v2231 = vunpack.c.h.b16 %v2193
      %v2232 = vunpack.c.l.b16 %v2194
      %v2233 = vunpack.c.l.b16 %v2195
      %v2234 = vunpack.c.h.b16 %v2195
      %v2235 = vunpack.c.l.b16 %v2196
      %v2236 = vunpack.c.l.b16 %v2197
      %v2237 = vunpack.c.h.b16 %v2197
      %v2238 = vunpack.c.l.b16 %v2198
      %v2239 = vpack.c.b16 %v2215, %v2215
      %v2240 = vpack.c.b16 %v2216, %v2216
      %v2241 = vpack.c.b16 %v2217, %v2217
      %v2242 = vpack.c.b16 %v2218, %v2218
      %v2243 = vpack.c.b16 %v2219, %v2219
      %v2244 = vpack.c.b16 %v2220, %v2220
      %v2245 = vpack.c.b16 %v2221, %v2221
      %v2246 = vpack.c.b16 %v2222, %v2222
      %v2247 = vpack.c.b16 %v2223, %v2223
      %v2248 = vpack.c.b16 %v2224, %v2224
      %v2249 = vpack.c.b16 %v2225, %v2225
      %v2250 = vpack.c.b16 %v2226, %v2226
      %v2251 = vpack.c.b16 %v2227, %v2227
      %v2252 = vpack.c.b16 %v2228, %v2228
      %v2253 = vpack.c.b16 %v2229, %v2229
      %v2254 = vpack.c.b16 %v2230, %v2230
      %v2255 = vpack.c.b16 %v2231, %v2231
      %v2256 = vpack.c.b16 %v2232, %v2232
      %v2257 = vpack.c.b16 %v2233, %v2233
      %v2258 = vpack.c.b16 %v2234, %v2234
      %v2259 = vpack.c.b16 %v2235, %v2235
      %v2260 = vpack.c.b16 %v2236, %v2236
      %v2261 = vpack.c.b16 %v2237, %v2237
      %v2262 = vpack.c.b16 %v2238, %v2238
      %vm2263 = vsmask.f32 256
      %vm2264 = vsmask.f32 4368
      %vm2265 = vmor %vm2263, %vm2264
      %v2267 = vshrl.u32 %v2239, 16
      %v2269 = vrot.slane %v2267, 7
      %v2270 = vrot.slane %v2269, 4
      %v2272 = vshrl.u32 %v2240, 16
      %v2274 = vrot.slane %v2272, 7
      %v2275 = vshll.u32 %v2240, 16
      %v2277 = vor.u32 %v2274, %v2275
      %v2278 = vsel %vm2265, %v2270, %v2277
      %v2279 = vrot.slane %v2274, 4
      %v2281 = vshrl.u32 %v2241, 16
      %v2283 = vrot.slane %v2281, 7
      %v2284 = vshll.u32 %v2241, 16
      %v2286 = vor.u32 %v2283, %v2284
      %v2287 = vsel %vm2265, %v2279, %v2286
      %v2289 = vshrl.u32 %v2242, 16
      %v2291 = vrot.slane %v2289, 7
      %v2292 = vrot.slane %v2291, 4
      %v2294 = vshrl.u32 %v2243, 16
      %v2296 = vrot.slane %v2294, 7
      %v2297 = vshll.u32 %v2243, 16
      %v2299 = vor.u32 %v2296, %v2297
      %v2300 = vsel %vm2265, %v2292, %v2299
      %v2301 = vrot.slane %v2296, 4
      %v2303 = vshrl.u32 %v2244, 16
      %v2305 = vrot.slane %v2303, 7
      %v2306 = vshll.u32 %v2244, 16
      %v2308 = vor.u32 %v2305, %v2306
      %v2309 = vsel %vm2265, %v2301, %v2308
      %v2311 = vshrl.u32 %v2245, 16
      %v2313 = vrot.slane %v2311, 7
      %v2314 = vrot.slane %v2313, 4
      %v2316 = vshrl.u32 %v2246, 16
      %v2318 = vrot.slane %v2316, 7
      %v2319 = vshll.u32 %v2246, 16
      %v2321 = vor.u32 %v2318, %v2319
      %v2322 = vsel %vm2265, %v2314, %v2321
      %v2323 = vrot.slane %v2318, 4
      %v2325 = vshrl.u32 %v2247, 16
      %v2327 = vrot.slane %v2325, 7
      %v2328 = vshll.u32 %v2247, 16
      %v2330 = vor.u32 %v2327, %v2328
      %v2331 = vsel %vm2265, %v2323, %v2330
      %v2333 = vshrl.u32 %v2248, 16
      %v2335 = vrot.slane %v2333, 7
      %v2336 = vrot.slane %v2335, 4
      %v2338 = vshrl.u32 %v2249, 16
      %v2340 = vrot.slane %v2338, 7
      %v2341 = vshll.u32 %v2249, 16
      %v2343 = vor.u32 %v2340, %v2341
      %v2344 = vsel %vm2265, %v2336, %v2343
      %v2345 = vrot.slane %v2340, 4
      %v2347 = vshrl.u32 %v2250, 16
      %v2349 = vrot.slane %v2347, 7
      %v2350 = vshll.u32 %v2250, 16
      %v2352 = vor.u32 %v2349, %v2350
      %v2353 = vsel %vm2265, %v2345, %v2352
      %v2355 = vshrl.u32 %v2251, 16
      %v2357 = vrot.slane %v2355, 7
      %v2358 = vrot.slane %v2357, 4
      %v2360 = vshrl.u32 %v2252, 16
      %v2362 = vrot.slane %v2360, 7
      %v2363 = vshll.u32 %v2252, 16
      %v2365 = vor.u32 %v2362, %v2363
      %v2366 = vsel %vm2265, %v2358, %v2365
      %v2367 = vrot.slane %v2362, 4
      %v2369 = vshrl.u32 %v2253, 16
      %v2371 = vrot.slane %v2369, 7
      %v2372 = vshll.u32 %v2253, 16
      %v2374 = vor.u32 %v2371, %v2372
      %v2375 = vsel %vm2265, %v2367, %v2374
      %v2377 = vshrl.u32 %v2254, 16
      %v2379 = vrot.slane %v2377, 7
      %v2380 = vrot.slane %v2379, 4
      %v2382 = vshrl.u32 %v2255, 16
      %v2384 = vrot.slane %v2382, 7
      %v2385 = vshll.u32 %v2255, 16
      %v2387 = vor.u32 %v2384, %v2385
      %v2388 = vsel %vm2265, %v2380, %v2387
      %v2389 = vrot.slane %v2384, 4
      %v2391 = vshrl.u32 %v2256, 16
      %v2393 = vrot.slane %v2391, 7
      %v2394 = vshll.u32 %v2256, 16
      %v2396 = vor.u32 %v2393, %v2394
      %v2397 = vsel %vm2265, %v2389, %v2396
      %v2399 = vshrl.u32 %v2257, 16
      %v2401 = vrot.slane %v2399, 7
      %v2402 = vrot.slane %v2401, 4
      %v2404 = vshrl.u32 %v2258, 16
      %v2406 = vrot.slane %v2404, 7
      %v2407 = vshll.u32 %v2258, 16
      %v2409 = vor.u32 %v2406, %v2407
      %v2410 = vsel %vm2265, %v2402, %v2409
      %v2411 = vrot.slane %v2406, 4
      %v2413 = vshrl.u32 %v2259, 16
      %v2415 = vrot.slane %v2413, 7
      %v2416 = vshll.u32 %v2259, 16
      %v2418 = vor.u32 %v2415, %v2416
      %v2419 = vsel %vm2265, %v2411, %v2418
      %v2421 = vshrl.u32 %v2260, 16
      %v2423 = vrot.slane %v2421, 7
      %v2424 = vrot.slane %v2423, 4
      %v2426 = vshrl.u32 %v2261, 16
      %v2428 = vrot.slane %v2426, 7
      %v2429 = vshll.u32 %v2261, 16
      %v2431 = vor.u32 %v2428, %v2429
      %v2432 = vsel %vm2265, %v2424, %v2431
      %v2433 = vrot.slane %v2428, 4
      %v2435 = vshrl.u32 %v2262, 16
      %v2437 = vrot.slane %v2435, 7
      %v2438 = vshll.u32 %v2262, 16
      %v2440 = vor.u32 %v2437, %v2438
      %v2441 = vsel %vm2265, %v2433, %v2440
      %2458 = vst [vmem:[%s298] sm:$0xf] %v2278
      %2459 = vst [vmem:[%s298 + $0x4] sm:$0xf] %v2287
      %2460 = vst [vmem:[%s298 + $0x8] sm:$0xf] %v2300
      %2461 = vst [vmem:[%s298 + $0xc] sm:$0xf] %v2309
      %2462 = vst [vmem:[%s298 + $0x10] sm:$0xf] %v2322
      %2463 = vst [vmem:[%s298 + $0x14] sm:$0xf] %v2331
      %2464 = vst [vmem:[%s298 + $0x18] sm:$0xf] %v2344
      %2465 = vst [vmem:[%s298 + $0x1c] sm:$0xf] %v2353
      %2466 = vst [vmem:[%s298 + $0x20] sm:$0xf] %v2366
      %2467 = vst [vmem:[%s298 + $0x24] sm:$0xf] %v2375
      %2468 = vst [vmem:[%s298 + $0x28] sm:$0xf] %v2388
      %2469 = vst [vmem:[%s298 + $0x2c] sm:$0xf] %v2397
      %2470 = vst [vmem:[%s298 + $0x30] sm:$0xf] %v2410
      %2471 = vst [vmem:[%s298 + $0x34] sm:$0xf] %v2419
      %2472 = vst [vmem:[%s298 + $0x38] sm:$0xf] %v2432
      %2473 = vst [vmem:[%s298 + $0x3c] sm:$0xf] %v2441
      %v2474 = vld [vmem:[%s307] sm:$0x1]
      %vm2499 = vcmask 1040384
      %v2500 = vrot.slane %v2159, 7
      %v2501 = vrot.slane %v2160, 7
      %v2502 = vsel %vm2499, %v2500, %v2501
      %v2503 = vrot.slane %v2161, 7
      %v2504 = vsel %vm2499, %v2501, %v2503
      %v2505 = vrot.slane %v2162, 7
      %v2506 = vrot.slane %v2163, 7
      %v2507 = vsel %vm2499, %v2505, %v2506
      %v2508 = vrot.slane %v2164, 7
      %v2509 = vsel %vm2499, %v2506, %v2508
      %v2510 = vrot.slane %v2165, 7
      %v2511 = vrot.slane %v2166, 7
      %v2512 = vsel %vm2499, %v2510, %v2511
      %v2513 = vrot.slane %v2167, 7
      %v2514 = vsel %vm2499, %v2511, %v2513
      %v2515 = vrot.slane %v2168, 7
      %v2516 = vrot.slane %v2169, 7
      %v2517 = vsel %vm2499, %v2515, %v2516
      %v2518 = vrot.slane %v2170, 7
      %v2519 = vsel %vm2499, %v2516, %v2518
      %v2520 = vrot.slane %v2171, 7
      %v2521 = vrot.slane %v2172, 7
      %v2522 = vsel %vm2499, %v2520, %v2521
      %v2523 = vrot.slane %v2173, 7
      %v2524 = vsel %vm2499, %v2521, %v2523
      %v2525 = vrot.slane %v2174, 7
      %v2526 = vrot.slane %v2175, 7
      %v2527 = vsel %vm2499, %v2525, %v2526
      %v2528 = vrot.slane %v2176, 7
      %v2529 = vsel %vm2499, %v2526, %v2528
      %v2530 = vrot.slane %v2177, 7
      %v2531 = vrot.slane %v2178, 7
      %v2532 = vsel %vm2499, %v2530, %v2531
      %v2533 = vrot.slane %v2179, 7
      %v2534 = vsel %vm2499, %v2531, %v2533
      %v2535 = vrot.slane %v2180, 7
      %v2536 = vrot.slane %v2181, 7
      %v2537 = vsel %vm2499, %v2535, %v2536
      %v2538 = vrot.slane %v2182, 7
      %v2539 = vsel %vm2499, %v2536, %v2538
      %v2556 = vadd.f32 %v2502, %v2504
      %v2557 = vadd.f32 %v2556, %v2507
      %v2558 = vadd.f32 %v2557, %v2509
      %v2559 = vadd.f32 %v2558, %v2512
      %v2560 = vadd.f32 %v2559, %v2514
      %v2561 = vadd.f32 %v2560, %v2517
      %v2562 = vadd.f32 %v2561, %v2519
      %v2563 = vadd.f32 %v2562, %v2522
      %v2564 = vadd.f32 %v2563, %v2524
      %v2565 = vadd.f32 %v2564, %v2527
      %v2566 = vadd.f32 %v2565, %v2529
      %v2567 = vadd.f32 %v2566, %v2532
      %v2568 = vadd.f32 %v2567, %v2534
      %v2569 = vadd.f32 %v2568, %v2537
      %v2570 = vadd.f32 %v2569, %v2539
      %v2571 = vrot.slane %v2570, 4
      %v2572 = vadd.f32 %v2570, %v2571
      %v2573 = vrot.slane %v2572, 2
      %v2574 = vadd.f32 %v2572, %v2573
      %v2575 = vrot.slane %v2574, 1
      %v2576 = vadd.f32 %v2574, %v2575
      %v2577 = vadd.f32 %v2474, %v2576
      %2578 = vst [vmem:[%s307] sm:$0x1] %v2577
      %s2579 = sadd.s32 %s23, %s25
      %s2580 = smul.u32 8, %s2579
      %p2581 = scmp.lt.s32.totalorder %s24, 1
      %s2582 = scalar_select %p2581, %s24, 1
      %p2583 = scmp.lt.s32.totalorder %s2580, 15
      %s2584 = scalar_select %p2583, %s2580, 15
      %s2585 = smul.addr %s2584, 2
      %s2586 = smul.addr %s2582, 32
      %s2587 = sadd.s32 %s2585, %s2586
      %s2588 = smul.addr %s2587, 4
      %s2589 = scalar_lea.vmem %s5, %s2588
      %p2590 = scmp.lt.s32.totalorder %s24, 1
      %s2591 = scalar_select %p2590, %s24, 1
      %p2592 = scmp.lt.s32.totalorder %s23, 1
      %s2593 = scalar_select %p2592, %s23, 1
      %s2594 = smul.addr %s2591, 2
      %s2595 = sadd.s32 %s2593, %s2594
      %s2596 = scalar_lea.vmem %s6, %s2595
      // Predicated region
      $region53: #{mbconv_forward.3} parent=39 // pred_check
        %p2597 = pneg %p169
      $region54: #{mbconv_forward.3} parent=39 // pred_check_branch
        %2599 = sbr.rel (%p2597) target = $region56
      $region55: #{mbconv_forward.3} parent=39 // pred_region
        %s2600 = sadd.s32 %s23, %s25
        %s2601 = smul.u32 8, %s2600
      $region56: #{mbconv_forward.3} parent=39 // pred_fallthru
        _
      // Predicated region
      $region57: #{mbconv_forward.3} parent=39 // pred_check
        %p2602 = pneg %p197
      $region58: #{mbconv_forward.3} parent=39 // pred_check_branch
        %2604 = sbr.rel (%p2602) target = $region60
      $region59: #{mbconv_forward.3} parent=39 // pred_region
        _
      $region60: #{mbconv_forward.3} parent=39 // pred_fallthru
        _
    $region40: #{mbconv_forward.3} parent=5 // pred_fallthru
      _
    %p2605 = scmp.le.s32.totalorder 2, %s13
    // Predicated region
    $region61: #{mbconv_forward.3} parent=5 // pred_check
      %p2606 = pneg %p2605
    $region62: #{mbconv_forward.3} parent=5 // pred_check_branch
      %2608 = sbr.rel (%p2606) target = $region64
    $region63: #{mbconv_forward.3} parent=5 // pred_region
      %s2609 = ssub.s32 %s13, 2
      // Predicated region
      $region65: #{mbconv_forward.3} parent=63 // pred_check
        %p2610 = pneg %p175
      $region66: #{mbconv_forward.3} parent=63 // pred_check_branch
        %2612 = sbr.rel (%p2610) target = $region68
      $region67: #{mbconv_forward.3} parent=63 // pred_region
        %s2613 = sadd.s32 %s26, %s28
        %s2614 = smul.u32 8, %s2613
        %p2615 = scmp.lt.s32.totalorder %s27, 1
        %s2616 = scalar_select %p2615, %s27, 1
        %p2617 = scmp.lt.s32.totalorder %s2614, 15
        %s2618 = scalar_select %p2617, %s2614, 15
        %s2619 = smul.addr %s2618, 2
        %s2620 = smul.addr %s2616, 32
        %s2621 = sadd.s32 %s2619, %s2620
        %s2622 = smul.addr %s2621, 4
        %s2623 = scalar_lea.vmem %s5, %s2622
      $region68: #{mbconv_forward.3} parent=63 // pred_fallthru
        _
      // Predicated region
      $region69: #{mbconv_forward.3} parent=63 // pred_check
        %p2624 = pneg %p203
      $region70: #{mbconv_forward.3} parent=63 // pred_check_branch
        %2626 = sbr.rel (%p2624) target = $region72
      $region71: #{mbconv_forward.3} parent=63 // pred_region
        %p2627 = scmp.lt.s32.totalorder %s27, 1
        %s2628 = scalar_select %p2627, %s27, 1
        %p2629 = scmp.lt.s32.totalorder %s26, 1
        %s2630 = scalar_select %p2629, %s26, 1
        %s2631 = smul.addr %s2628, 2
        %s2632 = sadd.s32 %s2630, %s2631
        %s2633 = scalar_lea.vmem %s6, %s2632
      $region72: #{mbconv_forward.3} parent=63 // pred_fallthru
        _
    $region64: #{mbconv_forward.3} parent=5 // pred_fallthru
      _
  $region6: #{mbconv_forward.3} parent=0 // loop_footer
    %s17 = sadd.s32 1, %s13
  $region7: #{mbconv_forward.3} parent=0 // loop_footer_branch
    %12 = sbr.rel target = $region3
  $region8: #{mbconv_forward.3} parent=0 // loop_exit
    _

</llo_original>
